<compile_context>
chip_gen: v7x
topology: tpu7x:2x2x1
jax: 0.10.0
libtpu: 0.0.40
codegen_flags: <defaults>
</compile_context>

<pallas_src>
import functools
import math

import jax
import jax.numpy as jnp
from jax import lax
from jax.experimental import pallas as pl
from jax.experimental.pallas import tpu as pltpu

# 32 MiB: explicit and safely under physical VMEM on v5e/v6e (128 MiB) and
# v7x (64 MiB).  Actual per-call usage here is well under 1 MiB per grid step.
_VMEM_LIMIT = 32 * 1024 * 1024
_EPS = 1e-5
_COMPUTE_DTYPE = jnp.bfloat16   # MXU operand / inter-layer activation dtype


# ----------------------------- Pallas kernels ------------------------------

def _conv_bias_act_kernel(p_ref, w_ref, b_ref, o_ref, *, relu):
    """out(Cout, M) = [relu](W(Cout, K) @ P(K, M) + b(Cout, 1)). Lane dim = M.

    bf16 operands, f32 accumulation; elementwise math in f32; bf16/f32 store.
    """
    z = jnp.dot(w_ref[...], p_ref[...], preferred_element_type=jnp.float32)
    z = z + b_ref[...]
    if relu:
        z = jnp.maximum(z, 0.0)
    o_ref[...] = z.astype(o_ref.dtype)


def _conv_bn_relu_kernel(p_ref, w_ref, g_ref, bt_ref, o_ref, *, eps):
    """Conv + training-mode BatchNorm (batch statistics) + ReLU, fully fused.

    The full batch is resident in this single grid-less invocation, so the
    per-channel batch statistics are lane-axis reductions done right here.
    Variance is computed in centered form to avoid E[z^2]-E[z]^2 cancellation.
    The conv bias is NOT added: it is exactly cancelled by the batch-mean
    subtraction, so passing it would be dead work + an extra operand DMA.
    """
    z = jnp.dot(w_ref[...], p_ref[...], preferred_element_type=jnp.float32)
    mean = jnp.mean(z, axis=1, keepdims=True)                    # (Cout, 1)
    centered = z - mean
    var = jnp.mean(centered * centered, axis=1, keepdims=True)   # biased var
    scale = g_ref[...] * lax.rsqrt(var + eps)
    o_ref[...] = jnp.maximum(centered * scale + bt_ref[...], 0.0).astype(o_ref.dtype)


def _tail_kernel(p_ref, w4_ref, b4_ref, wl_ref, bl_ref, o_ref):
    """conv4 + ReLU + Flatten + Linear fused (valid when Do*Ho*Wo == 1)."""
    z = jnp.dot(w4_ref[...], p_ref[...], preferred_element_type=jnp.float32)
    z = jnp.maximum(z + b4_ref[...], 0.0)                        # (64, N) f32
    y = jnp.dot(wl_ref[...], z, preferred_element_type=jnp.float32)
    o_ref[...] = (y + bl_ref[...]).astype(o_ref.dtype)           # (enc, N)


# --------------------------- pallas_call wrappers ---------------------------

def _pick_col_tile(M):
    """Largest M (lane) tile that divides M; None -> run grid-less."""
    if M % 128 != 0:
        return None
    for tile in (2048, 1024, 512, 256, 128):
        if M % tile == 0 and M // tile > 1:
            return tile
    return None


def _matmul_bias_act(P, w_mat, b, relu, out_dtype):
    """Conv-as-matmul (+bias, +optional ReLU).  M-tiled 'parallel' grid when M
    is large so both v7x TensorCores are used; grid-less otherwise."""
    Cout, K = w_mat.shape
    M = P.shape[1]
    b2 = b.reshape(Cout, 1).astype(jnp.float32)
    kern = functools.partial(_conv_bias_act_kernel, relu=relu)
    tile = _pick_col_tile(M)
    if tile is None:
        return pl.pallas_call(
            kern,
            out_shape=jax.ShapeDtypeStruct((Cout, M), out_dtype),
            compiler_params=pltpu.CompilerParams(vmem_limit_bytes=_VMEM_LIMIT),
        )(P, w_mat, b2)
    return pl.pallas_call(
        kern,
        out_shape=jax.ShapeDtypeStruct((Cout, M), out_dtype),
        grid_spec=pltpu.PrefetchScalarGridSpec(
            num_scalar_prefetch=0,
            grid=(M // tile,),
            in_specs=[
                pl.BlockSpec((K, tile), lambda i: (0, i)),
                pl.BlockSpec((Cout, K), lambda i: (0, 0)),
                pl.BlockSpec((Cout, 1), lambda i: (0, 0)),
            ],
            out_specs=pl.BlockSpec((Cout, tile), lambda i: (0, i)),
        ),
        compiler_params=pltpu.CompilerParams(
            dimension_semantics=("parallel",), vmem_limit_bytes=_VMEM_LIMIT),
    )(P, w_mat, b2)


def _matmul_bn_relu(P, w_mat, gamma, beta, out_dtype):
    """Grid-less conv + batch-stat BN + ReLU (full batch resident in VMEM)."""
    Cout, _ = w_mat.shape
    M = P.shape[1]
    return pl.pallas_call(
        functools.partial(_conv_bn_relu_kernel, eps=_EPS),
        out_shape=jax.ShapeDtypeStruct((Cout, M), out_dtype),
        compiler_params=pltpu.CompilerParams(vmem_limit_bytes=_VMEM_LIMIT),
    )(P, w_mat,
      gamma.reshape(Cout, 1).astype(jnp.float32),
      beta.reshape(Cout, 1).astype(jnp.float32))


# ------------------------------- JAX glue ----------------------------------

def _patches_cm(x_cndhw, k, stride, pad):
    """Channel-major im2col via one fused XLA gather.

    x: (Cin, N, D, H, W) -> (K, N, Do, Ho, Wo) with K = Cin*k^3 ordered
    (Cin, kd, kh, kw): exactly the row-major reshape order of a PyTorch
    Conv3d weight (Cout, Cin, kD, kH, kW) -> (Cout, K).  No transposes of the
    k^3-amplified patch tensor are materialized, and it stays bf16.
    """
    return lax.conv_general_dilated_patches(
        x_cndhw, (k, k, k), (stride, stride, stride), [(pad, pad)] * 3,
        dimension_numbers=("CNDHW", "OIDHW", "CNDHW"))


def _conv3d_layer(x, w_pt, b, stride, pad, gamma=None, beta=None):
    """x: (Cin, N, D, H, W) bf16 -> (Cout, N, Do, Ho, Wo) bf16. Conv(+BN)+ReLU."""
    Cout, _, k = w_pt.shape[0], w_pt.shape[1], w_pt.shape[2]
    patches = _patches_cm(x, k, stride, pad)
    K, N, Do, Ho, Wo = patches.shape
    M = N * Do * Ho * Wo
    P = patches.reshape(K, M)                       # bf16, no K padding
    w_mat = w_pt.reshape(Cout, K).astype(_COMPUTE_DTYPE)
    if gamma is None:
        out = _matmul_bias_act(P, w_mat, b, relu=True, out_dtype=_COMPUTE_DTYPE)
    else:
        # Conv bias exactly cancels against training-mode BN's batch-mean
        # subtraction -> intentionally not passed into the BN-fused kernel.
        out = _matmul_bn_relu(P, w_mat, gamma, beta, out_dtype=_COMPUTE_DTYPE)
    return out.reshape(Cout, N, Do, Ho, Wo)


def _tail(x, w4_pt, b4, w_lin, b_lin):
    """conv4 (k=3, s=2, p=0) + ReLU + Flatten(NCDHW) + Linear. x:(32,N,D,H,W) bf16."""
    Cout, _, k = w4_pt.shape[0], w4_pt.shape[1], w4_pt.shape[2]
    patches = _patches_cm(x, k, stride=2, pad=0)
    K, N, Do, Ho, Wo = patches.shape
    DHW = Do * Ho * Wo
    P = patches.reshape(K, N * DHW)                 # bf16
    w4_mat = w4_pt.reshape(Cout, K).astype(_COMPUTE_DTYPE)
    enc = w_lin.shape[0]
    if DHW == 1:
        # Fully fused tail: conv4 matmul + ReLU + Linear in ONE pallas_call.
        # w_lin is used exactly as PyTorch stores it (enc, 64) -- no transpose.
        yT = pl.pallas_call(
            _tail_kernel,
            out_shape=jax.ShapeDtypeStruct((enc, N), jnp.float32),
            compiler_params=pltpu.CompilerParams(vmem_limit_bytes=_VMEM_LIMIT),
        )(P, w4_mat, b4.reshape(Cout, 1).astype(jnp.float32),
          w_lin.astype(jnp.float32), b_lin.reshape(enc, 1).astype(jnp.float32))
    else:
        # General path (o0*o1*o2 > 1): conv4+ReLU, then flatten in PyTorch's
        # NCDHW per-sample (C, D, H, W) order, then a lane-dense Linear.
        z = _matmul_bias_act(P, w4_mat, b4, relu=True,
                             out_dtype=_COMPUTE_DTYPE)              # (64, N*DHW)
        flatT = jnp.transpose(z.reshape(Cout, N, DHW),
                              (0, 2, 1)).reshape(Cout * DHW, N)     # (64*DHW, N)
        yT = _matmul_bias_act(flatT, w_lin.astype(_COMPUTE_DTYPE), b_lin,
                              relu=False, out_dtype=jnp.float32)    # (enc, N)
    return yT.T                                                     # (N, enc) f32


def encoder3d_forward(x_ncdhw, p):
    # PyTorch NCDHW -> channel-major CNDHW, cast once to bf16; kept
    # channel-major bf16 end-to-end so every Pallas matmul reads/writes
    # lane-dense (Cout, M) tiles with half the HBM bytes.
    x = jnp.transpose(x_ncdhw, (1, 0, 2, 3, 4)).astype(_COMPUTE_DTYPE)
    # Conv3d(1, 8, 4, s=2, p=1) + ReLU   (M-tiled 'parallel' grid)
    x = _conv3d_layer(x, p["w1"], p["b1"], stride=2, pad=1)
    # Conv3d(8, 16, 3, s=2, p=1) + BatchNorm3d(16) + ReLU  (fused; bias cancels)
    x = _conv3d_layer(x, p["w2"], None, stride=2, pad=1,
                      gamma=p["bn2_gamma"], beta=p["bn2_beta"])
    # Conv3d(16, 32, 4, s=2, p=1) + BatchNorm3d(32) + ReLU (fused; bias cancels)
    x = _conv3d_layer(x, p["w3"], None, stride=2, pad=1,
                      gamma=p["bn3_gamma"], beta=p["bn3_beta"])
    # Conv3d(32, 64, 3, s=2, p=0) + ReLU + Flatten + Linear  (fused tail)
    return _tail(x, p["w4"], p["b4"], p["w_lin"], p["b_lin"])


def init_params(key, encoded_dim, o0, o1, o2):
    ks = jax.random.split(key, 6)

    def conv_w(k, cout, cin, ksz):
        fan_in = cin * ksz ** 3
        return jax.random.normal(k, (cout, cin, ksz, ksz, ksz),
                                 jnp.float32) / math.sqrt(fan_in)

    lin_in = 64 * o0 * o1 * o2
    # b2/b3 are kept for interface parity with the PyTorch module, but the
    # forward pass does not consume them (exact cancellation under batch BN).
    return {
        "w1": conv_w(ks[0], 8, 1, 4),   "b1": jnp.zeros((8,), jnp.float32),
        "w2": conv_w(ks[1], 16, 8, 3),  "b2": jnp.zeros((16,), jnp.float32),
        "bn2_gamma": jnp.ones((16,), jnp.float32),
        "bn2_beta": jnp.zeros((16,), jnp.float32),
        "w3": conv_w(ks[2], 32, 16, 4), "b3": jnp.zeros((32,), jnp.float32),
        "bn3_gamma": jnp.ones((32,), jnp.float32),
        "bn3_beta": jnp.zeros((32,), jnp.float32),
        "w4": conv_w(ks[3], 64, 32, 3), "b4": jnp.zeros((64,), jnp.float32),
        "w_lin": jax.random.normal(ks[4], (encoded_dim, lin_in),
                                   jnp.float32) / math.sqrt(lin_in),
        "b_lin": jnp.zeros((encoded_dim,), jnp.float32),
    }


if __name__ == "__main__":
    key = jax.random.PRNGKey(0)
    k_param, k_x = jax.random.split(key)

    # Spatial 32 -> 16 -> 8 -> 4 -> 1 through the conv stack, so o0=o1=o2=1.
    encoded_dim = 32
    o0 = o1 = o2 = 1
    params = init_params(k_param, encoded_dim, o0, o1, o2)

    # PyTorch-style NCDHW input.
    x = jax.random.normal(k_x, (2, 1, 32, 32, 32), jnp.float32)

    fwd = jax.jit(encoder3d_forward)
    out = jax.block_until_ready(fwd(x, params))

    assert out.shape == (2, encoded_dim), out.shape
    assert out.dtype == jnp.float32, out.dtype
    assert bool(jnp.all(jnp.isfinite(out)))
    print("KERNEL_OK")
</pallas_src>

<mosaic_0001>
module attributes {stable_mosaic.version = 11 : i64} {
  func.func @_conv_bias_act_kernel(%arg0: i32, %arg1: memref<64x2048xbf16, #tpu.memory_space<vmem>>, %arg2: memref<8x64xbf16, #tpu.memory_space<vmem>>, %arg3: memref<8x1xf32, #tpu.memory_space<vmem>>, %arg4: memref<8x2048xbf16, #tpu.memory_space<vmem>>) attributes {dimension_semantics = [#tpu.dimension_semantics<parallel>], iteration_bounds = array<i64: 4>, scalar_prefetch = 0 : i64, scratch_operands = 0 : i64, tpu.core_type = #tpu.core_type<tc>, window_params = [{transform_indices = @transform_0, window_bounds = array<i64: 64, 2048>}, {pipeline_mode = #tpu.pipeline_mode<synchronous>, transform_indices = @transform_1, window_bounds = array<i64: 8, 64>}, {pipeline_mode = #tpu.pipeline_mode<synchronous>, transform_indices = @transform_2, window_bounds = array<i64: 8, 1>}, {transform_indices = @transform_3, window_bounds = array<i64: 8, 2048>}]} {
    %c0 = arith.constant 0 : index
    %c0_0 = arith.constant 0 : index
    %0 = vector.load %arg2[%c0, %c0_0] : memref<8x64xbf16, #tpu.memory_space<vmem>>, vector<8x64xbf16>
    %c0_1 = arith.constant 0 : index
    %c0_2 = arith.constant 0 : index
    %1 = vector.load %arg1[%c0_1, %c0_2] : memref<64x2048xbf16, #tpu.memory_space<vmem>>, vector<64x2048xbf16>
    %cst = arith.constant dense<0.000000e+00> : vector<8x2048xf32>
    %2 = tpu.matmul %0, %1, %cst {dimension_numbers = #tpu.dot_dimension_numbers<[1], [0], [0], [1], [0, 0, 1, 1], [], []>} : vector<8x64xbf16>, vector<64x2048xbf16>, vector<8x2048xf32> -> vector<8x2048xf32>
    %c0_3 = arith.constant 0 : index
    %c0_4 = arith.constant 0 : index
    %3 = vector.load %arg3[%c0_3, %c0_4] : memref<8x1xf32, #tpu.memory_space<vmem>>, vector<8x1xf32>
    %4 = vector.broadcast %3 : vector<8x1xf32> to vector<8x2048xf32>
    %5 = arith.addf %2, %4 : vector<8x2048xf32>
    %cst_5 = arith.constant 0.000000e+00 : f32
    %6 = vector.broadcast %cst_5 : f32 to vector<8x2048xf32>
    %7 = arith.maximumf %5, %6 : vector<8x2048xf32>
    %8 = arith.truncf %7 : vector<8x2048xf32> to vector<8x2048xbf16>
    %c0_6 = arith.constant 0 : index
    %c0_7 = arith.constant 0 : index
    %9 = vector.load %arg4[%c0_6, %c0_7] : memref<8x2048xbf16, #tpu.memory_space<vmem>>, vector<8x2048xbf16>
    tpu.vector_store %arg4[%c0_6, %c0_7], %8 {strides = array<i32>} : memref<8x2048xbf16, #tpu.memory_space<vmem>>, vector<8x2048xbf16>,
    return
  }
  func.func @transform_0(%arg0: i32) -> (i32, i32) {
    %c0_i32 = arith.constant 0 : i32
    %c0_i32_0 = arith.constant 0 : i32
    return %c0_i32, %arg0 : i32, i32
  }
  func.func @transform_1(%arg0: i32) -> (i32, i32) {
    %c0_i32 = arith.constant 0 : i32
    %c0_i32_0 = arith.constant 0 : i32
    %c0_i32_1 = arith.constant 0 : i32
    return %c0_i32, %c0_i32_0 : i32, i32
  }
  func.func @transform_2(%arg0: i32) -> (i32, i32) {
    %c0_i32 = arith.constant 0 : i32
    %c0_i32_0 = arith.constant 0 : i32
    %c0_i32_1 = arith.constant 0 : i32
    return %c0_i32, %c0_i32_0 : i32, i32
  }
  func.func @transform_3(%arg0: i32) -> (i32, i32) {
    %c0_i32 = arith.constant 0 : i32
    %c0_i32_0 = arith.constant 0 : i32
    return %c0_i32, %arg0 : i32, i32
  }
}

module attributes {stable_mosaic.version = 11 : i64} {
  func.func @_conv_bn_relu_kernel(%arg0: memref<216x1024xbf16, #tpu.memory_space<vmem>>, %arg1: memref<16x216xbf16, #tpu.memory_space<vmem>>, %arg2: memref<16x1xf32, #tpu.memory_space<vmem>>, %arg3: memref<16x1xf32, #tpu.memory_space<vmem>>, %arg4: memref<16x1024xbf16, #tpu.memory_space<vmem>>) attributes {dimension_semantics = [], scalar_prefetch = 0 : i64, scratch_operands = 0 : i64, tpu.core_type = #tpu.core_type<tc>} {
    %c0 = arith.constant 0 : index
    %c0_0 = arith.constant 0 : index
    %0 = vector.load %arg1[%c0, %c0_0] : memref<16x216xbf16, #tpu.memory_space<vmem>>, vector<16x216xbf16>
    %c0_1 = arith.constant 0 : index
    %c0_2 = arith.constant 0 : index
    %1 = vector.load %arg0[%c0_1, %c0_2] : memref<216x1024xbf16, #tpu.memory_space<vmem>>, vector<216x1024xbf16>
    %cst = arith.constant dense<0.000000e+00> : vector<16x1024xf32>
    %2 = tpu.matmul %0, %1, %cst {dimension_numbers = #tpu.dot_dimension_numbers<[1], [0], [0], [1], [0, 0, 1, 1], [], []>} : vector<16x216xbf16>, vector<216x1024xbf16>, vector<16x1024xf32> -> vector<16x1024xf32>
    %cst_3 = arith.constant dense<0.000000e+00> : vector<16xf32>
    %3 = vector.multi_reduction <add>, %2, %cst_3 [1] : vector<16x1024xf32> to vector<16xf32>
    %4 = vector.shape_cast %3 : vector<16xf32> to vector<16x1xf32>
    %cst_4 = arith.constant 1.024000e+03 : f32
    %5 = vector.broadcast %cst_4 : f32 to vector<16x1xf32>
    %6 = arith.divf %4, %5 : vector<16x1xf32>
    %7 = vector.broadcast %6 : vector<16x1xf32> to vector<16x1024xf32>
    %8 = arith.subf %2, %7 : vector<16x1024xf32>
    %9 = arith.mulf %8, %8 : vector<16x1024xf32>
    %cst_5 = arith.constant dense<0.000000e+00> : vector<16xf32>
    %10 = vector.multi_reduction <add>, %9, %cst_5 [1] : vector<16x1024xf32> to vector<16xf32>
    %11 = vector.shape_cast %10 : vector<16xf32> to vector<16x1xf32>
    %cst_6 = arith.constant 1.024000e+03 : f32
    %12 = vector.broadcast %cst_6 : f32 to vector<16x1xf32>
    %13 = arith.divf %11, %12 : vector<16x1xf32>
    %c0_7 = arith.constant 0 : index
    %c0_8 = arith.constant 0 : index
    %14 = vector.load %arg2[%c0_7, %c0_8] : memref<16x1xf32, #tpu.memory_space<vmem>>, vector<16x1xf32>
    %cst_9 = arith.constant 9.99999974E-6 : f32
    %15 = vector.broadcast %cst_9 : f32 to vector<16x1xf32>
    %16 = arith.addf %13, %15 : vector<16x1xf32>
    %17 = math.rsqrt %16 : vector<16x1xf32>
    %18 = arith.mulf %14, %17 : vector<16x1xf32>
    %19 = vector.broadcast %18 : vector<16x1xf32> to vector<16x1024xf32>
    %20 = arith.mulf %8, %19 : vector<16x1024xf32>
    %c0_10 = arith.constant 0 : index
    %c0_11 = arith.constant 0 : index
    %21 = vector.load %arg3[%c0_10, %c0_11] : memref<16x1xf32, #tpu.memory_space<vmem>>, vector<16x1xf32>
    %22 = vector.broadcast %21 : vector<16x1xf32> to vector<16x1024xf32>
    %23 = arith.addf %20, %22 : vector<16x1024xf32>
    %cst_12 = arith.constant 0.000000e+00 : f32
    %24 = vector.broadcast %cst_12 : f32 to vector<16x1024xf32>
    %25 = arith.maximumf %23, %24 : vector<16x1024xf32>
    %26 = arith.truncf %25 : vector<16x1024xf32> to vector<16x1024xbf16>
    %c0_13 = arith.constant 0 : index
    %c0_14 = arith.constant 0 : index
    %27 = vector.load %arg4[%c0_13, %c0_14] : memref<16x1024xbf16, #tpu.memory_space<vmem>>, vector<16x1024xbf16>
    tpu.vector_store %arg4[%c0_13, %c0_14], %26 {strides = array<i32>} : memref<16x1024xbf16, #tpu.memory_space<vmem>>, vector<16x1024xbf16>,
    return
  }
}

module attributes {stable_mosaic.version = 11 : i64} {
  func.func @_conv_bn_relu_kernel(%arg0: memref<1024x128xbf16, #tpu.memory_space<vmem>>, %arg1: memref<32x1024xbf16, #tpu.memory_space<vmem>>, %arg2: memref<32x1xf32, #tpu.memory_space<vmem>>, %arg3: memref<32x1xf32, #tpu.memory_space<vmem>>, %arg4: memref<32x128xbf16, #tpu.memory_space<vmem>>) attributes {dimension_semantics = [], scalar_prefetch = 0 : i64, scratch_operands = 0 : i64, tpu.core_type = #tpu.core_type<tc>} {
    %c0 = arith.constant 0 : index
    %c0_0 = arith.constant 0 : index
    %0 = vector.load %arg1[%c0, %c0_0] : memref<32x1024xbf16, #tpu.memory_space<vmem>>, vector<32x1024xbf16>
    %c0_1 = arith.constant 0 : index
    %c0_2 = arith.constant 0 : index
    %1 = vector.load %arg0[%c0_1, %c0_2] : memref<1024x128xbf16, #tpu.memory_space<vmem>>, vector<1024x128xbf16>
    %cst = arith.constant dense<0.000000e+00> : vector<32x128xf32>
    %2 = tpu.matmul %0, %1, %cst {dimension_numbers = #tpu.dot_dimension_numbers<[1], [0], [0], [1], [0, 0, 1, 1], [], []>} : vector<32x1024xbf16>, vector<1024x128xbf16>, vector<32x128xf32> -> vector<32x128xf32>
    %cst_3 = arith.constant dense<0.000000e+00> : vector<32xf32>
    %3 = vector.multi_reduction <add>, %2, %cst_3 [1] : vector<32x128xf32> to vector<32xf32>
    %4 = vector.shape_cast %3 : vector<32xf32> to vector<32x1xf32>
    %cst_4 = arith.constant 1.280000e+02 : f32
    %5 = vector.broadcast %cst_4 : f32 to vector<32x1xf32>
    %6 = arith.divf %4, %5 : vector<32x1xf32>
    %7 = vector.broadcast %6 : vector<32x1xf32> to vector<32x128xf32>
    %8 = arith.subf %2, %7 : vector<32x128xf32>
    %9 = arith.mulf %8, %8 : vector<32x128xf32>
    %cst_5 = arith.constant dense<0.000000e+00> : vector<32xf32>
    %10 = vector.multi_reduction <add>, %9, %cst_5 [1] : vector<32x128xf32> to vector<32xf32>
    %11 = vector.shape_cast %10 : vector<32xf32> to vector<32x1xf32>
    %cst_6 = arith.constant 1.280000e+02 : f32
    %12 = vector.broadcast %cst_6 : f32 to vector<32x1xf32>
    %13 = arith.divf %11, %12 : vector<32x1xf32>
    %c0_7 = arith.constant 0 : index
    %c0_8 = arith.constant 0 : index
    %14 = vector.load %arg2[%c0_7, %c0_8] : memref<32x1xf32, #tpu.memory_space<vmem>>, vector<32x1xf32>
    %cst_9 = arith.constant 9.99999974E-6 : f32
    %15 = vector.broadcast %cst_9 : f32 to vector<32x1xf32>
    %16 = arith.addf %13, %15 : vector<32x1xf32>
    %17 = math.rsqrt %16 : vector<32x1xf32>
    %18 = arith.mulf %14, %17 : vector<32x1xf32>
    %19 = vector.broadcast %18 : vector<32x1xf32> to vector<32x128xf32>
    %20 = arith.mulf %8, %19 : vector<32x128xf32>
    %c0_10 = arith.constant 0 : index
    %c0_11 = arith.constant 0 : index
    %21 = vector.load %arg3[%c0_10, %c0_11] : memref<32x1xf32, #tpu.memory_space<vmem>>, vector<32x1xf32>
    %22 = vector.broadcast %21 : vector<32x1xf32> to vector<32x128xf32>
    %23 = arith.addf %20, %22 : vector<32x128xf32>
    %cst_12 = arith.constant 0.000000e+00 : f32
    %24 = vector.broadcast %cst_12 : f32 to vector<32x128xf32>
    %25 = arith.maximumf %23, %24 : vector<32x128xf32>
    %26 = arith.truncf %25 : vector<32x128xf32> to vector<32x128xbf16>
    %c0_13 = arith.constant 0 : index
    %c0_14 = arith.constant 0 : index
    %27 = vector.load %arg4[%c0_13, %c0_14] : memref<32x128xbf16, #tpu.memory_space<vmem>>, vector<32x128xbf16>
    tpu.vector_store %arg4[%c0_13, %c0_14], %26 {strides = array<i32>} : memref<32x128xbf16, #tpu.memory_space<vmem>>, vector<32x128xbf16>,
    return
  }
}

module attributes {stable_mosaic.version = 11 : i64} {
  func.func @_tail_kernel(%arg0: memref<864x2xbf16, #tpu.memory_space<vmem>>, %arg1: memref<64x864xbf16, #tpu.memory_space<vmem>>, %arg2: memref<64x1xf32, #tpu.memory_space<vmem>>, %arg3: memref<32x64xf32, #tpu.memory_space<vmem>>, %arg4: memref<32x1xf32, #tpu.memory_space<vmem>>, %arg5: memref<32x2xf32, #tpu.memory_space<vmem>>) attributes {dimension_semantics = [], scalar_prefetch = 0 : i64, scratch_operands = 0 : i64, tpu.core_type = #tpu.core_type<tc>} {
    %c0 = arith.constant 0 : index
    %c0_0 = arith.constant 0 : index
    %0 = vector.load %arg1[%c0, %c0_0] : memref<64x864xbf16, #tpu.memory_space<vmem>>, vector<64x864xbf16>
    %c0_1 = arith.constant 0 : index
    %c0_2 = arith.constant 0 : index
    %1 = vector.load %arg0[%c0_1, %c0_2] : memref<864x2xbf16, #tpu.memory_space<vmem>>, vector<864x2xbf16>
    %cst = arith.constant dense<0.000000e+00> : vector<64x2xf32>
    %2 = tpu.matmul %0, %1, %cst {dimension_numbers = #tpu.dot_dimension_numbers<[1], [0], [0], [1], [0, 0, 1, 1], [], []>} : vector<64x864xbf16>, vector<864x2xbf16>, vector<64x2xf32> -> vector<64x2xf32>
    %c0_3 = arith.constant 0 : index
    %c0_4 = arith.constant 0 : index
    %3 = vector.load %arg2[%c0_3, %c0_4] : memref<64x1xf32, #tpu.memory_space<vmem>>, vector<64x1xf32>
    %4 = vector.broadcast %3 : vector<64x1xf32> to vector<64x2xf32>
    %5 = arith.addf %2, %4 : vector<64x2xf32>
    %cst_5 = arith.constant 0.000000e+00 : f32
    %6 = vector.broadcast %cst_5 : f32 to vector<64x2xf32>
    %7 = arith.maximumf %5, %6 : vector<64x2xf32>
    %c0_6 = arith.constant 0 : index
    %c0_7 = arith.constant 0 : index
    %8 = vector.load %arg3[%c0_6, %c0_7] : memref<32x64xf32, #tpu.memory_space<vmem>>, vector<32x64xf32>
    %cst_8 = arith.constant dense<0.000000e+00> : vector<32x2xf32>
    %9 = tpu.matmul %8, %7, %cst_8 {dimension_numbers = #tpu.dot_dimension_numbers<[1], [0], [0], [1], [0, 0, 1, 1], [], []>} : vector<32x64xf32>, vector<64x2xf32>, vector<32x2xf32> -> vector<32x2xf32>
    %c0_9 = arith.constant 0 : index
    %c0_10 = arith.constant 0 : index
    %10 = vector.load %arg4[%c0_9, %c0_10] : memref<32x1xf32, #tpu.memory_space<vmem>>, vector<32x1xf32>
    %11 = vector.broadcast %10 : vector<32x1xf32> to vector<32x2xf32>
    %12 = arith.addf %9, %11 : vector<32x2xf32>
    %c0_11 = arith.constant 0 : index
    %c0_12 = arith.constant 0 : index
    %13 = vector.load %arg5[%c0_11, %c0_12] : memref<32x2xf32, #tpu.memory_space<vmem>>, vector<32x2xf32>
    tpu.vector_store %arg5[%c0_11, %c0_12], %12 {strides = array<i32>} : memref<32x2xf32, #tpu.memory_space<vmem>>, vector<32x2xf32>,
    return
  }
}

</mosaic_0001>

<llo_original>
// kernel: encoder3d_forward.4
$region0: #{encoder3d_forward.4}
  #allocation0 [shape = 'u32[]', space=smem, size = 0x4, offset = 0x4, fixed_abs, tag = 'smem constant byte address 0x4 - core index']
  #allocation1 [shape = 'u32[144,128]{1,0:T(1,128)}', space=vmem, size = 0x12000, scoped, tag = 'internal scratch']
  %s0 = inlined_call_operand.vmem [shape: bf16[64,8192], index: 0, kind: input, shape index: {}]
  %s1 = inlined_call_operand.vmem [shape: bf16[8,64], index: 1, kind: input, shape index: {}]
  %s2 = inlined_call_operand.vmem [shape: f32[8,1], index: 2, kind: input, shape index: {}]
  %s3 = inlined_call_operand.vmem [shape: bf16[8,8192], index: 3, kind: output, shape index: {}]
  %s4 = sld [smem:[#allocation0]]
  $region68: #{encoder3d_forward.4} parent=0
    _
  %s6 = ssub.s32 1, %s4
  %s7 = scalar_select 0, %s6, %s4
  $region1: #{encoder3d_forward.4} parent=0
    #allocation2 [shape = 'u8[524288]{0}', space=vmem, size = 0x80000, scoped, tag = 'input window, operand 0']
    loop: start=0, step=1, limit=6
    $region2: #{encoder3d_forward.4} parent=1 // loop_pre_header
      _
    $region3: #{encoder3d_forward.4} parent=1 // loop_header
      %s9 = sphi 0, %s13
      %p10 = scmp.ge.s32.totalorder %s9, 6
      %s19 = sphi 0, %s21
      %s22 = sphi 0, %s19
      %s23 = sphi 0, %s22
      %s39 = sphi 0, %s23
      %s43 = sphi 0, %s43
      %s45 = sphi 0, %s43
      %s46 = sphi 0, %s45
      %s60 = sphi 0, %s46
      %s64 = sphi 0, %s64
      %s66 = sphi 0, %s64
      %s67 = sphi 0, %s66
      %s81 = sphi 0, %s67
      %s87 = sphi 0, %s89
      %s90 = sphi 0, %s87
      %s91 = sphi 0, %s90
      %s107 = sphi 0, %s91
    $region4: #{encoder3d_forward.4} parent=1 // loop_header_branch
      %12 = sbr.rel (%p10) target = $region8
    $region5: #{encoder3d_forward.4} parent=1 // loop_body
      %s14 = ssub.s32 %s9, 1
      %s15 = ssub.s32 %s9, 2
      %s16 = sadd.s32 %s9, 1
      %s17 = ssub.s32 %s9, %s16
      %p18 = scmp.eq.s32.totalorder %s17, 0
      %s20 = sadd.s32 %s19, 1
      %s21 = scalar_select %p18, %s19, %s20
      %p24 = pneg %p18
      %p25 = scmp.eq.s32.totalorder %s9, 3
      %p26 = por %p24, %p25
      %p27 = scmp.ne.s32.totalorder %s19, %s22
      %p28 = scmp.eq.s32.totalorder %s9, 0
      %p29 = por %p27, %p28
      %p30 = scmp.ne.s32.totalorder %s19, %s22
      %p31 = scmp.eq.s32.totalorder %s14, 3
      %p32 = por %p30, %p31
      %p33 = scmp.ne.s32.totalorder %s22, %s23
      %p34 = scmp.eq.s32.totalorder %s14, 0
      %p35 = por %p33, %p34
      %p36 = scmp.ne.s32.totalorder %s22, %s23
      %p37 = scmp.eq.s32.totalorder %s15, 3
      %p38 = por %p36, %p37
      %p40 = scmp.ne.s32.totalorder %s23, %s39
      %p41 = scmp.eq.s32.totalorder %s15, 0
      %p42 = por %p40, %p41
      %s44 = sadd.s32 %s43, 1
      %p47 = scmp.eq.s32.totalorder %s9, 3
      %p48 = scmp.ne.s32.totalorder %s43, %s45
      %p49 = scmp.eq.s32.totalorder %s9, 0
      %p50 = por %p48, %p49
      %p51 = scmp.ne.s32.totalorder %s43, %s45
      %p52 = scmp.eq.s32.totalorder %s14, 3
      %p53 = por %p51, %p52
      %p54 = scmp.ne.s32.totalorder %s45, %s46
      %p55 = scmp.eq.s32.totalorder %s14, 0
      %p56 = por %p54, %p55
      %p57 = scmp.ne.s32.totalorder %s45, %s46
      %p58 = scmp.eq.s32.totalorder %s15, 3
      %p59 = por %p57, %p58
      %p61 = scmp.ne.s32.totalorder %s46, %s60
      %p62 = scmp.eq.s32.totalorder %s15, 0
      %p63 = por %p61, %p62
      %s65 = sadd.s32 %s64, 1
      %p68 = scmp.eq.s32.totalorder %s9, 3
      %p69 = scmp.ne.s32.totalorder %s64, %s66
      %p70 = scmp.eq.s32.totalorder %s9, 0
      %p71 = por %p69, %p70
      %p72 = scmp.ne.s32.totalorder %s64, %s66
      %p73 = scmp.eq.s32.totalorder %s14, 3
      %p74 = por %p72, %p73
      %p75 = scmp.ne.s32.totalorder %s66, %s67
      %p76 = scmp.eq.s32.totalorder %s14, 0
      %p77 = por %p75, %p76
      %p78 = scmp.ne.s32.totalorder %s66, %s67
      %p79 = scmp.eq.s32.totalorder %s15, 3
      %p80 = por %p78, %p79
      %p82 = scmp.ne.s32.totalorder %s67, %s81
      %p83 = scmp.eq.s32.totalorder %s15, 0
      %p84 = por %p82, %p83
      %s85 = ssub.s32 %s9, %s16
      %p86 = scmp.eq.s32.totalorder %s85, 0
      %s88 = sadd.s32 %s87, 1
      %s89 = scalar_select %p86, %s87, %s88
      %p92 = pneg %p86
      %p93 = scmp.eq.s32.totalorder %s9, 3
      %p94 = por %p92, %p93
      %p95 = scmp.ne.s32.totalorder %s87, %s90
      %p96 = scmp.eq.s32.totalorder %s9, 0
      %p97 = por %p95, %p96
      %p98 = scmp.ne.s32.totalorder %s87, %s90
      %p99 = scmp.eq.s32.totalorder %s14, 3
      %p100 = por %p98, %p99
      %p101 = scmp.ne.s32.totalorder %s90, %s91
      %p102 = scmp.eq.s32.totalorder %s14, 0
      %p103 = por %p101, %p102
      %p104 = scmp.ne.s32.totalorder %s90, %s91
      %p105 = scmp.eq.s32.totalorder %s15, 3
      %p106 = por %p104, %p105
      %p108 = scmp.ne.s32.totalorder %s91, %s107
      %p109 = scmp.eq.s32.totalorder %s15, 0
      %p110 = por %p108, %p109
      %p111 = scmp.le.s32.totalorder 1, %s9
      %p112 = scmp.lt.s32.totalorder %s9, 5
      %p113 = pnand %p111, %p112
      %p114 = pneg %p113
      // Predicated region
      $region9: #{encoder3d_forward.4} parent=5 // pred_check
        _
      $region10: #{encoder3d_forward.4} parent=5 // pred_check_branch
        %116 = sbr.rel (%p113) target = $region12
      $region11: #{encoder3d_forward.4} parent=5 // pred_region
        %s117 = ssub.s32 %s9, 1
        // Predicated region
        $region13: #{encoder3d_forward.4} parent=11 // pred_check
          %p118 = pneg %p56
        $region14: #{encoder3d_forward.4} parent=11 // pred_check_branch
          %120 = sbr.rel (%p118) target = $region16
        $region15: #{encoder3d_forward.4} parent=11 // pred_region
          _
        $region16: #{encoder3d_forward.4} parent=11 // pred_fallthru
          _
        // Predicated region
        $region17: #{encoder3d_forward.4} parent=11 // pred_check
          %p121 = pneg %p77
        $region18: #{encoder3d_forward.4} parent=11 // pred_check_branch
          %123 = sbr.rel (%p121) target = $region20
        $region19: #{encoder3d_forward.4} parent=11 // pred_region
          _
        $region20: #{encoder3d_forward.4} parent=11 // pred_fallthru
          _
      $region12: #{encoder3d_forward.4} parent=5 // pred_fallthru
        _
      %p124 = scmp.lt.s32.totalorder %s9, 4
      // Predicated region
      $region21: #{encoder3d_forward.4} parent=5 // pred_check
        %p125 = pneg %p124
      $region22: #{encoder3d_forward.4} parent=5 // pred_check_branch
        %127 = sbr.rel (%p125) target = $region24
      $region23: #{encoder3d_forward.4} parent=5 // pred_region
        // Predicated region
        $region25: #{encoder3d_forward.4} parent=23 // pred_check
          %p128 = pneg %p29
        $region26: #{encoder3d_forward.4} parent=23 // pred_check_branch
          %130 = sbr.rel (%p128) target = $region28
        $region27: #{encoder3d_forward.4} parent=23 // pred_region
          %s131 = sand.u32 %s19, 1
          %s132 = sand.u32 %s19, 1
          %s133 = smul.addr %s132, 512
          %s134 = scalar_lea.vmem [#allocation2], %s133
          %s135 = smul.u32 16, %s9
          %s136 = smul.addr %s135, 4
          %s137 = scalar_lea.vmem %s0, %s136
          // Predicated region
          $region29: #{encoder3d_forward.4} parent=27 // pred_check
            _
          $region30: #{encoder3d_forward.4} parent=27 // pred_check_branch
            %139 = sbr.rel (0) target = $region32
          $region31: #{encoder3d_forward.4} parent=27 // pred_region
            // Predicated region
            $region33: #{encoder3d_forward.4} parent=31 // pred_check
              _
            $region34: #{encoder3d_forward.4} parent=31 // pred_check_branch
              %141 = sbr.rel (0) target = $region36
            $region35: #{encoder3d_forward.4} parent=31 // pred_region
              loop: start=0, step=1, limit=1
              $region37: #{encoder3d_forward.4} parent=35 // loop_pre_header
                _
              $region38: #{encoder3d_forward.4} parent=35 // loop_header
                %s143 = sphi 0, %s147
                %p144 = scmp.ge.s32.totalorder %s143, 1
                %s148 = sphi %s137, %s137
                %s149 = sphi %s134, %s134
              $region39: #{encoder3d_forward.4} parent=35 // loop_header_branch
                %146 = sbr.rel (%p144) target = $region43
              $region40: #{encoder3d_forward.4} parent=35 // loop_body
                %v150 = vld [vmem:[%s148] sm:$0xff]
                %151 = vst [vmem:[%s149] sm:$0xff] %v150
                %v152 = vld [vmem:[%s148 + $0x8] sm:$0xff]
                %153 = vst [vmem:[%s149 + $0x8] sm:$0xff] %v152
                %v154 = vld [vmem:[%s148 + $0x10] sm:$0xff]
                %155 = vst [vmem:[%s149 + $0x10] sm:$0xff] %v154
                %v156 = vld [vmem:[%s148 + $0x18] sm:$0xff]
                %157 = vst [vmem:[%s149 + $0x18] sm:$0xff] %v156
                %v158 = vld [vmem:[%s148 + $0x20] sm:$0xff]
                %159 = vst [vmem:[%s149 + $0x20] sm:$0xff] %v158
                %v160 = vld [vmem:[%s148 + $0x28] sm:$0xff]
                %161 = vst [vmem:[%s149 + $0x28] sm:$0xff] %v160
                %v162 = vld [vmem:[%s148 + $0x30] sm:$0xff]
                %163 = vst [vmem:[%s149 + $0x30] sm:$0xff] %v162
                %v164 = vld [vmem:[%s148 + $0x38] sm:$0xff]
                %165 = vst [vmem:[%s149 + $0x38] sm:$0xff] %v164
                %v166 = vld [vmem:[%s148 + $0x100] sm:$0xff]
                %167 = vst [vmem:[%s149 + $0x40] sm:$0xff] %v166
                %v168 = vld [vmem:[%s148 + $0x108] sm:$0xff]
                %169 = vst [vmem:[%s149 + $0x48] sm:$0xff] %v168
                %v170 = vld [vmem:[%s148 + $0x110] sm:$0xff]
                %171 = vst [vmem:[%s149 + $0x50] sm:$0xff] %v170
                %v172 = vld [vmem:[%s148 + $0x118] sm:$0xff]
                %173 = vst [vmem:[%s149 + $0x58] sm:$0xff] %v172
                %v174 = vld [vmem:[%s148 + $0x120] sm:$0xff]
                %175 = vst [vmem:[%s149 + $0x60] sm:$0xff] %v174
                %v176 = vld [vmem:[%s148 + $0x128] sm:$0xff]
                %177 = vst [vmem:[%s149 + $0x68] sm:$0xff] %v176
                %v178 = vld [vmem:[%s148 + $0x130] sm:$0xff]
                %179 = vst [vmem:[%s149 + $0x70] sm:$0xff] %v178
                %v180 = vld [vmem:[%s148 + $0x138] sm:$0xff]
                %181 = vst [vmem:[%s149 + $0x78] sm:$0xff] %v180
                %v182 = vld [vmem:[%s148 + $0x200] sm:$0xff]
                %183 = vst [vmem:[%s149 + $0x80] sm:$0xff] %v182
                %v184 = vld [vmem:[%s148 + $0x208] sm:$0xff]
                %185 = vst [vmem:[%s149 + $0x88] sm:$0xff] %v184
                %v186 = vld [vmem:[%s148 + $0x210] sm:$0xff]
                %187 = vst [vmem:[%s149 + $0x90] sm:$0xff] %v186
                %v188 = vld [vmem:[%s148 + $0x218] sm:$0xff]
                %189 = vst [vmem:[%s149 + $0x98] sm:$0xff] %v188
                %v190 = vld [vmem:[%s148 + $0x220] sm:$0xff]
                %191 = vst [vmem:[%s149 + $0xa0] sm:$0xff] %v190
                %v192 = vld [vmem:[%s148 + $0x228] sm:$0xff]
                %193 = vst [vmem:[%s149 + $0xa8] sm:$0xff] %v192
                %v194 = vld [vmem:[%s148 + $0x230] sm:$0xff]
                %195 = vst [vmem:[%s149 + $0xb0] sm:$0xff] %v194
                %v196 = vld [vmem:[%s148 + $0x238] sm:$0xff]
                %197 = vst [vmem:[%s149 + $0xb8] sm:$0xff] %v196
                %v198 = vld [vmem:[%s148 + $0x300] sm:$0xff]
                %199 = vst [vmem:[%s149 + $0xc0] sm:$0xff] %v198
                %v200 = vld [vmem:[%s148 + $0x308] sm:$0xff]
                %201 = vst [vmem:[%s149 + $0xc8] sm:$0xff] %v200
                %v202 = vld [vmem:[%s148 + $0x310] sm:$0xff]
                %203 = vst [vmem:[%s149 + $0xd0] sm:$0xff] %v202
                %v204 = vld [vmem:[%s148 + $0x318] sm:$0xff]
                %205 = vst [vmem:[%s149 + $0xd8] sm:$0xff] %v204
                %v206 = vld [vmem:[%s148 + $0x320] sm:$0xff]
                %207 = vst [vmem:[%s149 + $0xe0] sm:$0xff] %v206
                %v208 = vld [vmem:[%s148 + $0x328] sm:$0xff]
                %209 = vst [vmem:[%s149 + $0xe8] sm:$0xff] %v208
                %v210 = vld [vmem:[%s148 + $0x330] sm:$0xff]
                %211 = vst [vmem:[%s149 + $0xf0] sm:$0xff] %v210
                %v212 = vld [vmem:[%s148 + $0x338] sm:$0xff]
                %213 = vst [vmem:[%s149 + $0xf8] sm:$0xff] %v212
                %v214 = vld [vmem:[%s148 + $0x400] sm:$0xff]
                %215 = vst [vmem:[%s149 + $0x100] sm:$0xff] %v214
                %v216 = vld [vmem:[%s148 + $0x408] sm:$0xff]
                %217 = vst [vmem:[%s149 + $0x108] sm:$0xff] %v216
                %v218 = vld [vmem:[%s148 + $0x410] sm:$0xff]
                %219 = vst [vmem:[%s149 + $0x110] sm:$0xff] %v218
                %v220 = vld [vmem:[%s148 + $0x418] sm:$0xff]
                %221 = vst [vmem:[%s149 + $0x118] sm:$0xff] %v220
                %v222 = vld [vmem:[%s148 + $0x420] sm:$0xff]
                %223 = vst [vmem:[%s149 + $0x120] sm:$0xff] %v222
                %v224 = vld [vmem:[%s148 + $0x428] sm:$0xff]
                %225 = vst [vmem:[%s149 + $0x128] sm:$0xff] %v224
                %v226 = vld [vmem:[%s148 + $0x430] sm:$0xff]
                %227 = vst [vmem:[%s149 + $0x130] sm:$0xff] %v226
                %v228 = vld [vmem:[%s148 + $0x438] sm:$0xff]
                %229 = vst [vmem:[%s149 + $0x138] sm:$0xff] %v228
                %v230 = vld [vmem:[%s148 + $0x500] sm:$0xff]
                %231 = vst [vmem:[%s149 + $0x140] sm:$0xff] %v230
                %v232 = vld [vmem:[%s148 + $0x508] sm:$0xff]
                %233 = vst [vmem:[%s149 + $0x148] sm:$0xff] %v232
                %v234 = vld [vmem:[%s148 + $0x510] sm:$0xff]
                %235 = vst [vmem:[%s149 + $0x150] sm:$0xff] %v234
                %v236 = vld [vmem:[%s148 + $0x518] sm:$0xff]
                %237 = vst [vmem:[%s149 + $0x158] sm:$0xff] %v236
                %v238 = vld [vmem:[%s148 + $0x520] sm:$0xff]
                %239 = vst [vmem:[%s149 + $0x160] sm:$0xff] %v238
                %v240 = vld [vmem:[%s148 + $0x528] sm:$0xff]
                %241 = vst [vmem:[%s149 + $0x168] sm:$0xff] %v240
                %v242 = vld [vmem:[%s148 + $0x530] sm:$0xff]
                %243 = vst [vmem:[%s149 + $0x170] sm:$0xff] %v242
                %v244 = vld [vmem:[%s148 + $0x538] sm:$0xff]
                %245 = vst [vmem:[%s149 + $0x178] sm:$0xff] %v244
                %v246 = vld [vmem:[%s148 + $0x600] sm:$0xff]
                %247 = vst [vmem:[%s149 + $0x180] sm:$0xff] %v246
                %v248 = vld [vmem:[%s148 + $0x608] sm:$0xff]
                %249 = vst [vmem:[%s149 + $0x188] sm:$0xff] %v248
                %v250 = vld [vmem:[%s148 + $0x610] sm:$0xff]
                %251 = vst [vmem:[%s149 + $0x190] sm:$0xff] %v250
                %v252 = vld [vmem:[%s148 + $0x618] sm:$0xff]
                %253 = vst [vmem:[%s149 + $0x198] sm:$0xff] %v252
                %v254 = vld [vmem:[%s148 + $0x620] sm:$0xff]
                %255 = vst [vmem:[%s149 + $0x1a0] sm:$0xff] %v254
                %v256 = vld [vmem:[%s148 + $0x628] sm:$0xff]
                %257 = vst [vmem:[%s149 + $0x1a8] sm:$0xff] %v256
                %v258 = vld [vmem:[%s148 + $0x630] sm:$0xff]
                %259 = vst [vmem:[%s149 + $0x1b0] sm:$0xff] %v258
                %v260 = vld [vmem:[%s148 + $0x638] sm:$0xff]
                %261 = vst [vmem:[%s149 + $0x1b8] sm:$0xff] %v260
                %v262 = vld [vmem:[%s148 + $0x700] sm:$0xff]
                %263 = vst [vmem:[%s149 + $0x1c0] sm:$0xff] %v262
                %v264 = vld [vmem:[%s148 + $0x708] sm:$0xff]
                %265 = vst [vmem:[%s149 + $0x1c8] sm:$0xff] %v264
                %v266 = vld [vmem:[%s148 + $0x710] sm:$0xff]
                %267 = vst [vmem:[%s149 + $0x1d0] sm:$0xff] %v266
                %v268 = vld [vmem:[%s148 + $0x718] sm:$0xff]
                %269 = vst [vmem:[%s149 + $0x1d8] sm:$0xff] %v268
                %v270 = vld [vmem:[%s148 + $0x720] sm:$0xff]
                %271 = vst [vmem:[%s149 + $0x1e0] sm:$0xff] %v270
                %v272 = vld [vmem:[%s148 + $0x728] sm:$0xff]
                %273 = vst [vmem:[%s149 + $0x1e8] sm:$0xff] %v272
                %v274 = vld [vmem:[%s148 + $0x730] sm:$0xff]
                %275 = vst [vmem:[%s149 + $0x1f0] sm:$0xff] %v274
                %v276 = vld [vmem:[%s148 + $0x738] sm:$0xff]
                %277 = vst [vmem:[%s149 + $0x1f8] sm:$0xff] %v276
              $region41: #{encoder3d_forward.4} parent=35 // loop_footer
                %s147 = sadd.s32 1, %s143
              $region42: #{encoder3d_forward.4} parent=35 // loop_footer_branch
                %142 = sbr.rel target = $region38
              $region43: #{encoder3d_forward.4} parent=35 // loop_exit
                _
            $region36: #{encoder3d_forward.4} parent=31 // pred_fallthru
              _
            // Predicated region
            $region44: #{encoder3d_forward.4} parent=31 // pred_check
              _
            $region45: #{encoder3d_forward.4} parent=31 // pred_check_branch
              %279 = sbr.rel target = $region47
            $region46: #{encoder3d_forward.4} parent=31 // pred_region
              _
            $region47: #{encoder3d_forward.4} parent=31 // pred_fallthru
              _
          $region32: #{encoder3d_forward.4} parent=27 // pred_fallthru
            _
          %280 = vnop
        $region28: #{encoder3d_forward.4} parent=23 // pred_fallthru
          _
      $region24: #{encoder3d_forward.4} parent=5 // pred_fallthru
        _
      %p281 = scmp.le.s32.totalorder 1, %s9
      %p282 = scmp.lt.s32.totalorder %s9, 5
      %p283 = pnand %p281, %p282
      %p284 = pneg %p283
      // Predicated region
      $region48: #{encoder3d_forward.4} parent=5 // pred_check
        _
      $region49: #{encoder3d_forward.4} parent=5 // pred_check_branch
        %286 = sbr.rel (%p283) target = $region51
      $region50: #{encoder3d_forward.4} parent=5 // pred_region
        %s287 = ssub.s32 %s9, 1
        %s288 = sand.u32 %s22, 1
        %s289 = sand.u32 %s22, 1
        %s290 = smul.addr %s289, 512
        %s291 = scalar_lea.vmem [#allocation2], %s290
        // Predicated region
        $region52: #{encoder3d_forward.4} parent=50 // pred_check
          %p292 = pneg %p35
        $region53: #{encoder3d_forward.4} parent=50 // pred_check_branch
          %294 = sbr.rel (%p292) target = $region55
        $region54: #{encoder3d_forward.4} parent=50 // pred_region
          _
        $region55: #{encoder3d_forward.4} parent=50 // pred_fallthru
          _
        %s295 = sand.u32 %s22, 1
        %s296 = sand.u32 %s22, 1
        %s297 = smul.addr %s296, 512
        %s298 = scalar_lea.vmem [#allocation2], %s297
        %p299 = pneg %p35
        %p300 = pneg %p32
        %p301 = pneg %p56
        %p302 = pneg %p53
        %p303 = pneg %p77
        %p304 = pneg %p74
        %p305 = pneg %p103
        %p306 = pneg %p100
        %s307 = smul.u32 16, %s14
        %p308 = scmp.lt.s32.totalorder %s307, 63
        %s309 = scalar_select %p308, %s307, 63
        %s310 = smul.addr %s309, 4
        %s311 = scalar_lea.vmem %s3, %s310
        %s312 = smul.u32 16, %s14
        %s313 = smul.u32 16, %s14
        %p314 = scmp.lt.s32.totalorder %s313, 63
        %s315 = scalar_select %p314, %s313, 63
        %s316 = smul.addr %s315, 4
        %s317 = scalar_lea.vmem %s3, %s316
        %s318 = smul.u32 16, %s14
        %v320 = vld [vmem:[%s1] sm:$0xf]
        %v321 = vld [vmem:[%s291] sm:$0xff]
        %v322 = vld [vmem:[%s291 + $0x8] sm:$0xff]
        %v323 = vld [vmem:[%s291 + $0x10] sm:$0xff]
        %v324 = vld [vmem:[%s291 + $0x18] sm:$0xff]
        %v325 = vld [vmem:[%s291 + $0x20] sm:$0xff]
        %v326 = vld [vmem:[%s291 + $0x28] sm:$0xff]
        %v327 = vld [vmem:[%s291 + $0x30] sm:$0xff]
        %v328 = vld [vmem:[%s291 + $0x38] sm:$0xff]
        %v329 = vld [vmem:[%s291 + $0x40] sm:$0xff]
        %v330 = vld [vmem:[%s291 + $0x48] sm:$0xff]
        %v331 = vld [vmem:[%s291 + $0x50] sm:$0xff]
        %v332 = vld [vmem:[%s291 + $0x58] sm:$0xff]
        %v333 = vld [vmem:[%s291 + $0x60] sm:$0xff]
        %v334 = vld [vmem:[%s291 + $0x68] sm:$0xff]
        %v335 = vld [vmem:[%s291 + $0x70] sm:$0xff]
        %v336 = vld [vmem:[%s291 + $0x78] sm:$0xff]
        %v337 = vld [vmem:[%s291 + $0x80] sm:$0xff]
        %v338 = vld [vmem:[%s291 + $0x88] sm:$0xff]
        %v339 = vld [vmem:[%s291 + $0x90] sm:$0xff]
        %v340 = vld [vmem:[%s291 + $0x98] sm:$0xff]
        %v341 = vld [vmem:[%s291 + $0xa0] sm:$0xff]
        %v342 = vld [vmem:[%s291 + $0xa8] sm:$0xff]
        %v343 = vld [vmem:[%s291 + $0xb0] sm:$0xff]
        %v344 = vld [vmem:[%s291 + $0xb8] sm:$0xff]
        %v345 = vld [vmem:[%s291 + $0xc0] sm:$0xff]
        %v346 = vld [vmem:[%s291 + $0xc8] sm:$0xff]
        %v347 = vld [vmem:[%s291 + $0xd0] sm:$0xff]
        %v348 = vld [vmem:[%s291 + $0xd8] sm:$0xff]
        %v349 = vld [vmem:[%s291 + $0xe0] sm:$0xff]
        %v350 = vld [vmem:[%s291 + $0xe8] sm:$0xff]
        %v351 = vld [vmem:[%s291 + $0xf0] sm:$0xff]
        %v352 = vld [vmem:[%s291 + $0xf8] sm:$0xff]
        %v353 = vld [vmem:[%s291 + $0x100] sm:$0xff]
        %v354 = vld [vmem:[%s291 + $0x108] sm:$0xff]
        %v355 = vld [vmem:[%s291 + $0x110] sm:$0xff]
        %v356 = vld [vmem:[%s291 + $0x118] sm:$0xff]
        %v357 = vld [vmem:[%s291 + $0x120] sm:$0xff]
        %v358 = vld [vmem:[%s291 + $0x128] sm:$0xff]
        %v359 = vld [vmem:[%s291 + $0x130] sm:$0xff]
        %v360 = vld [vmem:[%s291 + $0x138] sm:$0xff]
        %v361 = vld [vmem:[%s291 + $0x140] sm:$0xff]
        %v362 = vld [vmem:[%s291 + $0x148] sm:$0xff]
        %v363 = vld [vmem:[%s291 + $0x150] sm:$0xff]
        %v364 = vld [vmem:[%s291 + $0x158] sm:$0xff]
        %v365 = vld [vmem:[%s291 + $0x160] sm:$0xff]
        %v366 = vld [vmem:[%s291 + $0x168] sm:$0xff]
        %v367 = vld [vmem:[%s291 + $0x170] sm:$0xff]
        %v368 = vld [vmem:[%s291 + $0x178] sm:$0xff]
        %v369 = vld [vmem:[%s291 + $0x180] sm:$0xff]
        %v370 = vld [vmem:[%s291 + $0x188] sm:$0xff]
        %v371 = vld [vmem:[%s291 + $0x190] sm:$0xff]
        %v372 = vld [vmem:[%s291 + $0x198] sm:$0xff]
        %v373 = vld [vmem:[%s291 + $0x1a0] sm:$0xff]
        %v374 = vld [vmem:[%s291 + $0x1a8] sm:$0xff]
        %v375 = vld [vmem:[%s291 + $0x1b0] sm:$0xff]
        %v376 = vld [vmem:[%s291 + $0x1b8] sm:$0xff]
        %v377 = vld [vmem:[%s291 + $0x1c0] sm:$0xff]
        %v378 = vld [vmem:[%s291 + $0x1c8] sm:$0xff]
        %v379 = vld [vmem:[%s291 + $0x1d0] sm:$0xff]
        %v380 = vld [vmem:[%s291 + $0x1d8] sm:$0xff]
        %v381 = vld [vmem:[%s291 + $0x1e0] sm:$0xff]
        %v382 = vld [vmem:[%s291 + $0x1e8] sm:$0xff]
        %v383 = vld [vmem:[%s291 + $0x1f0] sm:$0xff]
        %v384 = vld [vmem:[%s291 + $0x1f8] sm:$0xff]
        %v385 = vld [vmem:[%s2] sm:$0xff]
        %387 = vset.pattern.permute.xlu0 0
        %388 = vperm.xlu0 %387, %v385
        %v389 = vpop.permute.xlu0 %388
        %v455 = vunpack.c.l.b16 %v321
        %v456 = vunpack.c.h.b16 %v321
        %v457 = vunpack.c.l.b16 %v322
        %v458 = vunpack.c.h.b16 %v322
        %v459 = vunpack.c.l.b16 %v323
        %v460 = vunpack.c.h.b16 %v323
        %v461 = vunpack.c.l.b16 %v324
        %v462 = vunpack.c.h.b16 %v324
        %v463 = vunpack.c.l.b16 %v325
        %v464 = vunpack.c.h.b16 %v325
        %v465 = vunpack.c.l.b16 %v326
        %v466 = vunpack.c.h.b16 %v326
        %v467 = vunpack.c.l.b16 %v327
        %v468 = vunpack.c.h.b16 %v327
        %v469 = vunpack.c.l.b16 %v328
        %v470 = vunpack.c.h.b16 %v328
        %v471 = vunpack.c.l.b16 %v329
        %v472 = vunpack.c.h.b16 %v329
        %v473 = vunpack.c.l.b16 %v330
        %v474 = vunpack.c.h.b16 %v330
        %v475 = vunpack.c.l.b16 %v331
        %v476 = vunpack.c.h.b16 %v331
        %v477 = vunpack.c.l.b16 %v332
        %v478 = vunpack.c.h.b16 %v332
        %v479 = vunpack.c.l.b16 %v333
        %v480 = vunpack.c.h.b16 %v333
        %v481 = vunpack.c.l.b16 %v334
        %v482 = vunpack.c.h.b16 %v334
        %v483 = vunpack.c.l.b16 %v335
        %v484 = vunpack.c.h.b16 %v335
        %v485 = vunpack.c.l.b16 %v336
        %v486 = vunpack.c.h.b16 %v336
        %v487 = vunpack.c.l.b16 %v337
        %v488 = vunpack.c.h.b16 %v337
        %v489 = vunpack.c.l.b16 %v338
        %v490 = vunpack.c.h.b16 %v338
        %v491 = vunpack.c.l.b16 %v339
        %v492 = vunpack.c.h.b16 %v339
        %v493 = vunpack.c.l.b16 %v340
        %v494 = vunpack.c.h.b16 %v340
        %v495 = vunpack.c.l.b16 %v341
        %v496 = vunpack.c.h.b16 %v341
        %v497 = vunpack.c.l.b16 %v342
        %v498 = vunpack.c.h.b16 %v342
        %v499 = vunpack.c.l.b16 %v343
        %v500 = vunpack.c.h.b16 %v343
        %v501 = vunpack.c.l.b16 %v344
        %v502 = vunpack.c.h.b16 %v344
        %v503 = vunpack.c.l.b16 %v345
        %v504 = vunpack.c.h.b16 %v345
        %v505 = vunpack.c.l.b16 %v346
        %v506 = vunpack.c.h.b16 %v346
        %v507 = vunpack.c.l.b16 %v347
        %v508 = vunpack.c.h.b16 %v347
        %v509 = vunpack.c.l.b16 %v348
        %v510 = vunpack.c.h.b16 %v348
        %v511 = vunpack.c.l.b16 %v349
        %v512 = vunpack.c.h.b16 %v349
        %v513 = vunpack.c.l.b16 %v350
        %v514 = vunpack.c.h.b16 %v350
        %v515 = vunpack.c.l.b16 %v351
        %v516 = vunpack.c.h.b16 %v351
        %v517 = vunpack.c.l.b16 %v352
        %v518 = vunpack.c.h.b16 %v352
        %v519 = vunpack.c.l.b16 %v353
        %v520 = vunpack.c.h.b16 %v353
        %v521 = vunpack.c.l.b16 %v354
        %v522 = vunpack.c.h.b16 %v354
        %v523 = vunpack.c.l.b16 %v355
        %v524 = vunpack.c.h.b16 %v355
        %v525 = vunpack.c.l.b16 %v356
        %v526 = vunpack.c.h.b16 %v356
        %v527 = vunpack.c.l.b16 %v357
        %v528 = vunpack.c.h.b16 %v357
        %v529 = vunpack.c.l.b16 %v358
        %v530 = vunpack.c.h.b16 %v358
        %v531 = vunpack.c.l.b16 %v359
        %v532 = vunpack.c.h.b16 %v359
        %v533 = vunpack.c.l.b16 %v360
        %v534 = vunpack.c.h.b16 %v360
        %v535 = vunpack.c.l.b16 %v361
        %v536 = vunpack.c.h.b16 %v361
        %v537 = vunpack.c.l.b16 %v362
        %v538 = vunpack.c.h.b16 %v362
        %v539 = vunpack.c.l.b16 %v363
        %v540 = vunpack.c.h.b16 %v363
        %v541 = vunpack.c.l.b16 %v364
        %v542 = vunpack.c.h.b16 %v364
        %v543 = vunpack.c.l.b16 %v365
        %v544 = vunpack.c.h.b16 %v365
        %v545 = vunpack.c.l.b16 %v366
        %v546 = vunpack.c.h.b16 %v366
        %v547 = vunpack.c.l.b16 %v367
        %v548 = vunpack.c.h.b16 %v367
        %v549 = vunpack.c.l.b16 %v368
        %v550 = vunpack.c.h.b16 %v368
        %v551 = vunpack.c.l.b16 %v369
        %v552 = vunpack.c.h.b16 %v369
        %v553 = vunpack.c.l.b16 %v370
        %v554 = vunpack.c.h.b16 %v370
        %v555 = vunpack.c.l.b16 %v371
        %v556 = vunpack.c.h.b16 %v371
        %v557 = vunpack.c.l.b16 %v372
        %v558 = vunpack.c.h.b16 %v372
        %v559 = vunpack.c.l.b16 %v373
        %v560 = vunpack.c.h.b16 %v373
        %v561 = vunpack.c.l.b16 %v374
        %v562 = vunpack.c.h.b16 %v374
        %v563 = vunpack.c.l.b16 %v375
        %v564 = vunpack.c.h.b16 %v375
        %v565 = vunpack.c.l.b16 %v376
        %v566 = vunpack.c.h.b16 %v376
        %v567 = vunpack.c.l.b16 %v377
        %v568 = vunpack.c.h.b16 %v377
        %v569 = vunpack.c.l.b16 %v378
        %v570 = vunpack.c.h.b16 %v378
        %v571 = vunpack.c.l.b16 %v379
        %v572 = vunpack.c.h.b16 %v379
        %v573 = vunpack.c.l.b16 %v380
        %v574 = vunpack.c.h.b16 %v380
        %v575 = vunpack.c.l.b16 %v381
        %v576 = vunpack.c.h.b16 %v381
        %v577 = vunpack.c.l.b16 %v382
        %v578 = vunpack.c.h.b16 %v382
        %v579 = vunpack.c.l.b16 %v383
        %v580 = vunpack.c.h.b16 %v383
        %v581 = vunpack.c.l.b16 %v384
        %v582 = vunpack.c.h.b16 %v384
        %v583 = vpack.c.b16 %v471, %v455
        %v584 = vpack.c.b16 %v472, %v456
        %v585 = vpack.c.b16 %v473, %v457
        %v586 = vpack.c.b16 %v474, %v458
        %v587 = vpack.c.b16 %v475, %v459
        %v588 = vpack.c.b16 %v476, %v460
        %v589 = vpack.c.b16 %v477, %v461
        %v590 = vpack.c.b16 %v478, %v462
        %v591 = vpack.c.b16 %v479, %v463
        %v592 = vpack.c.b16 %v480, %v464
        %v593 = vpack.c.b16 %v481, %v465
        %v594 = vpack.c.b16 %v482, %v466
        %v595 = vpack.c.b16 %v483, %v467
        %v596 = vpack.c.b16 %v484, %v468
        %v597 = vpack.c.b16 %v485, %v469
        %v598 = vpack.c.b16 %v486, %v470
        %v599 = vpack.c.b16 %v503, %v487
        %v600 = vpack.c.b16 %v504, %v488
        %v601 = vpack.c.b16 %v505, %v489
        %v602 = vpack.c.b16 %v506, %v490
        %v603 = vpack.c.b16 %v507, %v491
        %v604 = vpack.c.b16 %v508, %v492
        %v605 = vpack.c.b16 %v509, %v493
        %v606 = vpack.c.b16 %v510, %v494
        %v607 = vpack.c.b16 %v511, %v495
        %v608 = vpack.c.b16 %v512, %v496
        %v609 = vpack.c.b16 %v513, %v497
        %v610 = vpack.c.b16 %v514, %v498
        %v611 = vpack.c.b16 %v515, %v499
        %v612 = vpack.c.b16 %v516, %v500
        %v613 = vpack.c.b16 %v517, %v501
        %v614 = vpack.c.b16 %v518, %v502
        %v615 = vpack.c.b16 %v535, %v519
        %v616 = vpack.c.b16 %v536, %v520
        %v617 = vpack.c.b16 %v537, %v521
        %v618 = vpack.c.b16 %v538, %v522
        %v619 = vpack.c.b16 %v539, %v523
        %v620 = vpack.c.b16 %v540, %v524
        %v621 = vpack.c.b16 %v541, %v525
        %v622 = vpack.c.b16 %v542, %v526
        %v623 = vpack.c.b16 %v543, %v527
        %v624 = vpack.c.b16 %v544, %v528
        %v625 = vpack.c.b16 %v545, %v529
        %v626 = vpack.c.b16 %v546, %v530
        %v627 = vpack.c.b16 %v547, %v531
        %v628 = vpack.c.b16 %v548, %v532
        %v629 = vpack.c.b16 %v549, %v533
        %v630 = vpack.c.b16 %v550, %v534
        %v631 = vpack.c.b16 %v567, %v551
        %v632 = vpack.c.b16 %v568, %v552
        %v633 = vpack.c.b16 %v569, %v553
        %v634 = vpack.c.b16 %v570, %v554
        %v635 = vpack.c.b16 %v571, %v555
        %v636 = vpack.c.b16 %v572, %v556
        %v637 = vpack.c.b16 %v573, %v557
        %v638 = vpack.c.b16 %v574, %v558
        %v639 = vpack.c.b16 %v575, %v559
        %v640 = vpack.c.b16 %v576, %v560
        %v641 = vpack.c.b16 %v577, %v561
        %v642 = vpack.c.b16 %v578, %v562
        %v643 = vpack.c.b16 %v579, %v563
        %v644 = vpack.c.b16 %v580, %v564
        %v645 = vpack.c.b16 %v581, %v565
        %v646 = vpack.c.b16 %v582, %v566
        %vm711 = vcmask 523264
        %v713 = vsel %vm711, %v320, 0
        %715 = vmatprep.subr.bf16.mxu0 %v584
        %716 = vmatpush1.bf16.msra.mxu0 %v583
        %717 = vmatprep.subr.bf16.mxu0 %v600
        %718 = vmatpush1.bf16.msra.mxu0 %v599
        %719 = vmatprep.subr.bf16.mxu0 %v616
        %720 = vmatpush1.bf16.msra.mxu0 %v615
        %721 = vmatprep.subr.bf16.mxu0 %v632
        %722 = vmatpush1.bf16.msra.mxu0 %v631
        %723 = vmatprep.subr.bf16.mxu0 0
        %724 = vmatpush1.bf16.msra.mxu0 0
        %725 = vmatprep.subr.bf16.mxu0 0
        %726 = vmatpush1.bf16.msra.mxu0 0
        %727 = vmatprep.subr.bf16.mxu0 0
        %728 = vmatpush1.bf16.msra.mxu0 0
        %729 = vmatprep.subr.bf16.mxu0 0
        %730 = vmatpush1.bf16.msra.mxu0 0
        %731 = vmatprep.subr.bf16.mxu0 0
        %732 = vmatpush1.bf16.msra.mxu0 0
        %733 = vmatprep.subr.bf16.mxu0 0
        %734 = vmatpush1.bf16.msra.mxu0 0
        %735 = vmatprep.subr.bf16.mxu0 0
        %736 = vmatpush1.bf16.msra.mxu0 0
        %737 = vmatprep.subr.bf16.mxu0 0
        %738 = vmatpush1.bf16.msra.mxu0 0
        %739 = vmatprep.subr.bf16.mxu0 0
        %740 = vmatpush1.bf16.msra.mxu0 0
        %741 = vmatprep.subr.bf16.mxu0 0
        %742 = vmatpush1.bf16.msra.mxu0 0
        %743 = vmatprep.subr.bf16.mxu0 0
        %744 = vmatpush1.bf16.msra.mxu0 0
        %745 = vmatprep.subr.bf16.mxu0 0
        %746 = vmatpush1.bf16.msra.mxu0 0
        %747 = vmatprep.mubr.bf16.mxu0 0
        %748 = vmatmul.mubr.bf16.gmra.mrb[0].mxu0 %v713
        %v749 = vpop.f32.mrb[0].mxu0
        %v750 = vadd.f32 %v389, %v749
        %v751 = vpop.f32.mrb[0].mxu0
        %v752 = vadd.f32 %v389, %v751
        %v753 = vpop.f32.mrb[0].mxu0
        %v754 = vpop.f32.mrb[0].mxu0
        %755 = vdwg.mxu0
        %756 = vmatprep.subr.bf16.mxu0 %v586
        %757 = vmatpush1.bf16.msra.mxu0 %v585
        %758 = vmatprep.subr.bf16.mxu0 %v602
        %759 = vmatpush1.bf16.msra.mxu0 %v601
        %760 = vmatprep.subr.bf16.mxu0 %v618
        %761 = vmatpush1.bf16.msra.mxu0 %v617
        %762 = vmatprep.subr.bf16.mxu0 %v634
        %763 = vmatpush1.bf16.msra.mxu0 %v633
        %764 = vmatprep.subr.bf16.mxu0 0
        %765 = vmatpush1.bf16.msra.mxu0 0
        %766 = vmatprep.subr.bf16.mxu0 0
        %767 = vmatpush1.bf16.msra.mxu0 0
        %768 = vmatprep.subr.bf16.mxu0 0
        %769 = vmatpush1.bf16.msra.mxu0 0
        %770 = vmatprep.subr.bf16.mxu0 0
        %771 = vmatpush1.bf16.msra.mxu0 0
        %772 = vmatprep.subr.bf16.mxu0 0
        %773 = vmatpush1.bf16.msra.mxu0 0
        %774 = vmatprep.subr.bf16.mxu0 0
        %775 = vmatpush1.bf16.msra.mxu0 0
        %776 = vmatprep.subr.bf16.mxu0 0
        %777 = vmatpush1.bf16.msra.mxu0 0
        %778 = vmatprep.subr.bf16.mxu0 0
        %779 = vmatpush1.bf16.msra.mxu0 0
        %780 = vmatprep.subr.bf16.mxu0 0
        %781 = vmatpush1.bf16.msra.mxu0 0
        %782 = vmatprep.subr.bf16.mxu0 0
        %783 = vmatpush1.bf16.msra.mxu0 0
        %784 = vmatprep.subr.bf16.mxu0 0
        %785 = vmatpush1.bf16.msra.mxu0 0
        %786 = vmatprep.subr.bf16.mxu0 0
        %787 = vmatpush1.bf16.msra.mxu0 0
        %788 = vmatprep.mubr.bf16.mxu0 0
        %789 = vmatmul.mubr.bf16.gmra.mrb[0].mxu0 %v713
        %v790 = vpop.f32.mrb[0].mxu0
        %v791 = vadd.f32 %v389, %v790
        %v792 = vpop.f32.mrb[0].mxu0
        %v793 = vadd.f32 %v389, %v792
        %v794 = vpop.f32.mrb[0].mxu0
        %v795 = vpop.f32.mrb[0].mxu0
        %796 = vdwg.mxu0
        %797 = vmatprep.subr.bf16.mxu0 %v588
        %798 = vmatpush1.bf16.msra.mxu0 %v587
        %799 = vmatprep.subr.bf16.mxu0 %v604
        %800 = vmatpush1.bf16.msra.mxu0 %v603
        %801 = vmatprep.subr.bf16.mxu0 %v620
        %802 = vmatpush1.bf16.msra.mxu0 %v619
        %803 = vmatprep.subr.bf16.mxu0 %v636
        %804 = vmatpush1.bf16.msra.mxu0 %v635
        %805 = vmatprep.subr.bf16.mxu0 0
        %806 = vmatpush1.bf16.msra.mxu0 0
        %807 = vmatprep.subr.bf16.mxu0 0
        %808 = vmatpush1.bf16.msra.mxu0 0
        %809 = vmatprep.subr.bf16.mxu0 0
        %810 = vmatpush1.bf16.msra.mxu0 0
        %811 = vmatprep.subr.bf16.mxu0 0
        %812 = vmatpush1.bf16.msra.mxu0 0
        %813 = vmatprep.subr.bf16.mxu0 0
        %814 = vmatpush1.bf16.msra.mxu0 0
        %815 = vmatprep.subr.bf16.mxu0 0
        %816 = vmatpush1.bf16.msra.mxu0 0
        %817 = vmatprep.subr.bf16.mxu0 0
        %818 = vmatpush1.bf16.msra.mxu0 0
        %819 = vmatprep.subr.bf16.mxu0 0
        %820 = vmatpush1.bf16.msra.mxu0 0
        %821 = vmatprep.subr.bf16.mxu0 0
        %822 = vmatpush1.bf16.msra.mxu0 0
        %823 = vmatprep.subr.bf16.mxu0 0
        %824 = vmatpush1.bf16.msra.mxu0 0
        %825 = vmatprep.subr.bf16.mxu0 0
        %826 = vmatpush1.bf16.msra.mxu0 0
        %827 = vmatprep.subr.bf16.mxu0 0
        %828 = vmatpush1.bf16.msra.mxu0 0
        %829 = vmatprep.mubr.bf16.mxu0 0
        %830 = vmatmul.mubr.bf16.gmra.mrb[0].mxu0 %v713
        %v831 = vpop.f32.mrb[0].mxu0
        %v832 = vadd.f32 %v389, %v831
        %v833 = vpop.f32.mrb[0].mxu0
        %v834 = vadd.f32 %v389, %v833
        %v835 = vpop.f32.mrb[0].mxu0
        %v836 = vpop.f32.mrb[0].mxu0
        %837 = vdwg.mxu0
        %838 = vmatprep.subr.bf16.mxu0 %v590
        %839 = vmatpush1.bf16.msra.mxu0 %v589
        %840 = vmatprep.subr.bf16.mxu0 %v606
        %841 = vmatpush1.bf16.msra.mxu0 %v605
        %842 = vmatprep.subr.bf16.mxu0 %v622
        %843 = vmatpush1.bf16.msra.mxu0 %v621
        %844 = vmatprep.subr.bf16.mxu0 %v638
        %845 = vmatpush1.bf16.msra.mxu0 %v637
        %846 = vmatprep.subr.bf16.mxu0 0
        %847 = vmatpush1.bf16.msra.mxu0 0
        %848 = vmatprep.subr.bf16.mxu0 0
        %849 = vmatpush1.bf16.msra.mxu0 0
        %850 = vmatprep.subr.bf16.mxu0 0
        %851 = vmatpush1.bf16.msra.mxu0 0
        %852 = vmatprep.subr.bf16.mxu0 0
        %853 = vmatpush1.bf16.msra.mxu0 0
        %854 = vmatprep.subr.bf16.mxu0 0
        %855 = vmatpush1.bf16.msra.mxu0 0
        %856 = vmatprep.subr.bf16.mxu0 0
        %857 = vmatpush1.bf16.msra.mxu0 0
        %858 = vmatprep.subr.bf16.mxu0 0
        %859 = vmatpush1.bf16.msra.mxu0 0
        %860 = vmatprep.subr.bf16.mxu0 0
        %861 = vmatpush1.bf16.msra.mxu0 0
        %862 = vmatprep.subr.bf16.mxu0 0
        %863 = vmatpush1.bf16.msra.mxu0 0
        %864 = vmatprep.subr.bf16.mxu0 0
        %865 = vmatpush1.bf16.msra.mxu0 0
        %866 = vmatprep.subr.bf16.mxu0 0
        %867 = vmatpush1.bf16.msra.mxu0 0
        %868 = vmatprep.subr.bf16.mxu0 0
        %869 = vmatpush1.bf16.msra.mxu0 0
        %870 = vmatprep.mubr.bf16.mxu0 0
        %871 = vmatmul.mubr.bf16.gmra.mrb[0].mxu0 %v713
        %v872 = vpop.f32.mrb[0].mxu0
        %v873 = vadd.f32 %v389, %v872
        %v874 = vpop.f32.mrb[0].mxu0
        %v875 = vadd.f32 %v389, %v874
        %v876 = vpop.f32.mrb[0].mxu0
        %v877 = vpop.f32.mrb[0].mxu0
        %878 = vdwg.mxu0
        %879 = vmatprep.subr.bf16.mxu0 %v592
        %880 = vmatpush1.bf16.msra.mxu0 %v591
        %881 = vmatprep.subr.bf16.mxu0 %v608
        %882 = vmatpush1.bf16.msra.mxu0 %v607
        %883 = vmatprep.subr.bf16.mxu0 %v624
        %884 = vmatpush1.bf16.msra.mxu0 %v623
        %885 = vmatprep.subr.bf16.mxu0 %v640
        %886 = vmatpush1.bf16.msra.mxu0 %v639
        %887 = vmatprep.subr.bf16.mxu0 0
        %888 = vmatpush1.bf16.msra.mxu0 0
        %889 = vmatprep.subr.bf16.mxu0 0
        %890 = vmatpush1.bf16.msra.mxu0 0
        %891 = vmatprep.subr.bf16.mxu0 0
        %892 = vmatpush1.bf16.msra.mxu0 0
        %893 = vmatprep.subr.bf16.mxu0 0
        %894 = vmatpush1.bf16.msra.mxu0 0
        %895 = vmatprep.subr.bf16.mxu0 0
        %896 = vmatpush1.bf16.msra.mxu0 0
        %897 = vmatprep.subr.bf16.mxu0 0
        %898 = vmatpush1.bf16.msra.mxu0 0
        %899 = vmatprep.subr.bf16.mxu0 0
        %900 = vmatpush1.bf16.msra.mxu0 0
        %901 = vmatprep.subr.bf16.mxu0 0
        %902 = vmatpush1.bf16.msra.mxu0 0
        %903 = vmatprep.subr.bf16.mxu0 0
        %904 = vmatpush1.bf16.msra.mxu0 0
        %905 = vmatprep.subr.bf16.mxu0 0
        %906 = vmatpush1.bf16.msra.mxu0 0
        %907 = vmatprep.subr.bf16.mxu0 0
        %908 = vmatpush1.bf16.msra.mxu0 0
        %909 = vmatprep.subr.bf16.mxu0 0
        %910 = vmatpush1.bf16.msra.mxu0 0
        %911 = vmatprep.mubr.bf16.mxu0 0
        %912 = vmatmul.mubr.bf16.gmra.mrb[0].mxu0 %v713
        %v913 = vpop.f32.mrb[0].mxu0
        %v914 = vadd.f32 %v389, %v913
        %v915 = vpop.f32.mrb[0].mxu0
        %v916 = vadd.f32 %v389, %v915
        %v917 = vpop.f32.mrb[0].mxu0
        %v918 = vpop.f32.mrb[0].mxu0
        %919 = vdwg.mxu0
        %920 = vmatprep.subr.bf16.mxu0 %v594
        %921 = vmatpush1.bf16.msra.mxu0 %v593
        %922 = vmatprep.subr.bf16.mxu0 %v610
        %923 = vmatpush1.bf16.msra.mxu0 %v609
        %924 = vmatprep.subr.bf16.mxu0 %v626
        %925 = vmatpush1.bf16.msra.mxu0 %v625
        %926 = vmatprep.subr.bf16.mxu0 %v642
        %927 = vmatpush1.bf16.msra.mxu0 %v641
        %928 = vmatprep.subr.bf16.mxu0 0
        %929 = vmatpush1.bf16.msra.mxu0 0
        %930 = vmatprep.subr.bf16.mxu0 0
        %931 = vmatpush1.bf16.msra.mxu0 0
        %932 = vmatprep.subr.bf16.mxu0 0
        %933 = vmatpush1.bf16.msra.mxu0 0
        %934 = vmatprep.subr.bf16.mxu0 0
        %935 = vmatpush1.bf16.msra.mxu0 0
        %936 = vmatprep.subr.bf16.mxu0 0
        %937 = vmatpush1.bf16.msra.mxu0 0
        %938 = vmatprep.subr.bf16.mxu0 0
        %939 = vmatpush1.bf16.msra.mxu0 0
        %940 = vmatprep.subr.bf16.mxu0 0
        %941 = vmatpush1.bf16.msra.mxu0 0
        %942 = vmatprep.subr.bf16.mxu0 0
        %943 = vmatpush1.bf16.msra.mxu0 0
        %944 = vmatprep.subr.bf16.mxu0 0
        %945 = vmatpush1.bf16.msra.mxu0 0
        %946 = vmatprep.subr.bf16.mxu0 0
        %947 = vmatpush1.bf16.msra.mxu0 0
        %948 = vmatprep.subr.bf16.mxu0 0
        %949 = vmatpush1.bf16.msra.mxu0 0
        %950 = vmatprep.subr.bf16.mxu0 0
        %951 = vmatpush1.bf16.msra.mxu0 0
        %952 = vmatprep.mubr.bf16.mxu0 0
        %953 = vmatmul.mubr.bf16.gmra.mrb[0].mxu0 %v713
        %v954 = vpop.f32.mrb[0].mxu0
        %v955 = vadd.f32 %v389, %v954
        %v956 = vpop.f32.mrb[0].mxu0
        %v957 = vadd.f32 %v389, %v956
        %v958 = vpop.f32.mrb[0].mxu0
        %v959 = vpop.f32.mrb[0].mxu0
        %960 = vdwg.mxu0
        %961 = vmatprep.subr.bf16.mxu0 %v596
        %962 = vmatpush1.bf16.msra.mxu0 %v595
        %963 = vmatprep.subr.bf16.mxu0 %v612
        %964 = vmatpush1.bf16.msra.mxu0 %v611
        %965 = vmatprep.subr.bf16.mxu0 %v628
        %966 = vmatpush1.bf16.msra.mxu0 %v627
        %967 = vmatprep.subr.bf16.mxu0 %v644
        %968 = vmatpush1.bf16.msra.mxu0 %v643
        %969 = vmatprep.subr.bf16.mxu0 0
        %970 = vmatpush1.bf16.msra.mxu0 0
        %971 = vmatprep.subr.bf16.mxu0 0
        %972 = vmatpush1.bf16.msra.mxu0 0
        %973 = vmatprep.subr.bf16.mxu0 0
        %974 = vmatpush1.bf16.msra.mxu0 0
        %975 = vmatprep.subr.bf16.mxu0 0
        %976 = vmatpush1.bf16.msra.mxu0 0
        %977 = vmatprep.subr.bf16.mxu0 0
        %978 = vmatpush1.bf16.msra.mxu0 0
        %979 = vmatprep.subr.bf16.mxu0 0
        %980 = vmatpush1.bf16.msra.mxu0 0
        %981 = vmatprep.subr.bf16.mxu0 0
        %982 = vmatpush1.bf16.msra.mxu0 0
        %983 = vmatprep.subr.bf16.mxu0 0
        %984 = vmatpush1.bf16.msra.mxu0 0
        %985 = vmatprep.subr.bf16.mxu0 0
        %986 = vmatpush1.bf16.msra.mxu0 0
        %987 = vmatprep.subr.bf16.mxu0 0
        %988 = vmatpush1.bf16.msra.mxu0 0
        %989 = vmatprep.subr.bf16.mxu0 0
        %990 = vmatpush1.bf16.msra.mxu0 0
        %991 = vmatprep.subr.bf16.mxu0 0
        %992 = vmatpush1.bf16.msra.mxu0 0
        %993 = vmatprep.mubr.bf16.mxu0 0
        %994 = vmatmul.mubr.bf16.gmra.mrb[0].mxu0 %v713
        %v995 = vpop.f32.mrb[0].mxu0
        %v996 = vadd.f32 %v389, %v995
        %v997 = vpop.f32.mrb[0].mxu0
        %v998 = vadd.f32 %v389, %v997
        %v999 = vpop.f32.mrb[0].mxu0
        %v1000 = vpop.f32.mrb[0].mxu0
        %1001 = vdwg.mxu0
        %1002 = vmatprep.subr.bf16.mxu0 %v598
        %1003 = vmatpush1.bf16.msra.mxu0 %v597
        %1004 = vmatprep.subr.bf16.mxu0 %v614
        %1005 = vmatpush1.bf16.msra.mxu0 %v613
        %1006 = vmatprep.subr.bf16.mxu0 %v630
        %1007 = vmatpush1.bf16.msra.mxu0 %v629
        %1008 = vmatprep.subr.bf16.mxu0 %v646
        %1009 = vmatpush1.bf16.msra.mxu0 %v645
        %1010 = vmatprep.subr.bf16.mxu0 0
        %1011 = vmatpush1.bf16.msra.mxu0 0
        %1012 = vmatprep.subr.bf16.mxu0 0
        %1013 = vmatpush1.bf16.msra.mxu0 0
        %1014 = vmatprep.subr.bf16.mxu0 0
        %1015 = vmatpush1.bf16.msra.mxu0 0
        %1016 = vmatprep.subr.bf16.mxu0 0
        %1017 = vmatpush1.bf16.msra.mxu0 0
        %1018 = vmatprep.subr.bf16.mxu0 0
        %1019 = vmatpush1.bf16.msra.mxu0 0
        %1020 = vmatprep.subr.bf16.mxu0 0
        %1021 = vmatpush1.bf16.msra.mxu0 0
        %1022 = vmatprep.subr.bf16.mxu0 0
        %1023 = vmatpush1.bf16.msra.mxu0 0
        %1024 = vmatprep.subr.bf16.mxu0 0
        %1025 = vmatpush1.bf16.msra.mxu0 0
        %1026 = vmatprep.subr.bf16.mxu0 0
        %1027 = vmatpush1.bf16.msra.mxu0 0
        %1028 = vmatprep.subr.bf16.mxu0 0
        %1029 = vmatpush1.bf16.msra.mxu0 0
        %1030 = vmatprep.subr.bf16.mxu0 0
        %1031 = vmatpush1.bf16.msra.mxu0 0
        %1032 = vmatprep.subr.bf16.mxu0 0
        %1033 = vmatpush1.bf16.msra.mxu0 0
        %1034 = vmatprep.mubr.bf16.mxu0 0
        %1035 = vmatmul.mubr.bf16.gmra.mrb[0].mxu0 %v713
        %v1036 = vpop.f32.mrb[0].mxu0
        %v1037 = vadd.f32 %v389, %v1036
        %v1038 = vpop.f32.mrb[0].mxu0
        %v1039 = vadd.f32 %v389, %v1038
        %v1040 = vpop.f32.mrb[0].mxu0
        %v1041 = vpop.f32.mrb[0].mxu0
        %1042 = vdwg.mxu0
        %v1043 = vmax.f32 %v750, 0.0
        %v1044 = vmax.f32 %v752, 0.0
        %v1045 = vmax.f32 %v791, 0.0
        %v1046 = vmax.f32 %v793, 0.0
        %v1047 = vmax.f32 %v832, 0.0
        %v1048 = vmax.f32 %v834, 0.0
        %v1049 = vmax.f32 %v873, 0.0
        %v1050 = vmax.f32 %v875, 0.0
        %v1051 = vmax.f32 %v914, 0.0
        %v1052 = vmax.f32 %v916, 0.0
        %v1053 = vmax.f32 %v955, 0.0
        %v1054 = vmax.f32 %v957, 0.0
        %v1055 = vmax.f32 %v996, 0.0
        %v1056 = vmax.f32 %v998, 0.0
        %v1057 = vmax.f32 %v1037, 0.0
        %v1058 = vmax.f32 %v1039, 0.0
        %v1059 = vpack.c.bf16 %v1043, %v1043
        %v1060 = vpack.c.bf16 %v1044, %v1044
        %v1061 = vpack.c.bf16 %v1045, %v1045
        %v1062 = vpack.c.bf16 %v1046, %v1046
        %v1063 = vpack.c.bf16 %v1047, %v1047
        %v1064 = vpack.c.bf16 %v1048, %v1048
        %v1065 = vpack.c.bf16 %v1049, %v1049
        %v1066 = vpack.c.bf16 %v1050, %v1050
        %v1067 = vpack.c.bf16 %v1051, %v1051
        %v1068 = vpack.c.bf16 %v1052, %v1052
        %v1069 = vpack.c.bf16 %v1053, %v1053
        %v1070 = vpack.c.bf16 %v1054, %v1054
        %v1071 = vpack.c.bf16 %v1055, %v1055
        %v1072 = vpack.c.bf16 %v1056, %v1056
        %v1073 = vpack.c.bf16 %v1057, %v1057
        %v1074 = vpack.c.bf16 %v1058, %v1058
        %v1091 = vunpack.c.l.b16 %v1059
        %v1092 = vunpack.c.l.b16 %v1060
        %v1093 = vunpack.c.l.b16 %v1061
        %v1094 = vunpack.c.l.b16 %v1062
        %v1095 = vunpack.c.l.b16 %v1063
        %v1096 = vunpack.c.l.b16 %v1064
        %v1097 = vunpack.c.l.b16 %v1065
        %v1098 = vunpack.c.l.b16 %v1066
        %v1099 = vunpack.c.l.b16 %v1067
        %v1100 = vunpack.c.l.b16 %v1068
        %v1101 = vunpack.c.l.b16 %v1069
        %v1102 = vunpack.c.l.b16 %v1070
        %v1103 = vunpack.c.l.b16 %v1071
        %v1104 = vunpack.c.l.b16 %v1072
        %v1105 = vunpack.c.l.b16 %v1073
        %v1106 = vunpack.c.l.b16 %v1074
        %v1107 = vpack.c.b16 %v1092, %v1091
        %v1108 = vpack.c.b16 %v1094, %v1093
        %v1109 = vpack.c.b16 %v1096, %v1095
        %v1110 = vpack.c.b16 %v1098, %v1097
        %v1111 = vpack.c.b16 %v1100, %v1099
        %v1112 = vpack.c.b16 %v1102, %v1101
        %v1113 = vpack.c.b16 %v1104, %v1103
        %v1114 = vpack.c.b16 %v1106, %v1105
        %1123 = vst [vmem:[%s317] sm:$0xff] %v1107
        %1124 = vst [vmem:[%s317 + $0x8] sm:$0xff] %v1108
        %1125 = vst [vmem:[%s317 + $0x10] sm:$0xff] %v1109
        %1126 = vst [vmem:[%s317 + $0x18] sm:$0xff] %v1110
        %1127 = vst [vmem:[%s317 + $0x20] sm:$0xff] %v1111
        %1128 = vst [vmem:[%s317 + $0x28] sm:$0xff] %v1112
        %1129 = vst [vmem:[%s317 + $0x30] sm:$0xff] %v1113
        %1130 = vst [vmem:[%s317 + $0x38] sm:$0xff] %v1114
        %s1131 = smul.u32 16, %s14
        %p1132 = scmp.lt.s32.totalorder %s1131, 63
        %s1133 = scalar_select %p1132, %s1131, 63
        %s1134 = smul.addr %s1133, 4
        %s1135 = scalar_lea.vmem %s3, %s1134
        // Predicated region
        $region56: #{encoder3d_forward.4} parent=50 // pred_check
          %p1136 = pneg %p100
        $region57: #{encoder3d_forward.4} parent=50 // pred_check_branch
          %1138 = sbr.rel (%p1136) target = $region59
        $region58: #{encoder3d_forward.4} parent=50 // pred_region
          %s1139 = smul.u32 16, %s14
        $region59: #{encoder3d_forward.4} parent=50 // pred_fallthru
          _
      $region51: #{encoder3d_forward.4} parent=5 // pred_fallthru
        _
      %p1140 = scmp.le.s32.totalorder 2, %s9
      // Predicated region
      $region60: #{encoder3d_forward.4} parent=5 // pred_check
        %p1141 = pneg %p1140
      $region61: #{encoder3d_forward.4} parent=5 // pred_check_branch
        %1143 = sbr.rel (%p1141) target = $region63
      $region62: #{encoder3d_forward.4} parent=5 // pred_region
        %s1144 = ssub.s32 %s9, 2
        // Predicated region
        $region64: #{encoder3d_forward.4} parent=62 // pred_check
          %p1145 = pneg %p106
        $region65: #{encoder3d_forward.4} parent=62 // pred_check_branch
          %1147 = sbr.rel (%p1145) target = $region67
        $region66: #{encoder3d_forward.4} parent=62 // pred_region
          %s1148 = smul.u32 16, %s15
          %p1149 = scmp.lt.s32.totalorder %s1148, 63
          %s1150 = scalar_select %p1149, %s1148, 63
          %s1151 = smul.addr %s1150, 4
          %s1152 = scalar_lea.vmem %s3, %s1151
        $region67: #{encoder3d_forward.4} parent=62 // pred_fallthru
          _
      $region63: #{encoder3d_forward.4} parent=5 // pred_fallthru
        _
    $region6: #{encoder3d_forward.4} parent=1 // loop_footer
      %s13 = sadd.s32 1, %s9
    $region7: #{encoder3d_forward.4} parent=1 // loop_footer_branch
      %8 = sbr.rel target = $region3
    $region8: #{encoder3d_forward.4} parent=1 // loop_exit
      _

// kernel: encoder3d_forward.5
$region0: #{encoder3d_forward.5}
  #allocation0 [shape = 'u32[]', space=smem, size = 0x4, offset = 0x4, fixed_abs, tag = 'smem constant byte address 0x4 - core index']
  #allocation1 [shape = 'u32[144,128]{1,0:T(1,128)}', space=vmem, size = 0x12000, scoped, tag = 'internal scratch']
  %s0 = inlined_call_operand.vmem [shape: bf16[216,1024], index: 0, kind: input, shape index: {}]
  %s1 = inlined_call_operand.vmem [shape: bf16[16,216], index: 1, kind: input, shape index: {}]
  %s2 = inlined_call_operand.vmem [shape: f32[16,1], index: 2, kind: input, shape index: {}]
  %s3 = inlined_call_operand.vmem [shape: f32[16,1], index: 3, kind: input, shape index: {}]
  %s4 = inlined_call_operand.vmem [shape: bf16[16,1024], index: 4, kind: output, shape index: {}]
  %s5 = sld [smem:[#allocation0]]
  $region26: #{encoder3d_forward.5} parent=0
    _
  %s7 = ssub.s32 1, %s5
  %s8 = scalar_select 0, %s7, %s5
  // Predicated region
  $region2: #{encoder3d_forward.5} parent=0 // pred_check
    _
  $region3: #{encoder3d_forward.5} parent=0 // pred_check_branch
    %10 = sbr.rel (0) target = $region5
  $region4: #{encoder3d_forward.5} parent=0 // pred_region
    _
  $region5: #{encoder3d_forward.5} parent=0 // pred_fallthru
    _
  // Predicated region
  $region6: #{encoder3d_forward.5} parent=0 // pred_check
    _
  $region7: #{encoder3d_forward.5} parent=0 // pred_check_branch
    %12 = sbr.rel (0) target = $region9
  $region8: #{encoder3d_forward.5} parent=0 // pred_region
    _
  $region9: #{encoder3d_forward.5} parent=0 // pred_fallthru
    _
  // Predicated region
  $region10: #{encoder3d_forward.5} parent=0 // pred_check
    _
  $region11: #{encoder3d_forward.5} parent=0 // pred_check_branch
    %14 = sbr.rel (0) target = $region13
  $region12: #{encoder3d_forward.5} parent=0 // pred_region
    _
  $region13: #{encoder3d_forward.5} parent=0 // pred_fallthru
    _
  // Predicated region
  $region14: #{encoder3d_forward.5} parent=0 // pred_check
    _
  $region15: #{encoder3d_forward.5} parent=0 // pred_check_branch
    %16 = sbr.rel (0) target = $region17
  $region16: #{encoder3d_forward.5} parent=0 // pred_region
    _
  $region17: #{encoder3d_forward.5} parent=0 // pred_fallthru
    _
  %v18 = vld [vmem:[%s1] sm:$0xff]
  %v19 = vld [vmem:[%s1 + $0x8] sm:$0xff]
  %v20 = vld [vmem:[%s0] sm:$0xff]
  %v21 = vld [vmem:[%s0 + $0x8] sm:$0xff]
  %v22 = vld [vmem:[%s0 + $0x10] sm:$0xff]
  %v23 = vld [vmem:[%s0 + $0x18] sm:$0xff]
  %v24 = vld [vmem:[%s0 + $0x20] sm:$0xff]
  %v25 = vld [vmem:[%s0 + $0x28] sm:$0xff]
  %v26 = vld [vmem:[%s0 + $0x30] sm:$0xff]
  %v27 = vld [vmem:[%s0 + $0x38] sm:$0xff]
  %v28 = vld [vmem:[%s0 + $0x40] sm:$0xff]
  %v29 = vld [vmem:[%s0 + $0x48] sm:$0xff]
  %v30 = vld [vmem:[%s0 + $0x50] sm:$0xff]
  %v31 = vld [vmem:[%s0 + $0x58] sm:$0xff]
  %v32 = vld [vmem:[%s0 + $0x60] sm:$0xff]
  %v33 = vld [vmem:[%s0 + $0x68] sm:$0xff]
  %v34 = vld [vmem:[%s0 + $0x70] sm:$0xff]
  %v35 = vld [vmem:[%s0 + $0x78] sm:$0xff]
  %v36 = vld [vmem:[%s0 + $0x80] sm:$0xff]
  %v37 = vld [vmem:[%s0 + $0x88] sm:$0xff]
  %v38 = vld [vmem:[%s0 + $0x90] sm:$0xff]
  %v39 = vld [vmem:[%s0 + $0x98] sm:$0xff]
  %v40 = vld [vmem:[%s0 + $0xa0] sm:$0xff]
  %v41 = vld [vmem:[%s0 + $0xa8] sm:$0xff]
  %v42 = vld [vmem:[%s0 + $0xb0] sm:$0xff]
  %v43 = vld [vmem:[%s0 + $0xb8] sm:$0xff]
  %v44 = vld [vmem:[%s0 + $0xc0] sm:$0xff]
  %v45 = vld [vmem:[%s0 + $0xc8] sm:$0xff]
  %v46 = vld [vmem:[%s0 + $0xd0] sm:$0xff]
  %v47 = vld [vmem:[%s0 + $0xd8] sm:$0xff]
  %v48 = vld [vmem:[%s0 + $0xe0] sm:$0xff]
  %v49 = vld [vmem:[%s0 + $0xe8] sm:$0xff]
  %v50 = vld [vmem:[%s0 + $0xf0] sm:$0xff]
  %v51 = vld [vmem:[%s0 + $0xf8] sm:$0xff]
  %v52 = vld [vmem:[%s0 + $0x100] sm:$0xff]
  %v53 = vld [vmem:[%s0 + $0x108] sm:$0xff]
  %v54 = vld [vmem:[%s0 + $0x110] sm:$0xff]
  %v55 = vld [vmem:[%s0 + $0x118] sm:$0xff]
  %v56 = vld [vmem:[%s0 + $0x120] sm:$0xff]
  %v57 = vld [vmem:[%s0 + $0x128] sm:$0xff]
  %v58 = vld [vmem:[%s0 + $0x130] sm:$0xff]
  %v59 = vld [vmem:[%s0 + $0x138] sm:$0xff]
  %v60 = vld [vmem:[%s0 + $0x140] sm:$0xff]
  %v61 = vld [vmem:[%s0 + $0x148] sm:$0xff]
  %v62 = vld [vmem:[%s0 + $0x150] sm:$0xff]
  %v63 = vld [vmem:[%s0 + $0x158] sm:$0xff]
  %v64 = vld [vmem:[%s0 + $0x160] sm:$0xff]
  %v65 = vld [vmem:[%s0 + $0x168] sm:$0xff]
  %v66 = vld [vmem:[%s0 + $0x170] sm:$0xff]
  %v67 = vld [vmem:[%s0 + $0x178] sm:$0xff]
  %v68 = vld [vmem:[%s0 + $0x180] sm:$0xff]
  %v69 = vld [vmem:[%s0 + $0x188] sm:$0xff]
  %v70 = vld [vmem:[%s0 + $0x190] sm:$0xff]
  %v71 = vld [vmem:[%s0 + $0x198] sm:$0xff]
  %v72 = vld [vmem:[%s0 + $0x1a0] sm:$0xff]
  %v73 = vld [vmem:[%s0 + $0x1a8] sm:$0xff]
  %v74 = vld [vmem:[%s0 + $0x1b0] sm:$0xff]
  %v75 = vld [vmem:[%s0 + $0x1b8] sm:$0xff]
  %v76 = vld [vmem:[%s0 + $0x1c0] sm:$0xff]
  %v77 = vld [vmem:[%s0 + $0x1c8] sm:$0xff]
  %v78 = vld [vmem:[%s0 + $0x1d0] sm:$0xff]
  %v79 = vld [vmem:[%s0 + $0x1d8] sm:$0xff]
  %v80 = vld [vmem:[%s0 + $0x1e0] sm:$0xff]
  %v81 = vld [vmem:[%s0 + $0x1e8] sm:$0xff]
  %v82 = vld [vmem:[%s0 + $0x1f0] sm:$0xff]
  %v83 = vld [vmem:[%s0 + $0x1f8] sm:$0xff]
  %v84 = vld [vmem:[%s0 + $0x200] sm:$0xff]
  %v85 = vld [vmem:[%s0 + $0x208] sm:$0xff]
  %v86 = vld [vmem:[%s0 + $0x210] sm:$0xff]
  %v87 = vld [vmem:[%s0 + $0x218] sm:$0xff]
  %v88 = vld [vmem:[%s0 + $0x220] sm:$0xff]
  %v89 = vld [vmem:[%s0 + $0x228] sm:$0xff]
  %v90 = vld [vmem:[%s0 + $0x230] sm:$0xff]
  %v91 = vld [vmem:[%s0 + $0x238] sm:$0xff]
  %v92 = vld [vmem:[%s0 + $0x240] sm:$0xff]
  %v93 = vld [vmem:[%s0 + $0x248] sm:$0xff]
  %v94 = vld [vmem:[%s0 + $0x250] sm:$0xff]
  %v95 = vld [vmem:[%s0 + $0x258] sm:$0xff]
  %v96 = vld [vmem:[%s0 + $0x260] sm:$0xff]
  %v97 = vld [vmem:[%s0 + $0x268] sm:$0xff]
  %v98 = vld [vmem:[%s0 + $0x270] sm:$0xff]
  %v99 = vld [vmem:[%s0 + $0x278] sm:$0xff]
  %v100 = vld [vmem:[%s0 + $0x280] sm:$0xff]
  %v101 = vld [vmem:[%s0 + $0x288] sm:$0xff]
  %v102 = vld [vmem:[%s0 + $0x290] sm:$0xff]
  %v103 = vld [vmem:[%s0 + $0x298] sm:$0xff]
  %v104 = vld [vmem:[%s0 + $0x2a0] sm:$0xff]
  %v105 = vld [vmem:[%s0 + $0x2a8] sm:$0xff]
  %v106 = vld [vmem:[%s0 + $0x2b0] sm:$0xff]
  %v107 = vld [vmem:[%s0 + $0x2b8] sm:$0xff]
  %v108 = vld [vmem:[%s0 + $0x2c0] sm:$0xff]
  %v109 = vld [vmem:[%s0 + $0x2c8] sm:$0xff]
  %v110 = vld [vmem:[%s0 + $0x2d0] sm:$0xff]
  %v111 = vld [vmem:[%s0 + $0x2d8] sm:$0xff]
  %v112 = vld [vmem:[%s0 + $0x2e0] sm:$0xff]
  %v113 = vld [vmem:[%s0 + $0x2e8] sm:$0xff]
  %v114 = vld [vmem:[%s0 + $0x2f0] sm:$0xff]
  %v115 = vld [vmem:[%s0 + $0x2f8] sm:$0xff]
  %v116 = vld [vmem:[%s0 + $0x300] sm:$0xff]
  %v117 = vld [vmem:[%s0 + $0x308] sm:$0xff]
  %v118 = vld [vmem:[%s0 + $0x310] sm:$0xff]
  %v119 = vld [vmem:[%s0 + $0x318] sm:$0xff]
  %v120 = vld [vmem:[%s0 + $0x320] sm:$0xff]
  %v121 = vld [vmem:[%s0 + $0x328] sm:$0xff]
  %v122 = vld [vmem:[%s0 + $0x330] sm:$0xff]
  %v123 = vld [vmem:[%s0 + $0x338] sm:$0xff]
  %v124 = vld [vmem:[%s0 + $0x340] sm:$0xff]
  %v125 = vld [vmem:[%s0 + $0x348] sm:$0xff]
  %v126 = vld [vmem:[%s0 + $0x350] sm:$0xff]
  %v127 = vld [vmem:[%s0 + $0x358] sm:$0xff]
  %v130 = vunpack.c.l.b16 %v18
  %v131 = vunpack.c.h.b16 %v18
  %v132 = vunpack.c.l.b16 %v19
  %v133 = vunpack.c.h.b16 %v19
  %v134 = vpack.c.b16 %v132, %v130
  %v135 = vpack.c.b16 %v133, %v131
  %v245 = vunpack.c.l.b16 %v20
  %v246 = vunpack.c.h.b16 %v20
  %v247 = vunpack.c.l.b16 %v21
  %v248 = vunpack.c.h.b16 %v21
  %v249 = vunpack.c.l.b16 %v22
  %v250 = vunpack.c.h.b16 %v22
  %v251 = vunpack.c.l.b16 %v23
  %v252 = vunpack.c.h.b16 %v23
  %v253 = vunpack.c.l.b16 %v24
  %v254 = vunpack.c.h.b16 %v24
  %v255 = vunpack.c.l.b16 %v25
  %v256 = vunpack.c.h.b16 %v25
  %v257 = vunpack.c.l.b16 %v26
  %v258 = vunpack.c.h.b16 %v26
  %v259 = vunpack.c.l.b16 %v27
  %v260 = vunpack.c.h.b16 %v27
  %v261 = vunpack.c.l.b16 %v28
  %v262 = vunpack.c.h.b16 %v28
  %v263 = vunpack.c.l.b16 %v29
  %v264 = vunpack.c.h.b16 %v29
  %v265 = vunpack.c.l.b16 %v30
  %v266 = vunpack.c.h.b16 %v30
  %v267 = vunpack.c.l.b16 %v31
  %v268 = vunpack.c.h.b16 %v31
  %v269 = vunpack.c.l.b16 %v32
  %v270 = vunpack.c.h.b16 %v32
  %v271 = vunpack.c.l.b16 %v33
  %v272 = vunpack.c.h.b16 %v33
  %v273 = vunpack.c.l.b16 %v34
  %v274 = vunpack.c.h.b16 %v34
  %v275 = vunpack.c.l.b16 %v35
  %v276 = vunpack.c.h.b16 %v35
  %v277 = vunpack.c.l.b16 %v36
  %v278 = vunpack.c.h.b16 %v36
  %v279 = vunpack.c.l.b16 %v37
  %v280 = vunpack.c.h.b16 %v37
  %v281 = vunpack.c.l.b16 %v38
  %v282 = vunpack.c.h.b16 %v38
  %v283 = vunpack.c.l.b16 %v39
  %v284 = vunpack.c.h.b16 %v39
  %v285 = vunpack.c.l.b16 %v40
  %v286 = vunpack.c.h.b16 %v40
  %v287 = vunpack.c.l.b16 %v41
  %v288 = vunpack.c.h.b16 %v41
  %v289 = vunpack.c.l.b16 %v42
  %v290 = vunpack.c.h.b16 %v42
  %v291 = vunpack.c.l.b16 %v43
  %v292 = vunpack.c.h.b16 %v43
  %v293 = vunpack.c.l.b16 %v44
  %v294 = vunpack.c.h.b16 %v44
  %v295 = vunpack.c.l.b16 %v45
  %v296 = vunpack.c.h.b16 %v45
  %v297 = vunpack.c.l.b16 %v46
  %v298 = vunpack.c.h.b16 %v46
  %v299 = vunpack.c.l.b16 %v47
  %v300 = vunpack.c.h.b16 %v47
  %v301 = vunpack.c.l.b16 %v48
  %v302 = vunpack.c.h.b16 %v48
  %v303 = vunpack.c.l.b16 %v49
  %v304 = vunpack.c.h.b16 %v49
  %v305 = vunpack.c.l.b16 %v50
  %v306 = vunpack.c.h.b16 %v50
  %v307 = vunpack.c.l.b16 %v51
  %v308 = vunpack.c.h.b16 %v51
  %v309 = vunpack.c.l.b16 %v52
  %v310 = vunpack.c.h.b16 %v52
  %v311 = vunpack.c.l.b16 %v53
  %v312 = vunpack.c.h.b16 %v53
  %v313 = vunpack.c.l.b16 %v54
  %v314 = vunpack.c.h.b16 %v54
  %v315 = vunpack.c.l.b16 %v55
  %v316 = vunpack.c.h.b16 %v55
  %v317 = vunpack.c.l.b16 %v56
  %v318 = vunpack.c.h.b16 %v56
  %v319 = vunpack.c.l.b16 %v57
  %v320 = vunpack.c.h.b16 %v57
  %v321 = vunpack.c.l.b16 %v58
  %v322 = vunpack.c.h.b16 %v58
  %v323 = vunpack.c.l.b16 %v59
  %v324 = vunpack.c.h.b16 %v59
  %v325 = vunpack.c.l.b16 %v60
  %v326 = vunpack.c.h.b16 %v60
  %v327 = vunpack.c.l.b16 %v61
  %v328 = vunpack.c.h.b16 %v61
  %v329 = vunpack.c.l.b16 %v62
  %v330 = vunpack.c.h.b16 %v62
  %v331 = vunpack.c.l.b16 %v63
  %v332 = vunpack.c.h.b16 %v63
  %v333 = vunpack.c.l.b16 %v64
  %v334 = vunpack.c.h.b16 %v64
  %v335 = vunpack.c.l.b16 %v65
  %v336 = vunpack.c.h.b16 %v65
  %v337 = vunpack.c.l.b16 %v66
  %v338 = vunpack.c.h.b16 %v66
  %v339 = vunpack.c.l.b16 %v67
  %v340 = vunpack.c.h.b16 %v67
  %v341 = vunpack.c.l.b16 %v68
  %v342 = vunpack.c.h.b16 %v68
  %v343 = vunpack.c.l.b16 %v69
  %v344 = vunpack.c.h.b16 %v69
  %v345 = vunpack.c.l.b16 %v70
  %v346 = vunpack.c.h.b16 %v70
  %v347 = vunpack.c.l.b16 %v71
  %v348 = vunpack.c.h.b16 %v71
  %v349 = vunpack.c.l.b16 %v72
  %v350 = vunpack.c.h.b16 %v72
  %v351 = vunpack.c.l.b16 %v73
  %v352 = vunpack.c.h.b16 %v73
  %v353 = vunpack.c.l.b16 %v74
  %v354 = vunpack.c.h.b16 %v74
  %v355 = vunpack.c.l.b16 %v75
  %v356 = vunpack.c.h.b16 %v75
  %v357 = vunpack.c.l.b16 %v76
  %v358 = vunpack.c.h.b16 %v76
  %v359 = vunpack.c.l.b16 %v77
  %v360 = vunpack.c.h.b16 %v77
  %v361 = vunpack.c.l.b16 %v78
  %v362 = vunpack.c.h.b16 %v78
  %v363 = vunpack.c.l.b16 %v79
  %v364 = vunpack.c.h.b16 %v79
  %v365 = vunpack.c.l.b16 %v80
  %v366 = vunpack.c.h.b16 %v80
  %v367 = vunpack.c.l.b16 %v81
  %v368 = vunpack.c.h.b16 %v81
  %v369 = vunpack.c.l.b16 %v82
  %v370 = vunpack.c.h.b16 %v82
  %v371 = vunpack.c.l.b16 %v83
  %v372 = vunpack.c.h.b16 %v83
  %v373 = vunpack.c.l.b16 %v84
  %v374 = vunpack.c.h.b16 %v84
  %v375 = vunpack.c.l.b16 %v85
  %v376 = vunpack.c.h.b16 %v85
  %v377 = vunpack.c.l.b16 %v86
  %v378 = vunpack.c.h.b16 %v86
  %v379 = vunpack.c.l.b16 %v87
  %v380 = vunpack.c.h.b16 %v87
  %v381 = vunpack.c.l.b16 %v88
  %v382 = vunpack.c.h.b16 %v88
  %v383 = vunpack.c.l.b16 %v89
  %v384 = vunpack.c.h.b16 %v89
  %v385 = vunpack.c.l.b16 %v90
  %v386 = vunpack.c.h.b16 %v90
  %v387 = vunpack.c.l.b16 %v91
  %v388 = vunpack.c.h.b16 %v91
  %v389 = vunpack.c.l.b16 %v92
  %v390 = vunpack.c.h.b16 %v92
  %v391 = vunpack.c.l.b16 %v93
  %v392 = vunpack.c.h.b16 %v93
  %v393 = vunpack.c.l.b16 %v94
  %v394 = vunpack.c.h.b16 %v94
  %v395 = vunpack.c.l.b16 %v95
  %v396 = vunpack.c.h.b16 %v95
  %v397 = vunpack.c.l.b16 %v96
  %v398 = vunpack.c.h.b16 %v96
  %v399 = vunpack.c.l.b16 %v97
  %v400 = vunpack.c.h.b16 %v97
  %v401 = vunpack.c.l.b16 %v98
  %v402 = vunpack.c.h.b16 %v98
  %v403 = vunpack.c.l.b16 %v99
  %v404 = vunpack.c.h.b16 %v99
  %v405 = vunpack.c.l.b16 %v100
  %v406 = vunpack.c.h.b16 %v100
  %v407 = vunpack.c.l.b16 %v101
  %v408 = vunpack.c.h.b16 %v101
  %v409 = vunpack.c.l.b16 %v102
  %v410 = vunpack.c.h.b16 %v102
  %v411 = vunpack.c.l.b16 %v103
  %v412 = vunpack.c.h.b16 %v103
  %v413 = vunpack.c.l.b16 %v104
  %v414 = vunpack.c.h.b16 %v104
  %v415 = vunpack.c.l.b16 %v105
  %v416 = vunpack.c.h.b16 %v105
  %v417 = vunpack.c.l.b16 %v106
  %v418 = vunpack.c.h.b16 %v106
  %v419 = vunpack.c.l.b16 %v107
  %v420 = vunpack.c.h.b16 %v107
  %v421 = vunpack.c.l.b16 %v108
  %v422 = vunpack.c.h.b16 %v108
  %v423 = vunpack.c.l.b16 %v109
  %v424 = vunpack.c.h.b16 %v109
  %v425 = vunpack.c.l.b16 %v110
  %v426 = vunpack.c.h.b16 %v110
  %v427 = vunpack.c.l.b16 %v111
  %v428 = vunpack.c.h.b16 %v111
  %v429 = vunpack.c.l.b16 %v112
  %v430 = vunpack.c.h.b16 %v112
  %v431 = vunpack.c.l.b16 %v113
  %v432 = vunpack.c.h.b16 %v113
  %v433 = vunpack.c.l.b16 %v114
  %v434 = vunpack.c.h.b16 %v114
  %v435 = vunpack.c.l.b16 %v115
  %v436 = vunpack.c.h.b16 %v115
  %v437 = vunpack.c.l.b16 %v116
  %v438 = vunpack.c.h.b16 %v116
  %v439 = vunpack.c.l.b16 %v117
  %v440 = vunpack.c.h.b16 %v117
  %v441 = vunpack.c.l.b16 %v118
  %v442 = vunpack.c.h.b16 %v118
  %v443 = vunpack.c.l.b16 %v119
  %v444 = vunpack.c.h.b16 %v119
  %v445 = vunpack.c.l.b16 %v120
  %v446 = vunpack.c.h.b16 %v120
  %v447 = vunpack.c.l.b16 %v121
  %v448 = vunpack.c.h.b16 %v121
  %v449 = vunpack.c.l.b16 %v122
  %v450 = vunpack.c.h.b16 %v122
  %v451 = vunpack.c.l.b16 %v123
  %v452 = vunpack.c.h.b16 %v123
  %v453 = vunpack.c.l.b16 %v124
  %v454 = vunpack.c.h.b16 %v124
  %v455 = vunpack.c.l.b16 %v125
  %v456 = vunpack.c.h.b16 %v125
  %v457 = vunpack.c.l.b16 %v126
  %v458 = vunpack.c.h.b16 %v126
  %v459 = vunpack.c.l.b16 %v127
  %v460 = vunpack.c.h.b16 %v127
  %v461 = vpack.c.b16 %v253, %v245
  %v462 = vpack.c.b16 %v254, %v246
  %v463 = vpack.c.b16 %v255, %v247
  %v464 = vpack.c.b16 %v256, %v248
  %v465 = vpack.c.b16 %v257, %v249
  %v466 = vpack.c.b16 %v258, %v250
  %v467 = vpack.c.b16 %v259, %v251
  %v468 = vpack.c.b16 %v260, %v252
  %v469 = vpack.c.b16 %v269, %v261
  %v470 = vpack.c.b16 %v270, %v262
  %v471 = vpack.c.b16 %v271, %v263
  %v472 = vpack.c.b16 %v272, %v264
  %v473 = vpack.c.b16 %v273, %v265
  %v474 = vpack.c.b16 %v274, %v266
  %v475 = vpack.c.b16 %v275, %v267
  %v476 = vpack.c.b16 %v276, %v268
  %v477 = vpack.c.b16 %v285, %v277
  %v478 = vpack.c.b16 %v286, %v278
  %v479 = vpack.c.b16 %v287, %v279
  %v480 = vpack.c.b16 %v288, %v280
  %v481 = vpack.c.b16 %v289, %v281
  %v482 = vpack.c.b16 %v290, %v282
  %v483 = vpack.c.b16 %v291, %v283
  %v484 = vpack.c.b16 %v292, %v284
  %v485 = vpack.c.b16 %v301, %v293
  %v486 = vpack.c.b16 %v302, %v294
  %v487 = vpack.c.b16 %v303, %v295
  %v488 = vpack.c.b16 %v304, %v296
  %v489 = vpack.c.b16 %v305, %v297
  %v490 = vpack.c.b16 %v306, %v298
  %v491 = vpack.c.b16 %v307, %v299
  %v492 = vpack.c.b16 %v308, %v300
  %v493 = vpack.c.b16 %v317, %v309
  %v494 = vpack.c.b16 %v318, %v310
  %v495 = vpack.c.b16 %v319, %v311
  %v496 = vpack.c.b16 %v320, %v312
  %v497 = vpack.c.b16 %v321, %v313
  %v498 = vpack.c.b16 %v322, %v314
  %v499 = vpack.c.b16 %v323, %v315
  %v500 = vpack.c.b16 %v324, %v316
  %v501 = vpack.c.b16 %v333, %v325
  %v502 = vpack.c.b16 %v334, %v326
  %v503 = vpack.c.b16 %v335, %v327
  %v504 = vpack.c.b16 %v336, %v328
  %v505 = vpack.c.b16 %v337, %v329
  %v506 = vpack.c.b16 %v338, %v330
  %v507 = vpack.c.b16 %v339, %v331
  %v508 = vpack.c.b16 %v340, %v332
  %v509 = vpack.c.b16 %v349, %v341
  %v510 = vpack.c.b16 %v350, %v342
  %v511 = vpack.c.b16 %v351, %v343
  %v512 = vpack.c.b16 %v352, %v344
  %v513 = vpack.c.b16 %v353, %v345
  %v514 = vpack.c.b16 %v354, %v346
  %v515 = vpack.c.b16 %v355, %v347
  %v516 = vpack.c.b16 %v356, %v348
  %v517 = vpack.c.b16 %v365, %v357
  %v518 = vpack.c.b16 %v366, %v358
  %v519 = vpack.c.b16 %v367, %v359
  %v520 = vpack.c.b16 %v368, %v360
  %v521 = vpack.c.b16 %v369, %v361
  %v522 = vpack.c.b16 %v370, %v362
  %v523 = vpack.c.b16 %v371, %v363
  %v524 = vpack.c.b16 %v372, %v364
  %v525 = vpack.c.b16 %v381, %v373
  %v526 = vpack.c.b16 %v382, %v374
  %v527 = vpack.c.b16 %v383, %v375
  %v528 = vpack.c.b16 %v384, %v376
  %v529 = vpack.c.b16 %v385, %v377
  %v530 = vpack.c.b16 %v386, %v378
  %v531 = vpack.c.b16 %v387, %v379
  %v532 = vpack.c.b16 %v388, %v380
  %v533 = vpack.c.b16 %v397, %v389
  %v534 = vpack.c.b16 %v398, %v390
  %v535 = vpack.c.b16 %v399, %v391
  %v536 = vpack.c.b16 %v400, %v392
  %v537 = vpack.c.b16 %v401, %v393
  %v538 = vpack.c.b16 %v402, %v394
  %v539 = vpack.c.b16 %v403, %v395
  %v540 = vpack.c.b16 %v404, %v396
  %v541 = vpack.c.b16 %v413, %v405
  %v542 = vpack.c.b16 %v414, %v406
  %v543 = vpack.c.b16 %v415, %v407
  %v544 = vpack.c.b16 %v416, %v408
  %v545 = vpack.c.b16 %v417, %v409
  %v546 = vpack.c.b16 %v418, %v410
  %v547 = vpack.c.b16 %v419, %v411
  %v548 = vpack.c.b16 %v420, %v412
  %v549 = vpack.c.b16 %v429, %v421
  %v550 = vpack.c.b16 %v430, %v422
  %v551 = vpack.c.b16 %v431, %v423
  %v552 = vpack.c.b16 %v432, %v424
  %v553 = vpack.c.b16 %v433, %v425
  %v554 = vpack.c.b16 %v434, %v426
  %v555 = vpack.c.b16 %v435, %v427
  %v556 = vpack.c.b16 %v436, %v428
  %v557 = vpack.c.b16 %v445, %v437
  %v558 = vpack.c.b16 %v446, %v438
  %v559 = vpack.c.b16 %v447, %v439
  %v560 = vpack.c.b16 %v448, %v440
  %v561 = vpack.c.b16 %v449, %v441
  %v562 = vpack.c.b16 %v450, %v442
  %v563 = vpack.c.b16 %v451, %v443
  %v564 = vpack.c.b16 %v452, %v444
  %v565 = vpack.c.b16 %v453, %v453
  %v566 = vpack.c.b16 %v454, %v454
  %v567 = vpack.c.b16 %v455, %v455
  %v568 = vpack.c.b16 %v456, %v456
  %v569 = vpack.c.b16 %v457, %v457
  %v570 = vpack.c.b16 %v458, %v458
  %v571 = vpack.c.b16 %v459, %v459
  %v572 = vpack.c.b16 %v460, %v460
  %vm677 = vcmask 719872
  %v679 = vsel %vm677, %v135, 0
  %vm681 = vcmask 1043456
  %v683 = vsel %vm681, %v565, 0
  %v686 = vsel %vm681, %v566, 0
  %v689 = vsel %vm681, %v567, 0
  %v692 = vsel %vm681, %v568, 0
  %v695 = vsel %vm681, %v569, 0
  %v698 = vsel %vm681, %v570, 0
  %v701 = vsel %vm681, %v571, 0
  %v704 = vsel %vm681, %v572, 0
  %706 = vmatprep.subr.bf16.mxu0 %v462
  %707 = vmatpush1.bf16.msra.mxu0 %v461
  %708 = vmatprep.subr.bf16.mxu0 %v470
  %709 = vmatpush1.bf16.msra.mxu0 %v469
  %710 = vmatprep.subr.bf16.mxu0 %v478
  %711 = vmatpush1.bf16.msra.mxu0 %v477
  %712 = vmatprep.subr.bf16.mxu0 %v486
  %713 = vmatpush1.bf16.msra.mxu0 %v485
  %714 = vmatprep.subr.bf16.mxu0 %v494
  %715 = vmatpush1.bf16.msra.mxu0 %v493
  %716 = vmatprep.subr.bf16.mxu0 %v502
  %717 = vmatpush1.bf16.msra.mxu0 %v501
  %718 = vmatprep.subr.bf16.mxu0 %v510
  %719 = vmatpush1.bf16.msra.mxu0 %v509
  %720 = vmatprep.subr.bf16.mxu0 %v518
  %721 = vmatpush1.bf16.msra.mxu0 %v517
  %722 = vmatprep.subr.bf16.mxu0 %v526
  %723 = vmatpush1.bf16.msra.mxu0 %v525
  %724 = vmatprep.subr.bf16.mxu0 %v534
  %725 = vmatpush1.bf16.msra.mxu0 %v533
  %726 = vmatprep.subr.bf16.mxu0 %v542
  %727 = vmatpush1.bf16.msra.mxu0 %v541
  %728 = vmatprep.subr.bf16.mxu0 %v550
  %729 = vmatpush1.bf16.msra.mxu0 %v549
  %730 = vmatprep.subr.bf16.mxu0 %v558
  %731 = vmatpush1.bf16.msra.mxu0 %v557
  %732 = vmatprep.subr.bf16.mxu0 %v686
  %733 = vmatpush1.bf16.msra.mxu0 %v683
  %734 = vmatprep.subr.bf16.mxu0 0
  %735 = vmatpush1.bf16.msra.mxu0 0
  %736 = vmatprep.subr.bf16.mxu0 0
  %737 = vmatpush1.bf16.msra.mxu0 0
  %738 = vmatprep.mubr.bf16.mxu0 %v679
  %739 = vmatmul.mubr.bf16.gmra.mrb[0].mxu0 %v134
  %v740 = vpop.f32.mrb[0].mxu0
  %v741 = vadd.f32 0.0, %v740
  %v742 = vpop.f32.mrb[0].mxu0
  %v743 = vadd.f32 0.0, %v742
  %v744 = vpop.f32.mrb[0].mxu0
  %v745 = vadd.f32 0.0, %v744
  %v746 = vpop.f32.mrb[0].mxu0
  %v747 = vadd.f32 0.0, %v746
  %748 = vdwg.mxu0
  %749 = vmatprep.subr.bf16.mxu0 %v464
  %750 = vmatpush1.bf16.msra.mxu0 %v463
  %751 = vmatprep.subr.bf16.mxu0 %v472
  %752 = vmatpush1.bf16.msra.mxu0 %v471
  %753 = vmatprep.subr.bf16.mxu0 %v480
  %754 = vmatpush1.bf16.msra.mxu0 %v479
  %755 = vmatprep.subr.bf16.mxu0 %v488
  %756 = vmatpush1.bf16.msra.mxu0 %v487
  %757 = vmatprep.subr.bf16.mxu0 %v496
  %758 = vmatpush1.bf16.msra.mxu0 %v495
  %759 = vmatprep.subr.bf16.mxu0 %v504
  %760 = vmatpush1.bf16.msra.mxu0 %v503
  %761 = vmatprep.subr.bf16.mxu0 %v512
  %762 = vmatpush1.bf16.msra.mxu0 %v511
  %763 = vmatprep.subr.bf16.mxu0 %v520
  %764 = vmatpush1.bf16.msra.mxu0 %v519
  %765 = vmatprep.subr.bf16.mxu0 %v528
  %766 = vmatpush1.bf16.msra.mxu0 %v527
  %767 = vmatprep.subr.bf16.mxu0 %v536
  %768 = vmatpush1.bf16.msra.mxu0 %v535
  %769 = vmatprep.subr.bf16.mxu0 %v544
  %770 = vmatpush1.bf16.msra.mxu0 %v543
  %771 = vmatprep.subr.bf16.mxu0 %v552
  %772 = vmatpush1.bf16.msra.mxu0 %v551
  %773 = vmatprep.subr.bf16.mxu0 %v560
  %774 = vmatpush1.bf16.msra.mxu0 %v559
  %775 = vmatprep.subr.bf16.mxu0 %v692
  %776 = vmatpush1.bf16.msra.mxu0 %v689
  %777 = vmatprep.subr.bf16.mxu0 0
  %778 = vmatpush1.bf16.msra.mxu0 0
  %779 = vmatprep.subr.bf16.mxu0 0
  %780 = vmatpush1.bf16.msra.mxu0 0
  %781 = vmatprep.mubr.bf16.mxu0 %v679
  %782 = vmatmul.mubr.bf16.gmra.mrb[0].mxu0 %v134
  %v783 = vpop.f32.mrb[0].mxu0
  %v784 = vadd.f32 0.0, %v783
  %v785 = vpop.f32.mrb[0].mxu0
  %v786 = vadd.f32 0.0, %v785
  %v787 = vpop.f32.mrb[0].mxu0
  %v788 = vadd.f32 0.0, %v787
  %v789 = vpop.f32.mrb[0].mxu0
  %v790 = vadd.f32 0.0, %v789
  %791 = vdwg.mxu0
  %792 = vmatprep.subr.bf16.mxu0 %v466
  %793 = vmatpush1.bf16.msra.mxu0 %v465
  %794 = vmatprep.subr.bf16.mxu0 %v474
  %795 = vmatpush1.bf16.msra.mxu0 %v473
  %796 = vmatprep.subr.bf16.mxu0 %v482
  %797 = vmatpush1.bf16.msra.mxu0 %v481
  %798 = vmatprep.subr.bf16.mxu0 %v490
  %799 = vmatpush1.bf16.msra.mxu0 %v489
  %800 = vmatprep.subr.bf16.mxu0 %v498
  %801 = vmatpush1.bf16.msra.mxu0 %v497
  %802 = vmatprep.subr.bf16.mxu0 %v506
  %803 = vmatpush1.bf16.msra.mxu0 %v505
  %804 = vmatprep.subr.bf16.mxu0 %v514
  %805 = vmatpush1.bf16.msra.mxu0 %v513
  %806 = vmatprep.subr.bf16.mxu0 %v522
  %807 = vmatpush1.bf16.msra.mxu0 %v521
  %808 = vmatprep.subr.bf16.mxu0 %v530
  %809 = vmatpush1.bf16.msra.mxu0 %v529
  %810 = vmatprep.subr.bf16.mxu0 %v538
  %811 = vmatpush1.bf16.msra.mxu0 %v537
  %812 = vmatprep.subr.bf16.mxu0 %v546
  %813 = vmatpush1.bf16.msra.mxu0 %v545
  %814 = vmatprep.subr.bf16.mxu0 %v554
  %815 = vmatpush1.bf16.msra.mxu0 %v553
  %816 = vmatprep.subr.bf16.mxu0 %v562
  %817 = vmatpush1.bf16.msra.mxu0 %v561
  %818 = vmatprep.subr.bf16.mxu0 %v698
  %819 = vmatpush1.bf16.msra.mxu0 %v695
  %820 = vmatprep.subr.bf16.mxu0 0
  %821 = vmatpush1.bf16.msra.mxu0 0
  %822 = vmatprep.subr.bf16.mxu0 0
  %823 = vmatpush1.bf16.msra.mxu0 0
  %824 = vmatprep.mubr.bf16.mxu0 %v679
  %825 = vmatmul.mubr.bf16.gmra.mrb[0].mxu0 %v134
  %v826 = vpop.f32.mrb[0].mxu0
  %v827 = vadd.f32 0.0, %v826
  %v828 = vpop.f32.mrb[0].mxu0
  %v829 = vadd.f32 0.0, %v828
  %v830 = vpop.f32.mrb[0].mxu0
  %v831 = vadd.f32 0.0, %v830
  %v832 = vpop.f32.mrb[0].mxu0
  %v833 = vadd.f32 0.0, %v832
  %834 = vdwg.mxu0
  %835 = vmatprep.subr.bf16.mxu0 %v468
  %836 = vmatpush1.bf16.msra.mxu0 %v467
  %837 = vmatprep.subr.bf16.mxu0 %v476
  %838 = vmatpush1.bf16.msra.mxu0 %v475
  %839 = vmatprep.subr.bf16.mxu0 %v484
  %840 = vmatpush1.bf16.msra.mxu0 %v483
  %841 = vmatprep.subr.bf16.mxu0 %v492
  %842 = vmatpush1.bf16.msra.mxu0 %v491
  %843 = vmatprep.subr.bf16.mxu0 %v500
  %844 = vmatpush1.bf16.msra.mxu0 %v499
  %845 = vmatprep.subr.bf16.mxu0 %v508
  %846 = vmatpush1.bf16.msra.mxu0 %v507
  %847 = vmatprep.subr.bf16.mxu0 %v516
  %848 = vmatpush1.bf16.msra.mxu0 %v515
  %849 = vmatprep.subr.bf16.mxu0 %v524
  %850 = vmatpush1.bf16.msra.mxu0 %v523
  %851 = vmatprep.subr.bf16.mxu0 %v532
  %852 = vmatpush1.bf16.msra.mxu0 %v531
  %853 = vmatprep.subr.bf16.mxu0 %v540
  %854 = vmatpush1.bf16.msra.mxu0 %v539
  %855 = vmatprep.subr.bf16.mxu0 %v548
  %856 = vmatpush1.bf16.msra.mxu0 %v547
  %857 = vmatprep.subr.bf16.mxu0 %v556
  %858 = vmatpush1.bf16.msra.mxu0 %v555
  %859 = vmatprep.subr.bf16.mxu0 %v564
  %860 = vmatpush1.bf16.msra.mxu0 %v563
  %861 = vmatprep.subr.bf16.mxu0 %v704
  %862 = vmatpush1.bf16.msra.mxu0 %v701
  %863 = vmatprep.subr.bf16.mxu0 0
  %864 = vmatpush1.bf16.msra.mxu0 0
  %865 = vmatprep.subr.bf16.mxu0 0
  %866 = vmatpush1.bf16.msra.mxu0 0
  %867 = vmatprep.mubr.bf16.mxu0 %v679
  %868 = vmatmul.mubr.bf16.gmra.mrb[0].mxu0 %v134
  %v869 = vpop.f32.mrb[0].mxu0
  %v870 = vadd.f32 0.0, %v869
  %v871 = vpop.f32.mrb[0].mxu0
  %v872 = vadd.f32 0.0, %v871
  %v873 = vpop.f32.mrb[0].mxu0
  %v874 = vadd.f32 0.0, %v873
  %v875 = vpop.f32.mrb[0].mxu0
  %v876 = vadd.f32 0.0, %v875
  %877 = vdwg.mxu0
  %v878 = vadd.f32 %v741, %v743
  %v879 = vadd.f32 %v878, %v784
  %v880 = vadd.f32 %v879, %v786
  %v881 = vadd.f32 %v880, %v827
  %v882 = vadd.f32 %v881, %v829
  %v883 = vadd.f32 %v882, %v870
  %v884 = vadd.f32 %v883, %v872
  %885 = vadd.xlane.f32.xlu0 %v884
  %v886 = vpop.xlane.xlu0 %885
  %v887 = vadd.f32 %v745, %v747
  %v888 = vadd.f32 %v887, %v788
  %v889 = vadd.f32 %v888, %v790
  %v890 = vadd.f32 %v889, %v831
  %v891 = vadd.f32 %v890, %v833
  %v892 = vadd.f32 %v891, %v874
  %v893 = vadd.f32 %v892, %v876
  %894 = vadd.xlane.f32.xlu0 %v893
  %v895 = vpop.xlane.xlu0 %894
  %v896 = vrcp.pop 1024.0
  %v897 = vmul.f32 %v886, %v896
  %v898 = vmul.f32 %v895, %v896
  %v899 = vsub.f32 %v741, %v897
  %v900 = vsub.f32 %v743, %v897
  %v901 = vsub.f32 %v784, %v897
  %v902 = vsub.f32 %v786, %v897
  %v903 = vsub.f32 %v827, %v897
  %v904 = vsub.f32 %v829, %v897
  %v905 = vsub.f32 %v870, %v897
  %v906 = vsub.f32 %v872, %v897
  %v907 = vsub.f32 %v745, %v898
  %v908 = vsub.f32 %v747, %v898
  %v909 = vsub.f32 %v788, %v898
  %v910 = vsub.f32 %v790, %v898
  %v911 = vsub.f32 %v831, %v898
  %v912 = vsub.f32 %v833, %v898
  %v913 = vsub.f32 %v874, %v898
  %v914 = vsub.f32 %v876, %v898
  %v915 = vmul.f32 %v899, %v899
  %v916 = vmul.f32 %v900, %v900
  %v917 = vmul.f32 %v901, %v901
  %v918 = vmul.f32 %v902, %v902
  %v919 = vmul.f32 %v903, %v903
  %v920 = vmul.f32 %v904, %v904
  %v921 = vmul.f32 %v905, %v905
  %v922 = vmul.f32 %v906, %v906
  %v923 = vmul.f32 %v907, %v907
  %v924 = vmul.f32 %v908, %v908
  %v925 = vmul.f32 %v909, %v909
  %v926 = vmul.f32 %v910, %v910
  %v927 = vmul.f32 %v911, %v911
  %v928 = vmul.f32 %v912, %v912
  %v929 = vmul.f32 %v913, %v913
  %v930 = vmul.f32 %v914, %v914
  %v931 = vadd.f32 %v915, %v916
  %v932 = vadd.f32 %v931, %v917
  %v933 = vadd.f32 %v932, %v918
  %v934 = vadd.f32 %v933, %v919
  %v935 = vadd.f32 %v934, %v920
  %v936 = vadd.f32 %v935, %v921
  %v937 = vadd.f32 %v936, %v922
  %938 = vadd.xlane.f32.xlu0 %v937
  %v939 = vpop.xlane.xlu0 %938
  %v940 = vadd.f32 %v923, %v924
  %v941 = vadd.f32 %v940, %v925
  %v942 = vadd.f32 %v941, %v926
  %v943 = vadd.f32 %v942, %v927
  %v944 = vadd.f32 %v943, %v928
  %v945 = vadd.f32 %v944, %v929
  %v946 = vadd.f32 %v945, %v930
  %947 = vadd.xlane.f32.xlu0 %v946
  %v948 = vpop.xlane.xlu0 %947
  %v949 = vmul.f32 %v939, %v896
  %v950 = vmul.f32 %v948, %v896
  %v951 = vld [vmem:[%s2] sm:$0xff]
  %v952 = vld [vmem:[%s2 + $0x8] sm:$0xff]
  %v953 = vadd.f32 %v949, 1e-05
  %v954 = vadd.f32 %v950, 1e-05
  %v955 = vrsqrt.pop %v953
  %v956 = vrsqrt.pop %v954
  %v957 = vmul.f32 %v951, %v955
  %v958 = vmul.f32 %v952, %v956
  %960 = vset.pattern.permute.xlu0 0
  %961 = vperm.xlu0 %960, %v957
  %v962 = vpop.permute.xlu0 %961
  %965 = vset.pattern.permute.xlu0 0
  %966 = vperm.xlu0 %965, %v958
  %v967 = vpop.permute.xlu0 %966
  %v969 = vmul.f32 %v899, %v962
  %v970 = vmul.f32 %v900, %v962
  %v971 = vmul.f32 %v901, %v962
  %v972 = vmul.f32 %v902, %v962
  %v973 = vmul.f32 %v903, %v962
  %v974 = vmul.f32 %v904, %v962
  %v975 = vmul.f32 %v905, %v962
  %v976 = vmul.f32 %v906, %v962
  %v977 = vmul.f32 %v907, %v967
  %v978 = vmul.f32 %v908, %v967
  %v979 = vmul.f32 %v909, %v967
  %v980 = vmul.f32 %v910, %v967
  %v981 = vmul.f32 %v911, %v967
  %v982 = vmul.f32 %v912, %v967
  %v983 = vmul.f32 %v913, %v967
  %v984 = vmul.f32 %v914, %v967
  %v985 = vld [vmem:[%s3] sm:$0xff]
  %v986 = vld [vmem:[%s3 + $0x8] sm:$0xff]
  %988 = vset.pattern.permute.xlu0 0
  %989 = vperm.xlu0 %988, %v985
  %v990 = vpop.permute.xlu0 %989
  %993 = vset.pattern.permute.xlu0 0
  %994 = vperm.xlu0 %993, %v986
  %v995 = vpop.permute.xlu0 %994
  %v997 = vadd.f32 %v969, %v990
  %v998 = vadd.f32 %v970, %v990
  %v999 = vadd.f32 %v971, %v990
  %v1000 = vadd.f32 %v972, %v990
  %v1001 = vadd.f32 %v973, %v990
  %v1002 = vadd.f32 %v974, %v990
  %v1003 = vadd.f32 %v975, %v990
  %v1004 = vadd.f32 %v976, %v990
  %v1005 = vadd.f32 %v977, %v995
  %v1006 = vadd.f32 %v978, %v995
  %v1007 = vadd.f32 %v979, %v995
  %v1008 = vadd.f32 %v980, %v995
  %v1009 = vadd.f32 %v981, %v995
  %v1010 = vadd.f32 %v982, %v995
  %v1011 = vadd.f32 %v983, %v995
  %v1012 = vadd.f32 %v984, %v995
  %v1013 = vmax.f32 %v997, 0.0
  %v1014 = vmax.f32 %v998, 0.0
  %v1015 = vmax.f32 %v999, 0.0
  %v1016 = vmax.f32 %v1000, 0.0
  %v1017 = vmax.f32 %v1001, 0.0
  %v1018 = vmax.f32 %v1002, 0.0
  %v1019 = vmax.f32 %v1003, 0.0
  %v1020 = vmax.f32 %v1004, 0.0
  %v1021 = vmax.f32 %v1005, 0.0
  %v1022 = vmax.f32 %v1006, 0.0
  %v1023 = vmax.f32 %v1007, 0.0
  %v1024 = vmax.f32 %v1008, 0.0
  %v1025 = vmax.f32 %v1009, 0.0
  %v1026 = vmax.f32 %v1010, 0.0
  %v1027 = vmax.f32 %v1011, 0.0
  %v1028 = vmax.f32 %v1012, 0.0
  %v1029 = vpack.c.bf16 %v1021, %v1013
  %v1030 = vpack.c.bf16 %v1022, %v1014
  %v1031 = vpack.c.bf16 %v1023, %v1015
  %v1032 = vpack.c.bf16 %v1024, %v1016
  %v1033 = vpack.c.bf16 %v1025, %v1017
  %v1034 = vpack.c.bf16 %v1026, %v1018
  %v1035 = vpack.c.bf16 %v1027, %v1019
  %v1036 = vpack.c.bf16 %v1028, %v1020
  %v1045 = vunpack.c.l.b16 %v1029
  %v1046 = vunpack.c.l.b16 %v1030
  %v1047 = vunpack.c.l.b16 %v1031
  %v1048 = vunpack.c.l.b16 %v1032
  %v1049 = vunpack.c.l.b16 %v1033
  %v1050 = vunpack.c.l.b16 %v1034
  %v1051 = vunpack.c.l.b16 %v1035
  %v1052 = vunpack.c.l.b16 %v1036
  %v1053 = vunpack.c.h.b16 %v1029
  %v1054 = vunpack.c.h.b16 %v1030
  %v1055 = vunpack.c.h.b16 %v1031
  %v1056 = vunpack.c.h.b16 %v1032
  %v1057 = vunpack.c.h.b16 %v1033
  %v1058 = vunpack.c.h.b16 %v1034
  %v1059 = vunpack.c.h.b16 %v1035
  %v1060 = vunpack.c.h.b16 %v1036
  %v1061 = vpack.c.b16 %v1046, %v1045
  %v1062 = vpack.c.b16 %v1048, %v1047
  %v1063 = vpack.c.b16 %v1050, %v1049
  %v1064 = vpack.c.b16 %v1052, %v1051
  %v1065 = vpack.c.b16 %v1054, %v1053
  %v1066 = vpack.c.b16 %v1056, %v1055
  %v1067 = vpack.c.b16 %v1058, %v1057
  %v1068 = vpack.c.b16 %v1060, %v1059
  %1077 = vst [vmem:[%s4] sm:$0xff] %v1061
  %1078 = vst [vmem:[%s4 + $0x8] sm:$0xff] %v1062
  %1079 = vst [vmem:[%s4 + $0x10] sm:$0xff] %v1063
  %1080 = vst [vmem:[%s4 + $0x18] sm:$0xff] %v1064
  %1081 = vst [vmem:[%s4 + $0x20] sm:$0xff] %v1065
  %1082 = vst [vmem:[%s4 + $0x28] sm:$0xff] %v1066
  %1083 = vst [vmem:[%s4 + $0x30] sm:$0xff] %v1067
  %1084 = vst [vmem:[%s4 + $0x38] sm:$0xff] %v1068
  // Predicated region
  $region18: #{encoder3d_forward.5} parent=0 // pred_check
    _
  $region19: #{encoder3d_forward.5} parent=0 // pred_check_branch
    %1086 = sbr.rel (0) target = $region21
  $region20: #{encoder3d_forward.5} parent=0 // pred_region
    _
  $region21: #{encoder3d_forward.5} parent=0 // pred_fallthru
    _
  // Predicated region
  $region22: #{encoder3d_forward.5} parent=0 // pred_check
    _
  $region23: #{encoder3d_forward.5} parent=0 // pred_check_branch
    %1088 = sbr.rel (0) target = $region25
  $region24: #{encoder3d_forward.5} parent=0 // pred_region
    _
  $region25: #{encoder3d_forward.5} parent=0 // pred_fallthru
    _

// kernel: encoder3d_forward.6
$region0: #{encoder3d_forward.6}
  #allocation0 [shape = 'u32[]', space=smem, size = 0x4, offset = 0x4, fixed_abs, tag = 'smem constant byte address 0x4 - core index']
  #allocation1 [shape = 'u32[144,128]{1,0:T(1,128)}', space=vmem, size = 0x12000, scoped, tag = 'internal scratch']
  %s0 = inlined_call_operand.vmem [shape: bf16[1024,128], index: 0, kind: input, shape index: {}]
  %s1 = inlined_call_operand.vmem [shape: bf16[32,1024], index: 1, kind: input, shape index: {}]
  %s2 = inlined_call_operand.vmem [shape: f32[32,1], index: 2, kind: input, shape index: {}]
  %s3 = inlined_call_operand.vmem [shape: f32[32,1], index: 3, kind: input, shape index: {}]
  %s4 = inlined_call_operand.vmem [shape: bf16[32,128], index: 4, kind: output, shape index: {}]
  %s5 = sld [smem:[#allocation0]]
  $region26: #{encoder3d_forward.6} parent=0
    _
  %s7 = ssub.s32 1, %s5
  %s8 = scalar_select 0, %s7, %s5
  // Predicated region
  $region2: #{encoder3d_forward.6} parent=0 // pred_check
    _
  $region3: #{encoder3d_forward.6} parent=0 // pred_check_branch
    %10 = sbr.rel (0) target = $region5
  $region4: #{encoder3d_forward.6} parent=0 // pred_region
    _
  $region5: #{encoder3d_forward.6} parent=0 // pred_fallthru
    _
  // Predicated region
  $region6: #{encoder3d_forward.6} parent=0 // pred_check
    _
  $region7: #{encoder3d_forward.6} parent=0 // pred_check_branch
    %12 = sbr.rel (0) target = $region9
  $region8: #{encoder3d_forward.6} parent=0 // pred_region
    _
  $region9: #{encoder3d_forward.6} parent=0 // pred_fallthru
    _
  // Predicated region
  $region10: #{encoder3d_forward.6} parent=0 // pred_check
    _
  $region11: #{encoder3d_forward.6} parent=0 // pred_check_branch
    %14 = sbr.rel (0) target = $region13
  $region12: #{encoder3d_forward.6} parent=0 // pred_region
    _
  $region13: #{encoder3d_forward.6} parent=0 // pred_fallthru
    _
  // Predicated region
  $region14: #{encoder3d_forward.6} parent=0 // pred_check
    _
  $region15: #{encoder3d_forward.6} parent=0 // pred_check_branch
    %16 = sbr.rel (0) target = $region17
  $region16: #{encoder3d_forward.6} parent=0 // pred_region
    _
  $region17: #{encoder3d_forward.6} parent=0 // pred_fallthru
    _
  %v18 = vld [vmem:[%s1] sm:$0xff]
  %v19 = vld [vmem:[%s1 + $0x8] sm:$0xff]
  %v20 = vld [vmem:[%s1 + $0x10] sm:$0xff]
  %v21 = vld [vmem:[%s1 + $0x18] sm:$0xff]
  %v22 = vld [vmem:[%s1 + $0x20] sm:$0xff]
  %v23 = vld [vmem:[%s1 + $0x28] sm:$0xff]
  %v24 = vld [vmem:[%s1 + $0x30] sm:$0xff]
  %v25 = vld [vmem:[%s1 + $0x38] sm:$0xff]
  %v26 = vld [vmem:[%s1 + $0x40] sm:$0xff]
  %v27 = vld [vmem:[%s1 + $0x48] sm:$0xff]
  %v28 = vld [vmem:[%s1 + $0x50] sm:$0xff]
  %v29 = vld [vmem:[%s1 + $0x58] sm:$0xff]
  %v30 = vld [vmem:[%s1 + $0x60] sm:$0xff]
  %v31 = vld [vmem:[%s1 + $0x68] sm:$0xff]
  %v32 = vld [vmem:[%s1 + $0x70] sm:$0xff]
  %v33 = vld [vmem:[%s1 + $0x78] sm:$0xff]
  %v34 = vld [vmem:[%s0] sm:$0xf]
  %v35 = vld [vmem:[%s0 + $0x4] sm:$0xf]
  %v36 = vld [vmem:[%s0 + $0x8] sm:$0xf]
  %v37 = vld [vmem:[%s0 + $0xc] sm:$0xf]
  %v38 = vld [vmem:[%s0 + $0x10] sm:$0xf]
  %v39 = vld [vmem:[%s0 + $0x14] sm:$0xf]
  %v40 = vld [vmem:[%s0 + $0x18] sm:$0xf]
  %v41 = vld [vmem:[%s0 + $0x1c] sm:$0xf]
  %v42 = vld [vmem:[%s0 + $0x20] sm:$0xf]
  %v43 = vld [vmem:[%s0 + $0x24] sm:$0xf]
  %v44 = vld [vmem:[%s0 + $0x28] sm:$0xf]
  %v45 = vld [vmem:[%s0 + $0x2c] sm:$0xf]
  %v46 = vld [vmem:[%s0 + $0x30] sm:$0xf]
  %v47 = vld [vmem:[%s0 + $0x34] sm:$0xf]
  %v48 = vld [vmem:[%s0 + $0x38] sm:$0xf]
  %v49 = vld [vmem:[%s0 + $0x3c] sm:$0xf]
  %v50 = vld [vmem:[%s0 + $0x40] sm:$0xf]
  %v51 = vld [vmem:[%s0 + $0x44] sm:$0xf]
  %v52 = vld [vmem:[%s0 + $0x48] sm:$0xf]
  %v53 = vld [vmem:[%s0 + $0x4c] sm:$0xf]
  %v54 = vld [vmem:[%s0 + $0x50] sm:$0xf]
  %v55 = vld [vmem:[%s0 + $0x54] sm:$0xf]
  %v56 = vld [vmem:[%s0 + $0x58] sm:$0xf]
  %v57 = vld [vmem:[%s0 + $0x5c] sm:$0xf]
  %v58 = vld [vmem:[%s0 + $0x60] sm:$0xf]
  %v59 = vld [vmem:[%s0 + $0x64] sm:$0xf]
  %v60 = vld [vmem:[%s0 + $0x68] sm:$0xf]
  %v61 = vld [vmem:[%s0 + $0x6c] sm:$0xf]
  %v62 = vld [vmem:[%s0 + $0x70] sm:$0xf]
  %v63 = vld [vmem:[%s0 + $0x74] sm:$0xf]
  %v64 = vld [vmem:[%s0 + $0x78] sm:$0xf]
  %v65 = vld [vmem:[%s0 + $0x7c] sm:$0xf]
  %v66 = vld [vmem:[%s0 + $0x80] sm:$0xf]
  %v67 = vld [vmem:[%s0 + $0x84] sm:$0xf]
  %v68 = vld [vmem:[%s0 + $0x88] sm:$0xf]
  %v69 = vld [vmem:[%s0 + $0x8c] sm:$0xf]
  %v70 = vld [vmem:[%s0 + $0x90] sm:$0xf]
  %v71 = vld [vmem:[%s0 + $0x94] sm:$0xf]
  %v72 = vld [vmem:[%s0 + $0x98] sm:$0xf]
  %v73 = vld [vmem:[%s0 + $0x9c] sm:$0xf]
  %v74 = vld [vmem:[%s0 + $0xa0] sm:$0xf]
  %v75 = vld [vmem:[%s0 + $0xa4] sm:$0xf]
  %v76 = vld [vmem:[%s0 + $0xa8] sm:$0xf]
  %v77 = vld [vmem:[%s0 + $0xac] sm:$0xf]
  %v78 = vld [vmem:[%s0 + $0xb0] sm:$0xf]
  %v79 = vld [vmem:[%s0 + $0xb4] sm:$0xf]
  %v80 = vld [vmem:[%s0 + $0xb8] sm:$0xf]
  %v81 = vld [vmem:[%s0 + $0xbc] sm:$0xf]
  %v82 = vld [vmem:[%s0 + $0xc0] sm:$0xf]
  %v83 = vld [vmem:[%s0 + $0xc4] sm:$0xf]
  %v84 = vld [vmem:[%s0 + $0xc8] sm:$0xf]
  %v85 = vld [vmem:[%s0 + $0xcc] sm:$0xf]
  %v86 = vld [vmem:[%s0 + $0xd0] sm:$0xf]
  %v87 = vld [vmem:[%s0 + $0xd4] sm:$0xf]
  %v88 = vld [vmem:[%s0 + $0xd8] sm:$0xf]
  %v89 = vld [vmem:[%s0 + $0xdc] sm:$0xf]
  %v90 = vld [vmem:[%s0 + $0xe0] sm:$0xf]
  %v91 = vld [vmem:[%s0 + $0xe4] sm:$0xf]
  %v92 = vld [vmem:[%s0 + $0xe8] sm:$0xf]
  %v93 = vld [vmem:[%s0 + $0xec] sm:$0xf]
  %v94 = vld [vmem:[%s0 + $0xf0] sm:$0xf]
  %v95 = vld [vmem:[%s0 + $0xf4] sm:$0xf]
  %v96 = vld [vmem:[%s0 + $0xf8] sm:$0xf]
  %v97 = vld [vmem:[%s0 + $0xfc] sm:$0xf]
  %v98 = vld [vmem:[%s0 + $0x100] sm:$0xf]
  %v99 = vld [vmem:[%s0 + $0x104] sm:$0xf]
  %v100 = vld [vmem:[%s0 + $0x108] sm:$0xf]
  %v101 = vld [vmem:[%s0 + $0x10c] sm:$0xf]
  %v102 = vld [vmem:[%s0 + $0x110] sm:$0xf]
  %v103 = vld [vmem:[%s0 + $0x114] sm:$0xf]
  %v104 = vld [vmem:[%s0 + $0x118] sm:$0xf]
  %v105 = vld [vmem:[%s0 + $0x11c] sm:$0xf]
  %v106 = vld [vmem:[%s0 + $0x120] sm:$0xf]
  %v107 = vld [vmem:[%s0 + $0x124] sm:$0xf]
  %v108 = vld [vmem:[%s0 + $0x128] sm:$0xf]
  %v109 = vld [vmem:[%s0 + $0x12c] sm:$0xf]
  %v110 = vld [vmem:[%s0 + $0x130] sm:$0xf]
  %v111 = vld [vmem:[%s0 + $0x134] sm:$0xf]
  %v112 = vld [vmem:[%s0 + $0x138] sm:$0xf]
  %v113 = vld [vmem:[%s0 + $0x13c] sm:$0xf]
  %v114 = vld [vmem:[%s0 + $0x140] sm:$0xf]
  %v115 = vld [vmem:[%s0 + $0x144] sm:$0xf]
  %v116 = vld [vmem:[%s0 + $0x148] sm:$0xf]
  %v117 = vld [vmem:[%s0 + $0x14c] sm:$0xf]
  %v118 = vld [vmem:[%s0 + $0x150] sm:$0xf]
  %v119 = vld [vmem:[%s0 + $0x154] sm:$0xf]
  %v120 = vld [vmem:[%s0 + $0x158] sm:$0xf]
  %v121 = vld [vmem:[%s0 + $0x15c] sm:$0xf]
  %v122 = vld [vmem:[%s0 + $0x160] sm:$0xf]
  %v123 = vld [vmem:[%s0 + $0x164] sm:$0xf]
  %v124 = vld [vmem:[%s0 + $0x168] sm:$0xf]
  %v125 = vld [vmem:[%s0 + $0x16c] sm:$0xf]
  %v126 = vld [vmem:[%s0 + $0x170] sm:$0xf]
  %v127 = vld [vmem:[%s0 + $0x174] sm:$0xf]
  %v128 = vld [vmem:[%s0 + $0x178] sm:$0xf]
  %v129 = vld [vmem:[%s0 + $0x17c] sm:$0xf]
  %v130 = vld [vmem:[%s0 + $0x180] sm:$0xf]
  %v131 = vld [vmem:[%s0 + $0x184] sm:$0xf]
  %v132 = vld [vmem:[%s0 + $0x188] sm:$0xf]
  %v133 = vld [vmem:[%s0 + $0x18c] sm:$0xf]
  %v134 = vld [vmem:[%s0 + $0x190] sm:$0xf]
  %v135 = vld [vmem:[%s0 + $0x194] sm:$0xf]
  %v136 = vld [vmem:[%s0 + $0x198] sm:$0xf]
  %v137 = vld [vmem:[%s0 + $0x19c] sm:$0xf]
  %v138 = vld [vmem:[%s0 + $0x1a0] sm:$0xf]
  %v139 = vld [vmem:[%s0 + $0x1a4] sm:$0xf]
  %v140 = vld [vmem:[%s0 + $0x1a8] sm:$0xf]
  %v141 = vld [vmem:[%s0 + $0x1ac] sm:$0xf]
  %v142 = vld [vmem:[%s0 + $0x1b0] sm:$0xf]
  %v143 = vld [vmem:[%s0 + $0x1b4] sm:$0xf]
  %v144 = vld [vmem:[%s0 + $0x1b8] sm:$0xf]
  %v145 = vld [vmem:[%s0 + $0x1bc] sm:$0xf]
  %v146 = vld [vmem:[%s0 + $0x1c0] sm:$0xf]
  %v147 = vld [vmem:[%s0 + $0x1c4] sm:$0xf]
  %v148 = vld [vmem:[%s0 + $0x1c8] sm:$0xf]
  %v149 = vld [vmem:[%s0 + $0x1cc] sm:$0xf]
  %v150 = vld [vmem:[%s0 + $0x1d0] sm:$0xf]
  %v151 = vld [vmem:[%s0 + $0x1d4] sm:$0xf]
  %v152 = vld [vmem:[%s0 + $0x1d8] sm:$0xf]
  %v153 = vld [vmem:[%s0 + $0x1dc] sm:$0xf]
  %v154 = vld [vmem:[%s0 + $0x1e0] sm:$0xf]
  %v155 = vld [vmem:[%s0 + $0x1e4] sm:$0xf]
  %v156 = vld [vmem:[%s0 + $0x1e8] sm:$0xf]
  %v157 = vld [vmem:[%s0 + $0x1ec] sm:$0xf]
  %v158 = vld [vmem:[%s0 + $0x1f0] sm:$0xf]
  %v159 = vld [vmem:[%s0 + $0x1f4] sm:$0xf]
  %v160 = vld [vmem:[%s0 + $0x1f8] sm:$0xf]
  %v161 = vld [vmem:[%s0 + $0x1fc] sm:$0xf]
  %v178 = vunpack.c.l.b16 %v18
  %v179 = vunpack.c.h.b16 %v18
  %v180 = vunpack.c.l.b16 %v19
  %v181 = vunpack.c.h.b16 %v19
  %v182 = vunpack.c.l.b16 %v20
  %v183 = vunpack.c.h.b16 %v20
  %v184 = vunpack.c.l.b16 %v21
  %v185 = vunpack.c.h.b16 %v21
  %v186 = vunpack.c.l.b16 %v22
  %v187 = vunpack.c.h.b16 %v22
  %v188 = vunpack.c.l.b16 %v23
  %v189 = vunpack.c.h.b16 %v23
  %v190 = vunpack.c.l.b16 %v24
  %v191 = vunpack.c.h.b16 %v24
  %v192 = vunpack.c.l.b16 %v25
  %v193 = vunpack.c.h.b16 %v25
  %v194 = vunpack.c.l.b16 %v26
  %v195 = vunpack.c.h.b16 %v26
  %v196 = vunpack.c.l.b16 %v27
  %v197 = vunpack.c.h.b16 %v27
  %v198 = vunpack.c.l.b16 %v28
  %v199 = vunpack.c.h.b16 %v28
  %v200 = vunpack.c.l.b16 %v29
  %v201 = vunpack.c.h.b16 %v29
  %v202 = vunpack.c.l.b16 %v30
  %v203 = vunpack.c.h.b16 %v30
  %v204 = vunpack.c.l.b16 %v31
  %v205 = vunpack.c.h.b16 %v31
  %v206 = vunpack.c.l.b16 %v32
  %v207 = vunpack.c.h.b16 %v32
  %v208 = vunpack.c.l.b16 %v33
  %v209 = vunpack.c.h.b16 %v33
  %v210 = vpack.c.b16 %v186, %v178
  %v211 = vpack.c.b16 %v187, %v179
  %v212 = vpack.c.b16 %v188, %v180
  %v213 = vpack.c.b16 %v189, %v181
  %v214 = vpack.c.b16 %v190, %v182
  %v215 = vpack.c.b16 %v191, %v183
  %v216 = vpack.c.b16 %v192, %v184
  %v217 = vpack.c.b16 %v193, %v185
  %v218 = vpack.c.b16 %v202, %v194
  %v219 = vpack.c.b16 %v203, %v195
  %v220 = vpack.c.b16 %v204, %v196
  %v221 = vpack.c.b16 %v205, %v197
  %v222 = vpack.c.b16 %v206, %v198
  %v223 = vpack.c.b16 %v207, %v199
  %v224 = vpack.c.b16 %v208, %v200
  %v225 = vpack.c.b16 %v209, %v201
  %v370 = vunpack.c.l.b16 %v34
  %v371 = vunpack.c.l.b16 %v35
  %v372 = vunpack.c.l.b16 %v36
  %v373 = vunpack.c.l.b16 %v37
  %v374 = vunpack.c.l.b16 %v38
  %v375 = vunpack.c.l.b16 %v39
  %v376 = vunpack.c.l.b16 %v40
  %v377 = vunpack.c.l.b16 %v41
  %v378 = vunpack.c.l.b16 %v42
  %v379 = vunpack.c.l.b16 %v43
  %v380 = vunpack.c.l.b16 %v44
  %v381 = vunpack.c.l.b16 %v45
  %v382 = vunpack.c.l.b16 %v46
  %v383 = vunpack.c.l.b16 %v47
  %v384 = vunpack.c.l.b16 %v48
  %v385 = vunpack.c.l.b16 %v49
  %v386 = vunpack.c.l.b16 %v50
  %v387 = vunpack.c.l.b16 %v51
  %v388 = vunpack.c.l.b16 %v52
  %v389 = vunpack.c.l.b16 %v53
  %v390 = vunpack.c.l.b16 %v54
  %v391 = vunpack.c.l.b16 %v55
  %v392 = vunpack.c.l.b16 %v56
  %v393 = vunpack.c.l.b16 %v57
  %v394 = vunpack.c.l.b16 %v58
  %v395 = vunpack.c.l.b16 %v59
  %v396 = vunpack.c.l.b16 %v60
  %v397 = vunpack.c.l.b16 %v61
  %v398 = vunpack.c.l.b16 %v62
  %v399 = vunpack.c.l.b16 %v63
  %v400 = vunpack.c.l.b16 %v64
  %v401 = vunpack.c.l.b16 %v65
  %v402 = vunpack.c.l.b16 %v66
  %v403 = vunpack.c.l.b16 %v67
  %v404 = vunpack.c.l.b16 %v68
  %v405 = vunpack.c.l.b16 %v69
  %v406 = vunpack.c.l.b16 %v70
  %v407 = vunpack.c.l.b16 %v71
  %v408 = vunpack.c.l.b16 %v72
  %v409 = vunpack.c.l.b16 %v73
  %v410 = vunpack.c.l.b16 %v74
  %v411 = vunpack.c.l.b16 %v75
  %v412 = vunpack.c.l.b16 %v76
  %v413 = vunpack.c.l.b16 %v77
  %v414 = vunpack.c.l.b16 %v78
  %v415 = vunpack.c.l.b16 %v79
  %v416 = vunpack.c.l.b16 %v80
  %v417 = vunpack.c.l.b16 %v81
  %v418 = vunpack.c.l.b16 %v82
  %v419 = vunpack.c.l.b16 %v83
  %v420 = vunpack.c.l.b16 %v84
  %v421 = vunpack.c.l.b16 %v85
  %v422 = vunpack.c.l.b16 %v86
  %v423 = vunpack.c.l.b16 %v87
  %v424 = vunpack.c.l.b16 %v88
  %v425 = vunpack.c.l.b16 %v89
  %v426 = vunpack.c.l.b16 %v90
  %v427 = vunpack.c.l.b16 %v91
  %v428 = vunpack.c.l.b16 %v92
  %v429 = vunpack.c.l.b16 %v93
  %v430 = vunpack.c.l.b16 %v94
  %v431 = vunpack.c.l.b16 %v95
  %v432 = vunpack.c.l.b16 %v96
  %v433 = vunpack.c.l.b16 %v97
  %v434 = vunpack.c.l.b16 %v98
  %v435 = vunpack.c.l.b16 %v99
  %v436 = vunpack.c.l.b16 %v100
  %v437 = vunpack.c.l.b16 %v101
  %v438 = vunpack.c.l.b16 %v102
  %v439 = vunpack.c.l.b16 %v103
  %v440 = vunpack.c.l.b16 %v104
  %v441 = vunpack.c.l.b16 %v105
  %v442 = vunpack.c.l.b16 %v106
  %v443 = vunpack.c.l.b16 %v107
  %v444 = vunpack.c.l.b16 %v108
  %v445 = vunpack.c.l.b16 %v109
  %v446 = vunpack.c.l.b16 %v110
  %v447 = vunpack.c.l.b16 %v111
  %v448 = vunpack.c.l.b16 %v112
  %v449 = vunpack.c.l.b16 %v113
  %v450 = vunpack.c.l.b16 %v114
  %v451 = vunpack.c.l.b16 %v115
  %v452 = vunpack.c.l.b16 %v116
  %v453 = vunpack.c.l.b16 %v117
  %v454 = vunpack.c.l.b16 %v118
  %v455 = vunpack.c.l.b16 %v119
  %v456 = vunpack.c.l.b16 %v120
  %v457 = vunpack.c.l.b16 %v121
  %v458 = vunpack.c.l.b16 %v122
  %v459 = vunpack.c.l.b16 %v123
  %v460 = vunpack.c.l.b16 %v124
  %v461 = vunpack.c.l.b16 %v125
  %v462 = vunpack.c.l.b16 %v126
  %v463 = vunpack.c.l.b16 %v127
  %v464 = vunpack.c.l.b16 %v128
  %v465 = vunpack.c.l.b16 %v129
  %v466 = vunpack.c.l.b16 %v130
  %v467 = vunpack.c.l.b16 %v131
  %v468 = vunpack.c.l.b16 %v132
  %v469 = vunpack.c.l.b16 %v133
  %v470 = vunpack.c.l.b16 %v134
  %v471 = vunpack.c.l.b16 %v135
  %v472 = vunpack.c.l.b16 %v136
  %v473 = vunpack.c.l.b16 %v137
  %v474 = vunpack.c.l.b16 %v138
  %v475 = vunpack.c.l.b16 %v139
  %v476 = vunpack.c.l.b16 %v140
  %v477 = vunpack.c.l.b16 %v141
  %v478 = vunpack.c.l.b16 %v142
  %v479 = vunpack.c.l.b16 %v143
  %v480 = vunpack.c.l.b16 %v144
  %v481 = vunpack.c.l.b16 %v145
  %v482 = vunpack.c.l.b16 %v146
  %v483 = vunpack.c.l.b16 %v147
  %v484 = vunpack.c.l.b16 %v148
  %v485 = vunpack.c.l.b16 %v149
  %v486 = vunpack.c.l.b16 %v150
  %v487 = vunpack.c.l.b16 %v151
  %v488 = vunpack.c.l.b16 %v152
  %v489 = vunpack.c.l.b16 %v153
  %v490 = vunpack.c.l.b16 %v154
  %v491 = vunpack.c.l.b16 %v155
  %v492 = vunpack.c.l.b16 %v156
  %v493 = vunpack.c.l.b16 %v157
  %v494 = vunpack.c.l.b16 %v158
  %v495 = vunpack.c.l.b16 %v159
  %v496 = vunpack.c.l.b16 %v160
  %v497 = vunpack.c.l.b16 %v161
  %v498 = vpack.c.b16 %v371, %v370
  %v499 = vpack.c.b16 %v373, %v372
  %v500 = vpack.c.b16 %v375, %v374
  %v501 = vpack.c.b16 %v377, %v376
  %v502 = vpack.c.b16 %v379, %v378
  %v503 = vpack.c.b16 %v381, %v380
  %v504 = vpack.c.b16 %v383, %v382
  %v505 = vpack.c.b16 %v385, %v384
  %v506 = vpack.c.b16 %v387, %v386
  %v507 = vpack.c.b16 %v389, %v388
  %v508 = vpack.c.b16 %v391, %v390
  %v509 = vpack.c.b16 %v393, %v392
  %v510 = vpack.c.b16 %v395, %v394
  %v511 = vpack.c.b16 %v397, %v396
  %v512 = vpack.c.b16 %v399, %v398
  %v513 = vpack.c.b16 %v401, %v400
  %v514 = vpack.c.b16 %v403, %v402
  %v515 = vpack.c.b16 %v405, %v404
  %v516 = vpack.c.b16 %v407, %v406
  %v517 = vpack.c.b16 %v409, %v408
  %v518 = vpack.c.b16 %v411, %v410
  %v519 = vpack.c.b16 %v413, %v412
  %v520 = vpack.c.b16 %v415, %v414
  %v521 = vpack.c.b16 %v417, %v416
  %v522 = vpack.c.b16 %v419, %v418
  %v523 = vpack.c.b16 %v421, %v420
  %v524 = vpack.c.b16 %v423, %v422
  %v525 = vpack.c.b16 %v425, %v424
  %v526 = vpack.c.b16 %v427, %v426
  %v527 = vpack.c.b16 %v429, %v428
  %v528 = vpack.c.b16 %v431, %v430
  %v529 = vpack.c.b16 %v433, %v432
  %v530 = vpack.c.b16 %v435, %v434
  %v531 = vpack.c.b16 %v437, %v436
  %v532 = vpack.c.b16 %v439, %v438
  %v533 = vpack.c.b16 %v441, %v440
  %v534 = vpack.c.b16 %v443, %v442
  %v535 = vpack.c.b16 %v445, %v444
  %v536 = vpack.c.b16 %v447, %v446
  %v537 = vpack.c.b16 %v449, %v448
  %v538 = vpack.c.b16 %v451, %v450
  %v539 = vpack.c.b16 %v453, %v452
  %v540 = vpack.c.b16 %v455, %v454
  %v541 = vpack.c.b16 %v457, %v456
  %v542 = vpack.c.b16 %v459, %v458
  %v543 = vpack.c.b16 %v461, %v460
  %v544 = vpack.c.b16 %v463, %v462
  %v545 = vpack.c.b16 %v465, %v464
  %v546 = vpack.c.b16 %v467, %v466
  %v547 = vpack.c.b16 %v469, %v468
  %v548 = vpack.c.b16 %v471, %v470
  %v549 = vpack.c.b16 %v473, %v472
  %v550 = vpack.c.b16 %v475, %v474
  %v551 = vpack.c.b16 %v477, %v476
  %v552 = vpack.c.b16 %v479, %v478
  %v553 = vpack.c.b16 %v481, %v480
  %v554 = vpack.c.b16 %v483, %v482
  %v555 = vpack.c.b16 %v485, %v484
  %v556 = vpack.c.b16 %v487, %v486
  %v557 = vpack.c.b16 %v489, %v488
  %v558 = vpack.c.b16 %v491, %v490
  %v559 = vpack.c.b16 %v493, %v492
  %v560 = vpack.c.b16 %v495, %v494
  %v561 = vpack.c.b16 %v497, %v496
  %626 = vmatprep.subr.bf16.mxu0 0
  %627 = vmatpush1.bf16.msra.mxu0 %v498
  %628 = vmatprep.subr.bf16.mxu0 0
  %629 = vmatpush1.bf16.msra.mxu0 %v499
  %630 = vmatprep.subr.bf16.mxu0 0
  %631 = vmatpush1.bf16.msra.mxu0 %v500
  %632 = vmatprep.subr.bf16.mxu0 0
  %633 = vmatpush1.bf16.msra.mxu0 %v501
  %634 = vmatprep.subr.bf16.mxu0 0
  %635 = vmatpush1.bf16.msra.mxu0 %v502
  %636 = vmatprep.subr.bf16.mxu0 0
  %637 = vmatpush1.bf16.msra.mxu0 %v503
  %638 = vmatprep.subr.bf16.mxu0 0
  %639 = vmatpush1.bf16.msra.mxu0 %v504
  %640 = vmatprep.subr.bf16.mxu0 0
  %641 = vmatpush1.bf16.msra.mxu0 %v505
  %642 = vmatprep.subr.bf16.mxu0 0
  %643 = vmatpush1.bf16.msra.mxu0 %v506
  %644 = vmatprep.subr.bf16.mxu0 0
  %645 = vmatpush1.bf16.msra.mxu0 %v507
  %646 = vmatprep.subr.bf16.mxu0 0
  %647 = vmatpush1.bf16.msra.mxu0 %v508
  %648 = vmatprep.subr.bf16.mxu0 0
  %649 = vmatpush1.bf16.msra.mxu0 %v509
  %650 = vmatprep.subr.bf16.mxu0 0
  %651 = vmatpush1.bf16.msra.mxu0 %v510
  %652 = vmatprep.subr.bf16.mxu0 0
  %653 = vmatpush1.bf16.msra.mxu0 %v511
  %654 = vmatprep.subr.bf16.mxu0 0
  %655 = vmatpush1.bf16.msra.mxu0 %v512
  %656 = vmatprep.subr.bf16.mxu0 0
  %657 = vmatpush1.bf16.msra.mxu0 %v513
  %658 = vmatprep.mubr.bf16.mxu0 %v211
  %659 = vmatmul.mubr.bf16.gmra.mrb[0].mxu0 %v210
  %v660 = vpop.f32.mrb[0].mxu0
  %v661 = vadd.f32 0.0, %v660
  %v662 = vpop.f32.mrb[0].mxu0
  %v663 = vpop.f32.mrb[0].mxu0
  %v664 = vadd.f32 0.0, %v663
  %v665 = vpop.f32.mrb[0].mxu0
  %666 = vmatprep.mubr.bf16.mxu0 %v219
  %667 = vmatmul.mubr.bf16.gmra.mrb[0].mxu0 %v218
  %v668 = vpop.f32.mrb[0].mxu0
  %v669 = vadd.f32 0.0, %v668
  %v670 = vpop.f32.mrb[0].mxu0
  %v671 = vpop.f32.mrb[0].mxu0
  %v672 = vadd.f32 0.0, %v671
  %v673 = vpop.f32.mrb[0].mxu0
  %674 = vdwg.mxu0
  %675 = vmatprep.subr.bf16.mxu0 0
  %676 = vmatpush1.bf16.msra.mxu0 %v514
  %677 = vmatprep.subr.bf16.mxu0 0
  %678 = vmatpush1.bf16.msra.mxu0 %v515
  %679 = vmatprep.subr.bf16.mxu0 0
  %680 = vmatpush1.bf16.msra.mxu0 %v516
  %681 = vmatprep.subr.bf16.mxu0 0
  %682 = vmatpush1.bf16.msra.mxu0 %v517
  %683 = vmatprep.subr.bf16.mxu0 0
  %684 = vmatpush1.bf16.msra.mxu0 %v518
  %685 = vmatprep.subr.bf16.mxu0 0
  %686 = vmatpush1.bf16.msra.mxu0 %v519
  %687 = vmatprep.subr.bf16.mxu0 0
  %688 = vmatpush1.bf16.msra.mxu0 %v520
  %689 = vmatprep.subr.bf16.mxu0 0
  %690 = vmatpush1.bf16.msra.mxu0 %v521
  %691 = vmatprep.subr.bf16.mxu0 0
  %692 = vmatpush1.bf16.msra.mxu0 %v522
  %693 = vmatprep.subr.bf16.mxu0 0
  %694 = vmatpush1.bf16.msra.mxu0 %v523
  %695 = vmatprep.subr.bf16.mxu0 0
  %696 = vmatpush1.bf16.msra.mxu0 %v524
  %697 = vmatprep.subr.bf16.mxu0 0
  %698 = vmatpush1.bf16.msra.mxu0 %v525
  %699 = vmatprep.subr.bf16.mxu0 0
  %700 = vmatpush1.bf16.msra.mxu0 %v526
  %701 = vmatprep.subr.bf16.mxu0 0
  %702 = vmatpush1.bf16.msra.mxu0 %v527
  %703 = vmatprep.subr.bf16.mxu0 0
  %704 = vmatpush1.bf16.msra.mxu0 %v528
  %705 = vmatprep.subr.bf16.mxu0 0
  %706 = vmatpush1.bf16.msra.mxu0 %v529
  %707 = vmatprep.mubr.bf16.mxu0 %v213
  %708 = vmatmul.mubr.bf16.gmra.mrb[0].mxu0 %v212
  %v709 = vpop.f32.mrb[0].mxu0
  %v710 = vadd.f32 %v661, %v709
  %v711 = vpop.f32.mrb[0].mxu0
  %v712 = vpop.f32.mrb[0].mxu0
  %v713 = vadd.f32 %v664, %v712
  %v714 = vpop.f32.mrb[0].mxu0
  %715 = vmatprep.mubr.bf16.mxu0 %v221
  %716 = vmatmul.mubr.bf16.gmra.mrb[0].mxu0 %v220
  %v717 = vpop.f32.mrb[0].mxu0
  %v718 = vadd.f32 %v669, %v717
  %v719 = vpop.f32.mrb[0].mxu0
  %v720 = vpop.f32.mrb[0].mxu0
  %v721 = vadd.f32 %v672, %v720
  %v722 = vpop.f32.mrb[0].mxu0
  %723 = vdwg.mxu0
  %724 = vmatprep.subr.bf16.mxu0 0
  %725 = vmatpush1.bf16.msra.mxu0 %v530
  %726 = vmatprep.subr.bf16.mxu0 0
  %727 = vmatpush1.bf16.msra.mxu0 %v531
  %728 = vmatprep.subr.bf16.mxu0 0
  %729 = vmatpush1.bf16.msra.mxu0 %v532
  %730 = vmatprep.subr.bf16.mxu0 0
  %731 = vmatpush1.bf16.msra.mxu0 %v533
  %732 = vmatprep.subr.bf16.mxu0 0
  %733 = vmatpush1.bf16.msra.mxu0 %v534
  %734 = vmatprep.subr.bf16.mxu0 0
  %735 = vmatpush1.bf16.msra.mxu0 %v535
  %736 = vmatprep.subr.bf16.mxu0 0
  %737 = vmatpush1.bf16.msra.mxu0 %v536
  %738 = vmatprep.subr.bf16.mxu0 0
  %739 = vmatpush1.bf16.msra.mxu0 %v537
  %740 = vmatprep.subr.bf16.mxu0 0
  %741 = vmatpush1.bf16.msra.mxu0 %v538
  %742 = vmatprep.subr.bf16.mxu0 0
  %743 = vmatpush1.bf16.msra.mxu0 %v539
  %744 = vmatprep.subr.bf16.mxu0 0
  %745 = vmatpush1.bf16.msra.mxu0 %v540
  %746 = vmatprep.subr.bf16.mxu0 0
  %747 = vmatpush1.bf16.msra.mxu0 %v541
  %748 = vmatprep.subr.bf16.mxu0 0
  %749 = vmatpush1.bf16.msra.mxu0 %v542
  %750 = vmatprep.subr.bf16.mxu0 0
  %751 = vmatpush1.bf16.msra.mxu0 %v543
  %752 = vmatprep.subr.bf16.mxu0 0
  %753 = vmatpush1.bf16.msra.mxu0 %v544
  %754 = vmatprep.subr.bf16.mxu0 0
  %755 = vmatpush1.bf16.msra.mxu0 %v545
  %756 = vmatprep.mubr.bf16.mxu0 %v215
  %757 = vmatmul.mubr.bf16.gmra.mrb[0].mxu0 %v214
  %v758 = vpop.f32.mrb[0].mxu0
  %v759 = vadd.f32 %v710, %v758
  %v760 = vpop.f32.mrb[0].mxu0
  %v761 = vpop.f32.mrb[0].mxu0
  %v762 = vadd.f32 %v713, %v761
  %v763 = vpop.f32.mrb[0].mxu0
  %764 = vmatprep.mubr.bf16.mxu0 %v223
  %765 = vmatmul.mubr.bf16.gmra.mrb[0].mxu0 %v222
  %v766 = vpop.f32.mrb[0].mxu0
  %v767 = vadd.f32 %v718, %v766
  %v768 = vpop.f32.mrb[0].mxu0
  %v769 = vpop.f32.mrb[0].mxu0
  %v770 = vadd.f32 %v721, %v769
  %v771 = vpop.f32.mrb[0].mxu0
  %772 = vdwg.mxu0
  %773 = vmatprep.subr.bf16.mxu0 0
  %774 = vmatpush1.bf16.msra.mxu0 %v546
  %775 = vmatprep.subr.bf16.mxu0 0
  %776 = vmatpush1.bf16.msra.mxu0 %v547
  %777 = vmatprep.subr.bf16.mxu0 0
  %778 = vmatpush1.bf16.msra.mxu0 %v548
  %779 = vmatprep.subr.bf16.mxu0 0
  %780 = vmatpush1.bf16.msra.mxu0 %v549
  %781 = vmatprep.subr.bf16.mxu0 0
  %782 = vmatpush1.bf16.msra.mxu0 %v550
  %783 = vmatprep.subr.bf16.mxu0 0
  %784 = vmatpush1.bf16.msra.mxu0 %v551
  %785 = vmatprep.subr.bf16.mxu0 0
  %786 = vmatpush1.bf16.msra.mxu0 %v552
  %787 = vmatprep.subr.bf16.mxu0 0
  %788 = vmatpush1.bf16.msra.mxu0 %v553
  %789 = vmatprep.subr.bf16.mxu0 0
  %790 = vmatpush1.bf16.msra.mxu0 %v554
  %791 = vmatprep.subr.bf16.mxu0 0
  %792 = vmatpush1.bf16.msra.mxu0 %v555
  %793 = vmatprep.subr.bf16.mxu0 0
  %794 = vmatpush1.bf16.msra.mxu0 %v556
  %795 = vmatprep.subr.bf16.mxu0 0
  %796 = vmatpush1.bf16.msra.mxu0 %v557
  %797 = vmatprep.subr.bf16.mxu0 0
  %798 = vmatpush1.bf16.msra.mxu0 %v558
  %799 = vmatprep.subr.bf16.mxu0 0
  %800 = vmatpush1.bf16.msra.mxu0 %v559
  %801 = vmatprep.subr.bf16.mxu0 0
  %802 = vmatpush1.bf16.msra.mxu0 %v560
  %803 = vmatprep.subr.bf16.mxu0 0
  %804 = vmatpush1.bf16.msra.mxu0 %v561
  %805 = vmatprep.mubr.bf16.mxu0 %v217
  %806 = vmatmul.mubr.bf16.gmra.mrb[0].mxu0 %v216
  %v807 = vpop.f32.mrb[0].mxu0
  %v808 = vadd.f32 %v759, %v807
  %v809 = vpop.f32.mrb[0].mxu0
  %v810 = vpop.f32.mrb[0].mxu0
  %v811 = vadd.f32 %v762, %v810
  %v812 = vpop.f32.mrb[0].mxu0
  %813 = vmatprep.mubr.bf16.mxu0 %v225
  %814 = vmatmul.mubr.bf16.gmra.mrb[0].mxu0 %v224
  %v815 = vpop.f32.mrb[0].mxu0
  %v816 = vadd.f32 %v767, %v815
  %v817 = vpop.f32.mrb[0].mxu0
  %v818 = vpop.f32.mrb[0].mxu0
  %v819 = vadd.f32 %v770, %v818
  %v820 = vpop.f32.mrb[0].mxu0
  %821 = vdwg.mxu0
  %822 = vadd.xlane.f32.xlu0 %v808
  %v823 = vpop.xlane.xlu0 %822
  %824 = vadd.xlane.f32.xlu0 %v811
  %v825 = vpop.xlane.xlu0 %824
  %826 = vadd.xlane.f32.xlu0 %v816
  %v827 = vpop.xlane.xlu0 %826
  %828 = vadd.xlane.f32.xlu0 %v819
  %v829 = vpop.xlane.xlu0 %828
  %v830 = vrcp.pop 128.0
  %v831 = vmul.f32 %v823, %v830
  %v832 = vmul.f32 %v825, %v830
  %v833 = vmul.f32 %v827, %v830
  %v834 = vmul.f32 %v829, %v830
  %v835 = vsub.f32 %v808, %v831
  %v836 = vsub.f32 %v811, %v832
  %v837 = vsub.f32 %v816, %v833
  %v838 = vsub.f32 %v819, %v834
  %v839 = vmul.f32 %v835, %v835
  %v840 = vmul.f32 %v836, %v836
  %v841 = vmul.f32 %v837, %v837
  %v842 = vmul.f32 %v838, %v838
  %843 = vadd.xlane.f32.xlu0 %v839
  %v844 = vpop.xlane.xlu0 %843
  %845 = vadd.xlane.f32.xlu0 %v840
  %v846 = vpop.xlane.xlu0 %845
  %847 = vadd.xlane.f32.xlu0 %v841
  %v848 = vpop.xlane.xlu0 %847
  %849 = vadd.xlane.f32.xlu0 %v842
  %v850 = vpop.xlane.xlu0 %849
  %v851 = vmul.f32 %v844, %v830
  %v852 = vmul.f32 %v846, %v830
  %v853 = vmul.f32 %v848, %v830
  %v854 = vmul.f32 %v850, %v830
  %v855 = vld [vmem:[%s2] sm:$0xff]
  %v856 = vld [vmem:[%s2 + $0x8] sm:$0xff]
  %v857 = vld [vmem:[%s2 + $0x10] sm:$0xff]
  %v858 = vld [vmem:[%s2 + $0x18] sm:$0xff]
  %v859 = vadd.f32 %v851, 1e-05
  %v860 = vadd.f32 %v852, 1e-05
  %v861 = vadd.f32 %v853, 1e-05
  %v862 = vadd.f32 %v854, 1e-05
  %v863 = vrsqrt.pop %v859
  %v864 = vrsqrt.pop %v860
  %v865 = vrsqrt.pop %v861
  %v866 = vrsqrt.pop %v862
  %v867 = vmul.f32 %v855, %v863
  %v868 = vmul.f32 %v856, %v864
  %v869 = vmul.f32 %v857, %v865
  %v870 = vmul.f32 %v858, %v866
  %872 = vset.pattern.permute.xlu0 0
  %873 = vperm.xlu0 %872, %v867
  %v874 = vpop.permute.xlu0 %873
  %877 = vset.pattern.permute.xlu0 0
  %878 = vperm.xlu0 %877, %v868
  %v879 = vpop.permute.xlu0 %878
  %882 = vset.pattern.permute.xlu0 0
  %883 = vperm.xlu0 %882, %v869
  %v884 = vpop.permute.xlu0 %883
  %887 = vset.pattern.permute.xlu0 0
  %888 = vperm.xlu0 %887, %v870
  %v889 = vpop.permute.xlu0 %888
  %v891 = vmul.f32 %v835, %v874
  %v892 = vmul.f32 %v836, %v879
  %v893 = vmul.f32 %v837, %v884
  %v894 = vmul.f32 %v838, %v889
  %v895 = vld [vmem:[%s3] sm:$0xff]
  %v896 = vld [vmem:[%s3 + $0x8] sm:$0xff]
  %v897 = vld [vmem:[%s3 + $0x10] sm:$0xff]
  %v898 = vld [vmem:[%s3 + $0x18] sm:$0xff]
  %900 = vset.pattern.permute.xlu0 0
  %901 = vperm.xlu0 %900, %v895
  %v902 = vpop.permute.xlu0 %901
  %905 = vset.pattern.permute.xlu0 0
  %906 = vperm.xlu0 %905, %v896
  %v907 = vpop.permute.xlu0 %906
  %910 = vset.pattern.permute.xlu0 0
  %911 = vperm.xlu0 %910, %v897
  %v912 = vpop.permute.xlu0 %911
  %915 = vset.pattern.permute.xlu0 0
  %916 = vperm.xlu0 %915, %v898
  %v917 = vpop.permute.xlu0 %916
  %v919 = vadd.f32 %v891, %v902
  %v920 = vadd.f32 %v892, %v907
  %v921 = vadd.f32 %v893, %v912
  %v922 = vadd.f32 %v894, %v917
  %v923 = vmax.f32 %v919, 0.0
  %v924 = vmax.f32 %v920, 0.0
  %v925 = vmax.f32 %v921, 0.0
  %v926 = vmax.f32 %v922, 0.0
  %v927 = vpack.c.bf16 %v924, %v923
  %v928 = vpack.c.bf16 %v926, %v925
  %v931 = vunpack.c.l.b16 %v927
  %v932 = vunpack.c.h.b16 %v927
  %v933 = vunpack.c.l.b16 %v928
  %v934 = vunpack.c.h.b16 %v928
  %v935 = vpack.c.b16 %v931, %v931
  %v936 = vpack.c.b16 %v932, %v932
  %v937 = vpack.c.b16 %v933, %v933
  %v938 = vpack.c.b16 %v934, %v934
  %943 = vst [vmem:[%s4] sm:$0xf] %v935
  %944 = vst [vmem:[%s4 + $0x4] sm:$0xf] %v936
  %945 = vst [vmem:[%s4 + $0x8] sm:$0xf] %v937
  %946 = vst [vmem:[%s4 + $0xc] sm:$0xf] %v938
  // Predicated region
  $region18: #{encoder3d_forward.6} parent=0 // pred_check
    _
  $region19: #{encoder3d_forward.6} parent=0 // pred_check_branch
    %948 = sbr.rel (0) target = $region21
  $region20: #{encoder3d_forward.6} parent=0 // pred_region
    _
  $region21: #{encoder3d_forward.6} parent=0 // pred_fallthru
    _
  // Predicated region
  $region22: #{encoder3d_forward.6} parent=0 // pred_check
    _
  $region23: #{encoder3d_forward.6} parent=0 // pred_check_branch
    %950 = sbr.rel (0) target = $region25
  $region24: #{encoder3d_forward.6} parent=0 // pred_region
    _
  $region25: #{encoder3d_forward.6} parent=0 // pred_fallthru
    _

// kernel: encoder3d_forward.7
$region0: #{encoder3d_forward.7}
  #allocation0 [shape = 'u32[]', space=smem, size = 0x4, offset = 0x4, fixed_abs, tag = 'smem constant byte address 0x4 - core index']
  #allocation1 [shape = 'u32[144,128]{1,0:T(1,128)}', space=vmem, size = 0x12000, scoped, tag = 'internal scratch']
  %s0 = inlined_call_operand.vmem [shape: bf16[864,2], index: 0, kind: input, shape index: {}]
  %s1 = inlined_call_operand.vmem [shape: bf16[64,864], index: 1, kind: input, shape index: {}]
  %s2 = inlined_call_operand.vmem [shape: f32[64,1], index: 2, kind: input, shape index: {}]
  %s3 = inlined_call_operand.vmem [shape: f32[32,64], index: 3, kind: input, shape index: {}]
  %s4 = inlined_call_operand.vmem [shape: f32[32,1], index: 4, kind: input, shape index: {}]
  %s5 = inlined_call_operand.vmem [shape: f32[32,2], index: 5, kind: output, shape index: {}]
  %s6 = sld [smem:[#allocation0]]
  $region30: #{encoder3d_forward.7} parent=0
    _
  %s8 = ssub.s32 1, %s6
  %s9 = scalar_select 0, %s8, %s6
  // Predicated region
  $region2: #{encoder3d_forward.7} parent=0 // pred_check
    _
  $region3: #{encoder3d_forward.7} parent=0 // pred_check_branch
    %11 = sbr.rel (0) target = $region5
  $region4: #{encoder3d_forward.7} parent=0 // pred_region
    _
  $region5: #{encoder3d_forward.7} parent=0 // pred_fallthru
    _
  // Predicated region
  $region6: #{encoder3d_forward.7} parent=0 // pred_check
    _
  $region7: #{encoder3d_forward.7} parent=0 // pred_check_branch
    %13 = sbr.rel (0) target = $region9
  $region8: #{encoder3d_forward.7} parent=0 // pred_region
    _
  $region9: #{encoder3d_forward.7} parent=0 // pred_fallthru
    _
  // Predicated region
  $region10: #{encoder3d_forward.7} parent=0 // pred_check
    _
  $region11: #{encoder3d_forward.7} parent=0 // pred_check_branch
    %15 = sbr.rel (0) target = $region13
  $region12: #{encoder3d_forward.7} parent=0 // pred_region
    _
  $region13: #{encoder3d_forward.7} parent=0 // pred_fallthru
    _
  // Predicated region
  $region14: #{encoder3d_forward.7} parent=0 // pred_check
    _
  $region15: #{encoder3d_forward.7} parent=0 // pred_check_branch
    %17 = sbr.rel (0) target = $region17
  $region16: #{encoder3d_forward.7} parent=0 // pred_region
    _
  $region17: #{encoder3d_forward.7} parent=0 // pred_fallthru
    _
  // Predicated region
  $region18: #{encoder3d_forward.7} parent=0 // pred_check
    _
  $region19: #{encoder3d_forward.7} parent=0 // pred_check_branch
    %19 = sbr.rel (0) target = $region21
  $region20: #{encoder3d_forward.7} parent=0 // pred_region
    _
  $region21: #{encoder3d_forward.7} parent=0 // pred_fallthru
    _
  %v21 = vld [vmem:[%s1] sm:$0xff]
  %v22 = vld [vmem:[%s1 + $0x8] sm:$0xff]
  %v23 = vld [vmem:[%s1 + $0x10] sm:$0xff]
  %v24 = vld [vmem:[%s1 + $0x18] sm:$0xf]
  %v25 = vld [vmem:[%s1 + $0x1c] sm:$0xff]
  %v26 = vld [vmem:[%s1 + $0x24] sm:$0xff]
  %v27 = vld [vmem:[%s1 + $0x2c] sm:$0xff]
  %v28 = vld [vmem:[%s1 + $0x34] sm:$0xf]
  %v29 = vld [vmem:[%s1 + $0x38] sm:$0xff]
  %v30 = vld [vmem:[%s1 + $0x40] sm:$0xff]
  %v31 = vld [vmem:[%s1 + $0x48] sm:$0xff]
  %v32 = vld [vmem:[%s1 + $0x50] sm:$0xf]
  %v33 = vld [vmem:[%s1 + $0x54] sm:$0xff]
  %v34 = vld [vmem:[%s1 + $0x5c] sm:$0xff]
  %v35 = vld [vmem:[%s1 + $0x64] sm:$0xff]
  %v36 = vld [vmem:[%s1 + $0x6c] sm:$0xf]
  %v37 = vld [vmem:[%s1 + $0x70] sm:$0xff]
  %v38 = vld [vmem:[%s1 + $0x78] sm:$0xff]
  %v39 = vld [vmem:[%s1 + $0x80] sm:$0xff]
  %v40 = vld [vmem:[%s1 + $0x88] sm:$0xf]
  %v41 = vld [vmem:[%s1 + $0x8c] sm:$0xff]
  %v42 = vld [vmem:[%s1 + $0x94] sm:$0xff]
  %v43 = vld [vmem:[%s1 + $0x9c] sm:$0xff]
  %v44 = vld [vmem:[%s1 + $0xa4] sm:$0xf]
  %v45 = vld [vmem:[%s1 + $0xa8] sm:$0xff]
  %v46 = vld [vmem:[%s1 + $0xb0] sm:$0xff]
  %v47 = vld [vmem:[%s1 + $0xb8] sm:$0xff]
  %v48 = vld [vmem:[%s1 + $0xc0] sm:$0xf]
  %v49 = vld [vmem:[%s1 + $0xc4] sm:$0xff]
  %v50 = vld [vmem:[%s1 + $0xcc] sm:$0xff]
  %v51 = vld [vmem:[%s1 + $0xd4] sm:$0xff]
  %v52 = vld [vmem:[%s1 + $0xdc] sm:$0xf]
  %v53 = vld [vmem:[%s0] sm:$0xf]
  %v54 = vld [vmem:[%s0 + $0x4] sm:$0xf]
  %v55 = vld [vmem:[%s0 + $0x8] sm:$0xf]
  %v56 = vld [vmem:[%s0 + $0xc] sm:$0xf]
  %v57 = vld [vmem:[%s0 + $0x10] sm:$0xf]
  %v58 = vld [vmem:[%s0 + $0x14] sm:$0xf]
  %v59 = vld [vmem:[%s0 + $0x18] sm:$0xf]
  %v60 = vld [vmem:[%s0 + $0x1c] sm:$0xf]
  %v61 = vld [vmem:[%s0 + $0x20] sm:$0xf]
  %v62 = vld [vmem:[%s0 + $0x24] sm:$0xf]
  %v63 = vld [vmem:[%s0 + $0x28] sm:$0xf]
  %v64 = vld [vmem:[%s0 + $0x2c] sm:$0xf]
  %v65 = vld [vmem:[%s0 + $0x30] sm:$0xf]
  %v66 = vld [vmem:[%s0 + $0x34] sm:$0xf]
  %v67 = vld [vmem:[%s0 + $0x38] sm:$0xf]
  %v68 = vld [vmem:[%s0 + $0x3c] sm:$0xf]
  %v69 = vld [vmem:[%s0 + $0x40] sm:$0xf]
  %v70 = vld [vmem:[%s0 + $0x44] sm:$0xf]
  %v71 = vld [vmem:[%s0 + $0x48] sm:$0xf]
  %v72 = vld [vmem:[%s0 + $0x4c] sm:$0xf]
  %v73 = vld [vmem:[%s0 + $0x50] sm:$0xf]
  %v74 = vld [vmem:[%s0 + $0x54] sm:$0xf]
  %v75 = vld [vmem:[%s0 + $0x58] sm:$0xf]
  %v76 = vld [vmem:[%s0 + $0x5c] sm:$0xf]
  %v77 = vld [vmem:[%s0 + $0x60] sm:$0xf]
  %v78 = vld [vmem:[%s0 + $0x64] sm:$0xf]
  %v79 = vld [vmem:[%s0 + $0x68] sm:$0xf]
  %v80 = vld [vmem:[%s0 + $0x6c] sm:$0xf]
  %v81 = vld [vmem:[%s0 + $0x70] sm:$0xf]
  %v82 = vld [vmem:[%s0 + $0x74] sm:$0xf]
  %v83 = vld [vmem:[%s0 + $0x78] sm:$0xf]
  %v84 = vld [vmem:[%s0 + $0x7c] sm:$0xf]
  %v85 = vld [vmem:[%s0 + $0x80] sm:$0xf]
  %v86 = vld [vmem:[%s0 + $0x84] sm:$0xf]
  %v87 = vld [vmem:[%s0 + $0x88] sm:$0xf]
  %v88 = vld [vmem:[%s0 + $0x8c] sm:$0xf]
  %v89 = vld [vmem:[%s0 + $0x90] sm:$0xf]
  %v90 = vld [vmem:[%s0 + $0x94] sm:$0xf]
  %v91 = vld [vmem:[%s0 + $0x98] sm:$0xf]
  %v92 = vld [vmem:[%s0 + $0x9c] sm:$0xf]
  %v93 = vld [vmem:[%s0 + $0xa0] sm:$0xf]
  %v94 = vld [vmem:[%s0 + $0xa4] sm:$0xf]
  %v95 = vld [vmem:[%s0 + $0xa8] sm:$0xf]
  %v96 = vld [vmem:[%s0 + $0xac] sm:$0xf]
  %v97 = vld [vmem:[%s0 + $0xb0] sm:$0xf]
  %v98 = vld [vmem:[%s0 + $0xb4] sm:$0xf]
  %v99 = vld [vmem:[%s0 + $0xb8] sm:$0xf]
  %v100 = vld [vmem:[%s0 + $0xbc] sm:$0xf]
  %v101 = vld [vmem:[%s0 + $0xc0] sm:$0xf]
  %v102 = vld [vmem:[%s0 + $0xc4] sm:$0xf]
  %v103 = vld [vmem:[%s0 + $0xc8] sm:$0xf]
  %v104 = vld [vmem:[%s0 + $0xcc] sm:$0xf]
  %v105 = vld [vmem:[%s0 + $0xd0] sm:$0xf]
  %v106 = vld [vmem:[%s0 + $0xd4] sm:$0xf]
  %v107 = vld [vmem:[%s0 + $0xd8] sm:$0xf]
  %v108 = vld [vmem:[%s0 + $0xdc] sm:$0xf]
  %v109 = vld [vmem:[%s0 + $0xe0] sm:$0xf]
  %v110 = vld [vmem:[%s0 + $0xe4] sm:$0xf]
  %v111 = vld [vmem:[%s0 + $0xe8] sm:$0xf]
  %v112 = vld [vmem:[%s0 + $0xec] sm:$0xf]
  %v113 = vld [vmem:[%s0 + $0xf0] sm:$0xf]
  %v114 = vld [vmem:[%s0 + $0xf4] sm:$0xf]
  %v115 = vld [vmem:[%s0 + $0xf8] sm:$0xf]
  %v116 = vld [vmem:[%s0 + $0xfc] sm:$0xf]
  %v117 = vld [vmem:[%s0 + $0x100] sm:$0xf]
  %v118 = vld [vmem:[%s0 + $0x104] sm:$0xf]
  %v119 = vld [vmem:[%s0 + $0x108] sm:$0xf]
  %v120 = vld [vmem:[%s0 + $0x10c] sm:$0xf]
  %v121 = vld [vmem:[%s0 + $0x110] sm:$0xf]
  %v122 = vld [vmem:[%s0 + $0x114] sm:$0xf]
  %v123 = vld [vmem:[%s0 + $0x118] sm:$0xf]
  %v124 = vld [vmem:[%s0 + $0x11c] sm:$0xf]
  %v125 = vld [vmem:[%s0 + $0x120] sm:$0xf]
  %v126 = vld [vmem:[%s0 + $0x124] sm:$0xf]
  %v127 = vld [vmem:[%s0 + $0x128] sm:$0xf]
  %v128 = vld [vmem:[%s0 + $0x12c] sm:$0xf]
  %v129 = vld [vmem:[%s0 + $0x130] sm:$0xf]
  %v130 = vld [vmem:[%s0 + $0x134] sm:$0xf]
  %v131 = vld [vmem:[%s0 + $0x138] sm:$0xf]
  %v132 = vld [vmem:[%s0 + $0x13c] sm:$0xf]
  %v133 = vld [vmem:[%s0 + $0x140] sm:$0xf]
  %v134 = vld [vmem:[%s0 + $0x144] sm:$0xf]
  %v135 = vld [vmem:[%s0 + $0x148] sm:$0xf]
  %v136 = vld [vmem:[%s0 + $0x14c] sm:$0xf]
  %v137 = vld [vmem:[%s0 + $0x150] sm:$0xf]
  %v138 = vld [vmem:[%s0 + $0x154] sm:$0xf]
  %v139 = vld [vmem:[%s0 + $0x158] sm:$0xf]
  %v140 = vld [vmem:[%s0 + $0x15c] sm:$0xf]
  %v141 = vld [vmem:[%s0 + $0x160] sm:$0xf]
  %v142 = vld [vmem:[%s0 + $0x164] sm:$0xf]
  %v143 = vld [vmem:[%s0 + $0x168] sm:$0xf]
  %v144 = vld [vmem:[%s0 + $0x16c] sm:$0xf]
  %v145 = vld [vmem:[%s0 + $0x170] sm:$0xf]
  %v146 = vld [vmem:[%s0 + $0x174] sm:$0xf]
  %v147 = vld [vmem:[%s0 + $0x178] sm:$0xf]
  %v148 = vld [vmem:[%s0 + $0x17c] sm:$0xf]
  %v149 = vld [vmem:[%s0 + $0x180] sm:$0xf]
  %v150 = vld [vmem:[%s0 + $0x184] sm:$0xf]
  %v151 = vld [vmem:[%s0 + $0x188] sm:$0xf]
  %v152 = vld [vmem:[%s0 + $0x18c] sm:$0xf]
  %v153 = vld [vmem:[%s0 + $0x190] sm:$0xf]
  %v154 = vld [vmem:[%s0 + $0x194] sm:$0xf]
  %v155 = vld [vmem:[%s0 + $0x198] sm:$0xf]
  %v156 = vld [vmem:[%s0 + $0x19c] sm:$0xf]
  %v157 = vld [vmem:[%s0 + $0x1a0] sm:$0xf]
  %v158 = vld [vmem:[%s0 + $0x1a4] sm:$0xf]
  %v159 = vld [vmem:[%s0 + $0x1a8] sm:$0xf]
  %v160 = vld [vmem:[%s0 + $0x1ac] sm:$0xf]
  %v161 = vld [vmem:[%s2] sm:$0xff]
  %v162 = vld [vmem:[%s2 + $0x8] sm:$0xff]
  %v163 = vld [vmem:[%s2 + $0x10] sm:$0xff]
  %v164 = vld [vmem:[%s2 + $0x18] sm:$0xff]
  %v165 = vld [vmem:[%s2 + $0x20] sm:$0xff]
  %v166 = vld [vmem:[%s2 + $0x28] sm:$0xff]
  %v167 = vld [vmem:[%s2 + $0x30] sm:$0xff]
  %v168 = vld [vmem:[%s2 + $0x38] sm:$0xff]
  %170 = vset.pattern.permute.xlu0 0
  %171 = vperm.xlu0 %170, %v161
  %v172 = vpop.permute.xlu0 %171
  %175 = vset.pattern.permute.xlu0 0
  %176 = vperm.xlu0 %175, %v162
  %v177 = vpop.permute.xlu0 %176
  %180 = vset.pattern.permute.xlu0 0
  %181 = vperm.xlu0 %180, %v163
  %v182 = vpop.permute.xlu0 %181
  %185 = vset.pattern.permute.xlu0 0
  %186 = vperm.xlu0 %185, %v164
  %v187 = vpop.permute.xlu0 %186
  %190 = vset.pattern.permute.xlu0 0
  %191 = vperm.xlu0 %190, %v165
  %v192 = vpop.permute.xlu0 %191
  %195 = vset.pattern.permute.xlu0 0
  %196 = vperm.xlu0 %195, %v166
  %v197 = vpop.permute.xlu0 %196
  %200 = vset.pattern.permute.xlu0 0
  %201 = vperm.xlu0 %200, %v167
  %v202 = vpop.permute.xlu0 %201
  %205 = vset.pattern.permute.xlu0 0
  %206 = vperm.xlu0 %205, %v168
  %v207 = vpop.permute.xlu0 %206
  %v241 = vunpack.c.l.b16 %v21
  %v242 = vunpack.c.h.b16 %v21
  %v243 = vunpack.c.l.b16 %v22
  %v244 = vunpack.c.h.b16 %v22
  %v245 = vunpack.c.l.b16 %v23
  %v246 = vunpack.c.h.b16 %v23
  %v247 = vunpack.c.l.b16 %v24
  %v248 = vunpack.c.l.b16 %v25
  %v249 = vunpack.c.h.b16 %v25
  %v250 = vunpack.c.l.b16 %v26
  %v251 = vunpack.c.h.b16 %v26
  %v252 = vunpack.c.l.b16 %v27
  %v253 = vunpack.c.h.b16 %v27
  %v254 = vunpack.c.l.b16 %v28
  %v255 = vunpack.c.l.b16 %v29
  %v256 = vunpack.c.h.b16 %v29
  %v257 = vunpack.c.l.b16 %v30
  %v258 = vunpack.c.h.b16 %v30
  %v259 = vunpack.c.l.b16 %v31
  %v260 = vunpack.c.h.b16 %v31
  %v261 = vunpack.c.l.b16 %v32
  %v262 = vunpack.c.l.b16 %v33
  %v263 = vunpack.c.h.b16 %v33
  %v264 = vunpack.c.l.b16 %v34
  %v265 = vunpack.c.h.b16 %v34
  %v266 = vunpack.c.l.b16 %v35
  %v267 = vunpack.c.h.b16 %v35
  %v268 = vunpack.c.l.b16 %v36
  %v269 = vunpack.c.l.b16 %v37
  %v270 = vunpack.c.h.b16 %v37
  %v271 = vunpack.c.l.b16 %v38
  %v272 = vunpack.c.h.b16 %v38
  %v273 = vunpack.c.l.b16 %v39
  %v274 = vunpack.c.h.b16 %v39
  %v275 = vunpack.c.l.b16 %v40
  %v276 = vunpack.c.l.b16 %v41
  %v277 = vunpack.c.h.b16 %v41
  %v278 = vunpack.c.l.b16 %v42
  %v279 = vunpack.c.h.b16 %v42
  %v280 = vunpack.c.l.b16 %v43
  %v281 = vunpack.c.h.b16 %v43
  %v282 = vunpack.c.l.b16 %v44
  %v283 = vunpack.c.l.b16 %v45
  %v284 = vunpack.c.h.b16 %v45
  %v285 = vunpack.c.l.b16 %v46
  %v286 = vunpack.c.h.b16 %v46
  %v287 = vunpack.c.l.b16 %v47
  %v288 = vunpack.c.h.b16 %v47
  %v289 = vunpack.c.l.b16 %v48
  %v290 = vunpack.c.l.b16 %v49
  %v291 = vunpack.c.h.b16 %v49
  %v292 = vunpack.c.l.b16 %v50
  %v293 = vunpack.c.h.b16 %v50
  %v294 = vunpack.c.l.b16 %v51
  %v295 = vunpack.c.h.b16 %v51
  %v296 = vunpack.c.l.b16 %v52
  %v297 = vpack.c.b16 %v248, %v241
  %v298 = vpack.c.b16 %v249, %v242
  %v299 = vpack.c.b16 %v250, %v243
  %v300 = vpack.c.b16 %v251, %v244
  %v301 = vpack.c.b16 %v252, %v245
  %v302 = vpack.c.b16 %v253, %v246
  %v303 = vpack.c.b16 %v254, %v247
  %v304 = vpack.c.b16 %v262, %v255
  %v305 = vpack.c.b16 %v263, %v256
  %v306 = vpack.c.b16 %v264, %v257
  %v307 = vpack.c.b16 %v265, %v258
  %v308 = vpack.c.b16 %v266, %v259
  %v309 = vpack.c.b16 %v267, %v260
  %v310 = vpack.c.b16 %v268, %v261
  %v311 = vpack.c.b16 %v276, %v269
  %v312 = vpack.c.b16 %v277, %v270
  %v313 = vpack.c.b16 %v278, %v271
  %v314 = vpack.c.b16 %v279, %v272
  %v315 = vpack.c.b16 %v280, %v273
  %v316 = vpack.c.b16 %v281, %v274
  %v317 = vpack.c.b16 %v282, %v275
  %v318 = vpack.c.b16 %v290, %v283
  %v319 = vpack.c.b16 %v291, %v284
  %v320 = vpack.c.b16 %v292, %v285
  %v321 = vpack.c.b16 %v293, %v286
  %v322 = vpack.c.b16 %v294, %v287
  %v323 = vpack.c.b16 %v295, %v288
  %v324 = vpack.c.b16 %v296, %v289
  %v457 = vunpack.c.l.b16 %v53
  %v458 = vunpack.c.l.b16 %v54
  %v459 = vunpack.c.l.b16 %v55
  %v460 = vunpack.c.l.b16 %v56
  %v461 = vunpack.c.l.b16 %v57
  %v462 = vunpack.c.l.b16 %v58
  %v463 = vunpack.c.l.b16 %v59
  %v464 = vunpack.c.l.b16 %v60
  %v465 = vunpack.c.l.b16 %v61
  %v466 = vunpack.c.l.b16 %v62
  %v467 = vunpack.c.l.b16 %v63
  %v468 = vunpack.c.l.b16 %v64
  %v469 = vunpack.c.l.b16 %v65
  %v470 = vunpack.c.l.b16 %v66
  %v471 = vunpack.c.l.b16 %v67
  %v472 = vunpack.c.l.b16 %v68
  %v473 = vunpack.c.l.b16 %v69
  %v474 = vunpack.c.l.b16 %v70
  %v475 = vunpack.c.l.b16 %v71
  %v476 = vunpack.c.l.b16 %v72
  %v477 = vunpack.c.l.b16 %v73
  %v478 = vunpack.c.l.b16 %v74
  %v479 = vunpack.c.l.b16 %v75
  %v480 = vunpack.c.l.b16 %v76
  %v481 = vunpack.c.l.b16 %v77
  %v482 = vunpack.c.l.b16 %v78
  %v483 = vunpack.c.l.b16 %v79
  %v484 = vunpack.c.l.b16 %v80
  %v485 = vunpack.c.l.b16 %v81
  %v486 = vunpack.c.l.b16 %v82
  %v487 = vunpack.c.l.b16 %v83
  %v488 = vunpack.c.l.b16 %v84
  %v489 = vunpack.c.l.b16 %v85
  %v490 = vunpack.c.l.b16 %v86
  %v491 = vunpack.c.l.b16 %v87
  %v492 = vunpack.c.l.b16 %v88
  %v493 = vunpack.c.l.b16 %v89
  %v494 = vunpack.c.l.b16 %v90
  %v495 = vunpack.c.l.b16 %v91
  %v496 = vunpack.c.l.b16 %v92
  %v497 = vunpack.c.l.b16 %v93
  %v498 = vunpack.c.l.b16 %v94
  %v499 = vunpack.c.l.b16 %v95
  %v500 = vunpack.c.l.b16 %v96
  %v501 = vunpack.c.l.b16 %v97
  %v502 = vunpack.c.l.b16 %v98
  %v503 = vunpack.c.l.b16 %v99
  %v504 = vunpack.c.l.b16 %v100
  %v505 = vunpack.c.l.b16 %v101
  %v506 = vunpack.c.l.b16 %v102
  %v507 = vunpack.c.l.b16 %v103
  %v508 = vunpack.c.l.b16 %v104
  %v509 = vunpack.c.l.b16 %v105
  %v510 = vunpack.c.l.b16 %v106
  %v511 = vunpack.c.l.b16 %v107
  %v512 = vunpack.c.l.b16 %v108
  %v513 = vunpack.c.l.b16 %v109
  %v514 = vunpack.c.l.b16 %v110
  %v515 = vunpack.c.l.b16 %v111
  %v516 = vunpack.c.l.b16 %v112
  %v517 = vunpack.c.l.b16 %v113
  %v518 = vunpack.c.l.b16 %v114
  %v519 = vunpack.c.l.b16 %v115
  %v520 = vunpack.c.l.b16 %v116
  %v521 = vunpack.c.l.b16 %v117
  %v522 = vunpack.c.l.b16 %v118
  %v523 = vunpack.c.l.b16 %v119
  %v524 = vunpack.c.l.b16 %v120
  %v525 = vunpack.c.l.b16 %v121
  %v526 = vunpack.c.l.b16 %v122
  %v527 = vunpack.c.l.b16 %v123
  %v528 = vunpack.c.l.b16 %v124
  %v529 = vunpack.c.l.b16 %v125
  %v530 = vunpack.c.l.b16 %v126
  %v531 = vunpack.c.l.b16 %v127
  %v532 = vunpack.c.l.b16 %v128
  %v533 = vunpack.c.l.b16 %v129
  %v534 = vunpack.c.l.b16 %v130
  %v535 = vunpack.c.l.b16 %v131
  %v536 = vunpack.c.l.b16 %v132
  %v537 = vunpack.c.l.b16 %v133
  %v538 = vunpack.c.l.b16 %v134
  %v539 = vunpack.c.l.b16 %v135
  %v540 = vunpack.c.l.b16 %v136
  %v541 = vunpack.c.l.b16 %v137
  %v542 = vunpack.c.l.b16 %v138
  %v543 = vunpack.c.l.b16 %v139
  %v544 = vunpack.c.l.b16 %v140
  %v545 = vunpack.c.l.b16 %v141
  %v546 = vunpack.c.l.b16 %v142
  %v547 = vunpack.c.l.b16 %v143
  %v548 = vunpack.c.l.b16 %v144
  %v549 = vunpack.c.l.b16 %v145
  %v550 = vunpack.c.l.b16 %v146
  %v551 = vunpack.c.l.b16 %v147
  %v552 = vunpack.c.l.b16 %v148
  %v553 = vunpack.c.l.b16 %v149
  %v554 = vunpack.c.l.b16 %v150
  %v555 = vunpack.c.l.b16 %v151
  %v556 = vunpack.c.l.b16 %v152
  %v557 = vunpack.c.l.b16 %v153
  %v558 = vunpack.c.l.b16 %v154
  %v559 = vunpack.c.l.b16 %v155
  %v560 = vunpack.c.l.b16 %v156
  %v561 = vunpack.c.l.b16 %v157
  %v562 = vunpack.c.l.b16 %v158
  %v563 = vunpack.c.l.b16 %v159
  %v564 = vunpack.c.l.b16 %v160
  %v565 = vpack.c.b16 %v458, %v457
  %v566 = vpack.c.b16 %v460, %v459
  %v567 = vpack.c.b16 %v462, %v461
  %v568 = vpack.c.b16 %v464, %v463
  %v569 = vpack.c.b16 %v466, %v465
  %v570 = vpack.c.b16 %v468, %v467
  %v571 = vpack.c.b16 %v470, %v469
  %v572 = vpack.c.b16 %v472, %v471
  %v573 = vpack.c.b16 %v474, %v473
  %v574 = vpack.c.b16 %v476, %v475
  %v575 = vpack.c.b16 %v478, %v477
  %v576 = vpack.c.b16 %v480, %v479
  %v577 = vpack.c.b16 %v482, %v481
  %v578 = vpack.c.b16 %v484, %v483
  %v579 = vpack.c.b16 %v486, %v485
  %v580 = vpack.c.b16 %v488, %v487
  %v581 = vpack.c.b16 %v490, %v489
  %v582 = vpack.c.b16 %v492, %v491
  %v583 = vpack.c.b16 %v494, %v493
  %v584 = vpack.c.b16 %v496, %v495
  %v585 = vpack.c.b16 %v498, %v497
  %v586 = vpack.c.b16 %v500, %v499
  %v587 = vpack.c.b16 %v502, %v501
  %v588 = vpack.c.b16 %v504, %v503
  %v589 = vpack.c.b16 %v506, %v505
  %v590 = vpack.c.b16 %v508, %v507
  %v591 = vpack.c.b16 %v510, %v509
  %v592 = vpack.c.b16 %v512, %v511
  %v593 = vpack.c.b16 %v514, %v513
  %v594 = vpack.c.b16 %v516, %v515
  %v595 = vpack.c.b16 %v518, %v517
  %v596 = vpack.c.b16 %v520, %v519
  %v597 = vpack.c.b16 %v522, %v521
  %v598 = vpack.c.b16 %v524, %v523
  %v599 = vpack.c.b16 %v526, %v525
  %v600 = vpack.c.b16 %v528, %v527
  %v601 = vpack.c.b16 %v530, %v529
  %v602 = vpack.c.b16 %v532, %v531
  %v603 = vpack.c.b16 %v534, %v533
  %v604 = vpack.c.b16 %v536, %v535
  %v605 = vpack.c.b16 %v538, %v537
  %v606 = vpack.c.b16 %v540, %v539
  %v607 = vpack.c.b16 %v542, %v541
  %v608 = vpack.c.b16 %v544, %v543
  %v609 = vpack.c.b16 %v546, %v545
  %v610 = vpack.c.b16 %v548, %v547
  %v611 = vpack.c.b16 %v550, %v549
  %v612 = vpack.c.b16 %v552, %v551
  %v613 = vpack.c.b16 %v554, %v553
  %v614 = vpack.c.b16 %v556, %v555
  %v615 = vpack.c.b16 %v558, %v557
  %v616 = vpack.c.b16 %v560, %v559
  %v617 = vpack.c.b16 %v562, %v561
  %v618 = vpack.c.b16 %v564, %v563
  %vm673 = vcmask 785408
  %v675 = vsel %vm673, %v303, 0
  %v678 = vsel %vm673, %v310, 0
  %v681 = vsel %vm673, %v317, 0
  %v684 = vsel %vm673, %v324, 0
  %686 = vmatprep.subr.bf16.mxu0 0
  %687 = vmatpush1.bf16.msra.mxu0 %v565
  %688 = vmatprep.subr.bf16.mxu0 0
  %689 = vmatpush1.bf16.msra.mxu0 %v566
  %690 = vmatprep.subr.bf16.mxu0 0
  %691 = vmatpush1.bf16.msra.mxu0 %v567
  %692 = vmatprep.subr.bf16.mxu0 0
  %693 = vmatpush1.bf16.msra.mxu0 %v568
  %694 = vmatprep.subr.bf16.mxu0 0
  %695 = vmatpush1.bf16.msra.mxu0 %v569
  %696 = vmatprep.subr.bf16.mxu0 0
  %697 = vmatpush1.bf16.msra.mxu0 %v570
  %698 = vmatprep.subr.bf16.mxu0 0
  %699 = vmatpush1.bf16.msra.mxu0 %v571
  %700 = vmatprep.subr.bf16.mxu0 0
  %701 = vmatpush1.bf16.msra.mxu0 %v572
  %702 = vmatprep.subr.bf16.mxu0 0
  %703 = vmatpush1.bf16.msra.mxu0 %v573
  %704 = vmatprep.subr.bf16.mxu0 0
  %705 = vmatpush1.bf16.msra.mxu0 %v574
  %706 = vmatprep.subr.bf16.mxu0 0
  %707 = vmatpush1.bf16.msra.mxu0 %v575
  %708 = vmatprep.subr.bf16.mxu0 0
  %709 = vmatpush1.bf16.msra.mxu0 %v576
  %710 = vmatprep.subr.bf16.mxu0 0
  %711 = vmatpush1.bf16.msra.mxu0 %v577
  %712 = vmatprep.subr.bf16.mxu0 0
  %713 = vmatpush1.bf16.msra.mxu0 %v578
  %714 = vmatprep.subr.bf16.mxu0 0
  %715 = vmatpush1.bf16.msra.mxu0 %v579
  %716 = vmatprep.subr.bf16.mxu0 0
  %717 = vmatpush1.bf16.msra.mxu0 %v580
  %718 = vmatprep.mubr.bf16.mxu0 %v298
  %719 = vmatmul.mubr.bf16.gmra.mrb[0].mxu0 %v297
  %v720 = vpop.f32.mrb[0].mxu0
  %v721 = vadd.f32 %v172, %v720
  %v722 = vpop.f32.mrb[0].mxu0
  %v723 = vpop.f32.mrb[0].mxu0
  %v724 = vadd.f32 %v177, %v723
  %v725 = vpop.f32.mrb[0].mxu0
  %726 = vmatprep.mubr.bf16.mxu0 %v305
  %727 = vmatmul.mubr.bf16.gmra.mrb[0].mxu0 %v304
  %v728 = vpop.f32.mrb[0].mxu0
  %v729 = vadd.f32 %v182, %v728
  %v730 = vpop.f32.mrb[0].mxu0
  %v731 = vpop.f32.mrb[0].mxu0
  %v732 = vadd.f32 %v187, %v731
  %v733 = vpop.f32.mrb[0].mxu0
  %734 = vmatprep.mubr.bf16.mxu0 %v312
  %735 = vmatmul.mubr.bf16.gmra.mrb[0].mxu0 %v311
  %v736 = vpop.f32.mrb[0].mxu0
  %v737 = vadd.f32 %v192, %v736
  %v738 = vpop.f32.mrb[0].mxu0
  %v739 = vpop.f32.mrb[0].mxu0
  %v740 = vadd.f32 %v197, %v739
  %v741 = vpop.f32.mrb[0].mxu0
  %742 = vmatprep.mubr.bf16.mxu0 %v319
  %743 = vmatmul.mubr.bf16.gmra.mrb[0].mxu0 %v318
  %v744 = vpop.f32.mrb[0].mxu0
  %v745 = vadd.f32 %v202, %v744
  %v746 = vpop.f32.mrb[0].mxu0
  %v747 = vpop.f32.mrb[0].mxu0
  %v748 = vadd.f32 %v207, %v747
  %v749 = vpop.f32.mrb[0].mxu0
  %750 = vdwg.mxu0
  %751 = vmatprep.subr.bf16.mxu0 0
  %752 = vmatpush1.bf16.msra.mxu0 %v581
  %753 = vmatprep.subr.bf16.mxu0 0
  %754 = vmatpush1.bf16.msra.mxu0 %v582
  %755 = vmatprep.subr.bf16.mxu0 0
  %756 = vmatpush1.bf16.msra.mxu0 %v583
  %757 = vmatprep.subr.bf16.mxu0 0
  %758 = vmatpush1.bf16.msra.mxu0 %v584
  %759 = vmatprep.subr.bf16.mxu0 0
  %760 = vmatpush1.bf16.msra.mxu0 %v585
  %761 = vmatprep.subr.bf16.mxu0 0
  %762 = vmatpush1.bf16.msra.mxu0 %v586
  %763 = vmatprep.subr.bf16.mxu0 0
  %764 = vmatpush1.bf16.msra.mxu0 %v587
  %765 = vmatprep.subr.bf16.mxu0 0
  %766 = vmatpush1.bf16.msra.mxu0 %v588
  %767 = vmatprep.subr.bf16.mxu0 0
  %768 = vmatpush1.bf16.msra.mxu0 %v589
  %769 = vmatprep.subr.bf16.mxu0 0
  %770 = vmatpush1.bf16.msra.mxu0 %v590
  %771 = vmatprep.subr.bf16.mxu0 0
  %772 = vmatpush1.bf16.msra.mxu0 %v591
  %773 = vmatprep.subr.bf16.mxu0 0
  %774 = vmatpush1.bf16.msra.mxu0 %v592
  %775 = vmatprep.subr.bf16.mxu0 0
  %776 = vmatpush1.bf16.msra.mxu0 %v593
  %777 = vmatprep.subr.bf16.mxu0 0
  %778 = vmatpush1.bf16.msra.mxu0 %v594
  %779 = vmatprep.subr.bf16.mxu0 0
  %780 = vmatpush1.bf16.msra.mxu0 %v595
  %781 = vmatprep.subr.bf16.mxu0 0
  %782 = vmatpush1.bf16.msra.mxu0 %v596
  %783 = vmatprep.mubr.bf16.mxu0 %v300
  %784 = vmatmul.mubr.bf16.gmra.mrb[0].mxu0 %v299
  %v785 = vpop.f32.mrb[0].mxu0
  %v786 = vadd.f32 %v721, %v785
  %v787 = vpop.f32.mrb[0].mxu0
  %v788 = vpop.f32.mrb[0].mxu0
  %v789 = vadd.f32 %v724, %v788
  %v790 = vpop.f32.mrb[0].mxu0
  %791 = vmatprep.mubr.bf16.mxu0 %v307
  %792 = vmatmul.mubr.bf16.gmra.mrb[0].mxu0 %v306
  %v793 = vpop.f32.mrb[0].mxu0
  %v794 = vadd.f32 %v729, %v793
  %v795 = vpop.f32.mrb[0].mxu0
  %v796 = vpop.f32.mrb[0].mxu0
  %v797 = vadd.f32 %v732, %v796
  %v798 = vpop.f32.mrb[0].mxu0
  %799 = vmatprep.mubr.bf16.mxu0 %v314
  %800 = vmatmul.mubr.bf16.gmra.mrb[0].mxu0 %v313
  %v801 = vpop.f32.mrb[0].mxu0
  %v802 = vadd.f32 %v737, %v801
  %v803 = vpop.f32.mrb[0].mxu0
  %v804 = vpop.f32.mrb[0].mxu0
  %v805 = vadd.f32 %v740, %v804
  %v806 = vpop.f32.mrb[0].mxu0
  %807 = vmatprep.mubr.bf16.mxu0 %v321
  %808 = vmatmul.mubr.bf16.gmra.mrb[0].mxu0 %v320
  %v809 = vpop.f32.mrb[0].mxu0
  %v810 = vadd.f32 %v745, %v809
  %v811 = vpop.f32.mrb[0].mxu0
  %v812 = vpop.f32.mrb[0].mxu0
  %v813 = vadd.f32 %v748, %v812
  %v814 = vpop.f32.mrb[0].mxu0
  %815 = vdwg.mxu0
  %816 = vmatprep.subr.bf16.mxu0 0
  %817 = vmatpush1.bf16.msra.mxu0 %v597
  %818 = vmatprep.subr.bf16.mxu0 0
  %819 = vmatpush1.bf16.msra.mxu0 %v598
  %820 = vmatprep.subr.bf16.mxu0 0
  %821 = vmatpush1.bf16.msra.mxu0 %v599
  %822 = vmatprep.subr.bf16.mxu0 0
  %823 = vmatpush1.bf16.msra.mxu0 %v600
  %824 = vmatprep.subr.bf16.mxu0 0
  %825 = vmatpush1.bf16.msra.mxu0 %v601
  %826 = vmatprep.subr.bf16.mxu0 0
  %827 = vmatpush1.bf16.msra.mxu0 %v602
  %828 = vmatprep.subr.bf16.mxu0 0
  %829 = vmatpush1.bf16.msra.mxu0 %v603
  %830 = vmatprep.subr.bf16.mxu0 0
  %831 = vmatpush1.bf16.msra.mxu0 %v604
  %832 = vmatprep.subr.bf16.mxu0 0
  %833 = vmatpush1.bf16.msra.mxu0 %v605
  %834 = vmatprep.subr.bf16.mxu0 0
  %835 = vmatpush1.bf16.msra.mxu0 %v606
  %836 = vmatprep.subr.bf16.mxu0 0
  %837 = vmatpush1.bf16.msra.mxu0 %v607
  %838 = vmatprep.subr.bf16.mxu0 0
  %839 = vmatpush1.bf16.msra.mxu0 %v608
  %840 = vmatprep.subr.bf16.mxu0 0
  %841 = vmatpush1.bf16.msra.mxu0 %v609
  %842 = vmatprep.subr.bf16.mxu0 0
  %843 = vmatpush1.bf16.msra.mxu0 %v610
  %844 = vmatprep.subr.bf16.mxu0 0
  %845 = vmatpush1.bf16.msra.mxu0 %v611
  %846 = vmatprep.subr.bf16.mxu0 0
  %847 = vmatpush1.bf16.msra.mxu0 %v612
  %848 = vmatprep.mubr.bf16.mxu0 %v302
  %849 = vmatmul.mubr.bf16.gmra.mrb[0].mxu0 %v301
  %v850 = vpop.f32.mrb[0].mxu0
  %v851 = vadd.f32 %v786, %v850
  %v852 = vpop.f32.mrb[0].mxu0
  %v853 = vpop.f32.mrb[0].mxu0
  %v854 = vadd.f32 %v789, %v853
  %v855 = vpop.f32.mrb[0].mxu0
  %856 = vmatprep.mubr.bf16.mxu0 %v309
  %857 = vmatmul.mubr.bf16.gmra.mrb[0].mxu0 %v308
  %v858 = vpop.f32.mrb[0].mxu0
  %v859 = vadd.f32 %v794, %v858
  %v860 = vpop.f32.mrb[0].mxu0
  %v861 = vpop.f32.mrb[0].mxu0
  %v862 = vadd.f32 %v797, %v861
  %v863 = vpop.f32.mrb[0].mxu0
  %864 = vmatprep.mubr.bf16.mxu0 %v316
  %865 = vmatmul.mubr.bf16.gmra.mrb[0].mxu0 %v315
  %v866 = vpop.f32.mrb[0].mxu0
  %v867 = vadd.f32 %v802, %v866
  %v868 = vpop.f32.mrb[0].mxu0
  %v869 = vpop.f32.mrb[0].mxu0
  %v870 = vadd.f32 %v805, %v869
  %v871 = vpop.f32.mrb[0].mxu0
  %872 = vmatprep.mubr.bf16.mxu0 %v323
  %873 = vmatmul.mubr.bf16.gmra.mrb[0].mxu0 %v322
  %v874 = vpop.f32.mrb[0].mxu0
  %v875 = vadd.f32 %v810, %v874
  %v876 = vpop.f32.mrb[0].mxu0
  %v877 = vpop.f32.mrb[0].mxu0
  %v878 = vadd.f32 %v813, %v877
  %v879 = vpop.f32.mrb[0].mxu0
  %880 = vdwg.mxu0
  %881 = vmatprep.subr.bf16.mxu0 0
  %882 = vmatpush1.bf16.msra.mxu0 %v613
  %883 = vmatprep.subr.bf16.mxu0 0
  %884 = vmatpush1.bf16.msra.mxu0 %v614
  %885 = vmatprep.subr.bf16.mxu0 0
  %886 = vmatpush1.bf16.msra.mxu0 %v615
  %887 = vmatprep.subr.bf16.mxu0 0
  %888 = vmatpush1.bf16.msra.mxu0 %v616
  %889 = vmatprep.subr.bf16.mxu0 0
  %890 = vmatpush1.bf16.msra.mxu0 %v617
  %891 = vmatprep.subr.bf16.mxu0 0
  %892 = vmatpush1.bf16.msra.mxu0 %v618
  %893 = vmatprep.subr.bf16.mxu0 0
  %894 = vmatpush1.bf16.msra.mxu0 0
  %895 = vmatprep.subr.bf16.mxu0 0
  %896 = vmatpush1.bf16.msra.mxu0 0
  %897 = vmatprep.subr.bf16.mxu0 0
  %898 = vmatpush1.bf16.msra.mxu0 0
  %899 = vmatprep.subr.bf16.mxu0 0
  %900 = vmatpush1.bf16.msra.mxu0 0
  %901 = vmatprep.subr.bf16.mxu0 0
  %902 = vmatpush1.bf16.msra.mxu0 0
  %903 = vmatprep.subr.bf16.mxu0 0
  %904 = vmatpush1.bf16.msra.mxu0 0
  %905 = vmatprep.subr.bf16.mxu0 0
  %906 = vmatpush1.bf16.msra.mxu0 0
  %907 = vmatprep.subr.bf16.mxu0 0
  %908 = vmatpush1.bf16.msra.mxu0 0
  %909 = vmatprep.subr.bf16.mxu0 0
  %910 = vmatpush1.bf16.msra.mxu0 0
  %911 = vmatprep.subr.bf16.mxu0 0
  %912 = vmatpush1.bf16.msra.mxu0 0
  %913 = vmatprep.mubr.bf16.mxu0 0
  %914 = vmatmul.mubr.bf16.gmra.mrb[0].mxu0 %v675
  %v915 = vpop.f32.mrb[0].mxu0
  %v916 = vadd.f32 %v851, %v915
  %v917 = vpop.f32.mrb[0].mxu0
  %v918 = vpop.f32.mrb[0].mxu0
  %v919 = vadd.f32 %v854, %v918
  %v920 = vpop.f32.mrb[0].mxu0
  %921 = vmatprep.mubr.bf16.mxu0 0
  %922 = vmatmul.mubr.bf16.gmra.mrb[0].mxu0 %v678
  %v923 = vpop.f32.mrb[0].mxu0
  %v924 = vadd.f32 %v859, %v923
  %v925 = vpop.f32.mrb[0].mxu0
  %v926 = vpop.f32.mrb[0].mxu0
  %v927 = vadd.f32 %v862, %v926
  %v928 = vpop.f32.mrb[0].mxu0
  %929 = vmatprep.mubr.bf16.mxu0 0
  %930 = vmatmul.mubr.bf16.gmra.mrb[0].mxu0 %v681
  %v931 = vpop.f32.mrb[0].mxu0
  %v932 = vadd.f32 %v867, %v931
  %v933 = vpop.f32.mrb[0].mxu0
  %v934 = vpop.f32.mrb[0].mxu0
  %v935 = vadd.f32 %v870, %v934
  %v936 = vpop.f32.mrb[0].mxu0
  %937 = vmatprep.mubr.bf16.mxu0 0
  %938 = vmatmul.mubr.bf16.gmra.mrb[0].mxu0 %v684
  %v939 = vpop.f32.mrb[0].mxu0
  %v940 = vadd.f32 %v875, %v939
  %v941 = vpop.f32.mrb[0].mxu0
  %v942 = vpop.f32.mrb[0].mxu0
  %v943 = vadd.f32 %v878, %v942
  %v944 = vpop.f32.mrb[0].mxu0
  %945 = vdwg.mxu0
  %v946 = vmax.f32 %v916, 0.0
  %v947 = vmax.f32 %v919, 0.0
  %v948 = vmax.f32 %v924, 0.0
  %v949 = vmax.f32 %v927, 0.0
  %v950 = vmax.f32 %v932, 0.0
  %v951 = vmax.f32 %v935, 0.0
  %v952 = vmax.f32 %v940, 0.0
  %v953 = vmax.f32 %v943, 0.0
  %v954 = vld [vmem:[%s3] sm:$0xff]
  %v955 = vld [vmem:[%s3 + $0x8] sm:$0xff]
  %v956 = vld [vmem:[%s3 + $0x10] sm:$0xff]
  %v957 = vld [vmem:[%s3 + $0x18] sm:$0xff]
  %v958 = vld [vmem:[%s4] sm:$0xff]
  %v959 = vld [vmem:[%s4 + $0x8] sm:$0xff]
  %v960 = vld [vmem:[%s4 + $0x10] sm:$0xff]
  %v961 = vld [vmem:[%s4 + $0x18] sm:$0xff]
  %963 = vset.pattern.permute.xlu0 0
  %964 = vperm.xlu0 %963, %v958
  %v965 = vpop.permute.xlu0 %964
  %968 = vset.pattern.permute.xlu0 0
  %969 = vperm.xlu0 %968, %v959
  %v970 = vpop.permute.xlu0 %969
  %973 = vset.pattern.permute.xlu0 0
  %974 = vperm.xlu0 %973, %v960
  %v975 = vpop.permute.xlu0 %974
  %978 = vset.pattern.permute.xlu0 0
  %979 = vperm.xlu0 %978, %v961
  %v980 = vpop.permute.xlu0 %979
  %vm982 = vcmask 523264
  %v984 = vsel %vm982, %v954, 0
  %v987 = vsel %vm982, %v955, 0
  %v990 = vsel %vm982, %v956, 0
  %v993 = vsel %vm982, %v957, 0
  %995 = vmatprep.subr.mxu0 0.0
  %996 = vmatpush1.msra.mxu0 %v946
  %997 = vmatprep.subr.mxu0 0.0
  %998 = vmatpush1.msra.mxu0 %v947
  %999 = vmatprep.subr.mxu0 0.0
  %1000 = vmatpush1.msra.mxu0 %v948
  %1001 = vmatprep.subr.mxu0 0.0
  %1002 = vmatpush1.msra.mxu0 %v949
  %1003 = vmatprep.subr.mxu0 0.0
  %1004 = vmatpush1.msra.mxu0 %v950
  %1005 = vmatprep.subr.mxu0 0.0
  %1006 = vmatpush1.msra.mxu0 %v951
  %1007 = vmatprep.subr.mxu0 0.0
  %1008 = vmatpush1.msra.mxu0 %v952
  %1009 = vmatprep.subr.mxu0 0.0
  %1010 = vmatpush1.msra.mxu0 %v953
  %1011 = vmatprep.subr.mxu0 0.0
  %1012 = vmatpush1.msra.mxu0 0.0
  %1013 = vmatprep.subr.mxu0 0.0
  %1014 = vmatpush1.msra.mxu0 0.0
  %1015 = vmatprep.subr.mxu0 0.0
  %1016 = vmatpush1.msra.mxu0 0.0
  %1017 = vmatprep.subr.mxu0 0.0
  %1018 = vmatpush1.msra.mxu0 0.0
  %1019 = vmatprep.subr.mxu0 0.0
  %1020 = vmatpush1.msra.mxu0 0.0
  %1021 = vmatprep.subr.mxu0 0.0
  %1022 = vmatpush1.msra.mxu0 0.0
  %1023 = vmatprep.subr.mxu0 0.0
  %1024 = vmatpush1.msra.mxu0 0.0
  %1025 = vmatprep.subr.mxu0 0.0
  %1026 = vmatpush1.msra.mxu0 0.0
  %1027 = vmatprep.subr.mxu0 0.0
  %1028 = vmatpush1.msra.mxu0 0.0
  %1029 = vmatprep.subr.mxu0 0.0
  %1030 = vmatpush1.msra.mxu0 0.0
  %1031 = vmatprep.subr.mxu0 0.0
  %1032 = vmatpush1.msra.mxu0 0.0
  %1033 = vmatprep.subr.mxu0 0.0
  %1034 = vmatpush1.msra.mxu0 0.0
  %1035 = vmatprep.subr.mxu0 0.0
  %1036 = vmatpush1.msra.mxu0 0.0
  %1037 = vmatprep.subr.mxu0 0.0
  %1038 = vmatpush1.msra.mxu0 0.0
  %1039 = vmatprep.subr.mxu0 0.0
  %1040 = vmatpush1.msra.mxu0 0.0
  %1041 = vmatprep.subr.mxu0 0.0
  %1042 = vmatpush1.msra.mxu0 0.0
  %1043 = vmatprep.subr.mxu0 0.0
  %1044 = vmatpush1.msra.mxu0 0.0
  %1045 = vmatprep.subr.mxu0 0.0
  %1046 = vmatpush1.msra.mxu0 0.0
  %1047 = vmatprep.subr.mxu0 0.0
  %1048 = vmatpush1.msra.mxu0 0.0
  %1049 = vmatprep.subr.mxu0 0.0
  %1050 = vmatpush1.msra.mxu0 0.0
  %1051 = vmatprep.subr.mxu0 0.0
  %1052 = vmatpush1.msra.mxu0 0.0
  %1053 = vmatprep.subr.mxu0 0.0
  %1054 = vmatpush1.msra.mxu0 0.0
  %1055 = vmatprep.subr.mxu0 0.0
  %1056 = vmatpush1.msra.mxu0 0.0
  %1057 = vmatprep.subr.mxu0 0.0
  %1058 = vmatpush1.msra.mxu0 0.0
  %1059 = vmatprep.mubr.f32.mxu0 0.0
  %1060 = vmatmul.mubr.f32.gmra.mrb[0].mxu0 %v984
  %v1061 = vpop.f32.mrb[0].mxu0
  %v1062 = vadd.f32 %v965, %v1061
  %v1063 = vpop.f32.mrb[0].mxu0
  %1064 = vmatprep.mubr.f32.mxu0 0.0
  %1065 = vmatmul.mubr.f32.gmra.mrb[0].mxu0 %v987
  %v1066 = vpop.f32.mrb[0].mxu0
  %v1067 = vadd.f32 %v970, %v1066
  %v1068 = vpop.f32.mrb[0].mxu0
  %1069 = vmatprep.mubr.f32.mxu0 0.0
  %1070 = vmatmul.mubr.f32.gmra.mrb[0].mxu0 %v990
  %v1071 = vpop.f32.mrb[0].mxu0
  %v1072 = vadd.f32 %v975, %v1071
  %v1073 = vpop.f32.mrb[0].mxu0
  %1074 = vmatprep.mubr.f32.mxu0 0.0
  %1075 = vmatmul.mubr.f32.gmra.mrb[0].mxu0 %v993
  %v1076 = vpop.f32.mrb[0].mxu0
  %v1077 = vadd.f32 %v980, %v1076
  %v1078 = vpop.f32.mrb[0].mxu0
  %1079 = vdwg.mxu0
  %vm1080 = vcmask 15360
  %1081 = vst.msk [vmem:[%s5] sm:$0xff] %vm1080, %v1062
  %1082 = vst.msk [vmem:[%s5 + $0x8] sm:$0xff] %vm1080, %v1067
  %1083 = vst.msk [vmem:[%s5 + $0x10] sm:$0xff] %vm1080, %v1072
  %1084 = vst.msk [vmem:[%s5 + $0x18] sm:$0xff] %vm1080, %v1077
  // Predicated region
  $region22: #{encoder3d_forward.7} parent=0 // pred_check
    _
  $region23: #{encoder3d_forward.7} parent=0 // pred_check_branch
    %1086 = sbr.rel (0) target = $region25
  $region24: #{encoder3d_forward.7} parent=0 // pred_region
    _
  $region25: #{encoder3d_forward.7} parent=0 // pred_fallthru
    _
  // Predicated region
  $region26: #{encoder3d_forward.7} parent=0 // pred_check
    _
  $region27: #{encoder3d_forward.7} parent=0 // pred_check_branch
    %1088 = sbr.rel (0) target = $region29
  $region28: #{encoder3d_forward.7} parent=0 // pred_region
    _
  $region29: #{encoder3d_forward.7} parent=0 // pred_fallthru
    _

</llo_original>
